<compile_context>
chip_gen: v7x
topology: tpu7x:2x2x1
jax: 0.10.0
libtpu: 0.0.40
codegen_flags: <defaults>
</compile_context>

<pallas_src>
import functools
import math

import numpy as np
import jax
import jax.numpy as jnp
from jax.experimental import pallas as pl
from jax.experimental.pallas import tpu as pltpu

PAD = 0          # Constants.PAD
NEG_INF = -1e9
LN_EPS = 1e-6

_MOSAIC = pltpu.CompilerParams(
    dimension_semantics=("parallel",),
    vmem_limit_bytes=48 * 1024 * 1024,
)


# ----------------------------------------------------------------------------
# Parameter helpers (plain JAX / numpy glue)
# ----------------------------------------------------------------------------
def position_encoding_init(n_position, d_pos_vec):
    """Sinusoid position encoding table (same as the PyTorch reference)."""
    pe = np.array(
        [[pos / np.power(10000, 2 * (j // 2) / d_pos_vec) for j in range(d_pos_vec)]
         if pos != 0 else np.zeros(d_pos_vec)
         for pos in range(n_position)]
    )
    pe[1:, 0::2] = np.sin(pe[1:, 0::2])
    pe[1:, 1::2] = np.cos(pe[1:, 1::2])
    return jnp.asarray(pe, dtype=jnp.float32)


def init_transformer_params(key, *, n_vocab, n_max_seq, n_layers, n_head,
                            d_k, d_v, d_model, d_inner_hid):
    assert d_k == d_v, "fused QKV layout assumes d_k == d_v (true for the reference cfg)"
    hk, hv = n_head * d_k, n_head * d_v
    keys = jax.random.split(key, 1 + 2 * n_layers)

    def w(k, shape, dtype=jnp.bfloat16):
        return (jax.random.normal(k, shape, jnp.float32) * 0.02).astype(dtype)

    # shared word embedding (embs_share_weight=True), padding row zeroed
    word_emb = w(keys[0], (n_vocab, d_model), jnp.float32).at[PAD].set(0.0)
    pos_enc = position_encoding_init(n_max_seq + 1, d_model)

    def attn_self(k):
        kk = jax.random.split(k, 2)
        return dict(
            w_qkv=w(kk[0], (d_model, 3 * hk)), b_qkv=jnp.zeros((1, 3 * hk), jnp.float32),
            wo=w(kk[1], (hv, d_model)), bo=jnp.zeros((1, d_model), jnp.float32),
            ln_g=jnp.ones((1, d_model), jnp.float32), ln_b=jnp.zeros((1, d_model), jnp.float32),
        )

    def attn_cross(k):
        kk = jax.random.split(k, 3)
        return dict(
            w_q=w(kk[0], (d_model, hk)), b_q=jnp.zeros((1, hk), jnp.float32),
            w_kv=w(kk[1], (d_model, 2 * hk)), b_kv=jnp.zeros((1, 2 * hk), jnp.float32),
            wo=w(kk[2], (hv, d_model)), bo=jnp.zeros((1, d_model), jnp.float32),
            ln_g=jnp.ones((1, d_model), jnp.float32), ln_b=jnp.zeros((1, d_model), jnp.float32),
        )

    def ffn(k):
        kk = jax.random.split(k, 2)
        return dict(
            w1=w(kk[0], (d_model, d_inner_hid)), b1=jnp.zeros((1, d_inner_hid), jnp.float32),
            w2=w(kk[1], (d_inner_hid, d_model)), b2=jnp.zeros((1, d_model), jnp.float32),
            ln_g=jnp.ones((1, d_model), jnp.float32), ln_b=jnp.zeros((1, d_model), jnp.float32),
        )

    enc_layers, dec_layers = [], []
    for li in range(n_layers):
        lk = jax.random.split(keys[1 + li], 2)
        enc_layers.append(dict(slf=attn_self(lk[0]), ffn=ffn(lk[1])))
    for li in range(n_layers):
        lk = jax.random.split(keys[1 + n_layers + li], 3)
        dec_layers.append(dict(slf=attn_self(lk[0]), enc=attn_cross(lk[1]), ffn=ffn(lk[2])))

    return dict(
        word_emb=word_emb,                                            # gather table (f32)
        word_emb_t=jnp.transpose(word_emb).astype(jnp.bfloat16),      # tied output proj
        proj_b=jnp.zeros((1, n_vocab), jnp.float32),
        pos_enc=pos_enc,
        enc_layers=enc_layers,
        dec_layers=dec_layers,
    )


# ----------------------------------------------------------------------------
# Row-tiling helpers
# ----------------------------------------------------------------------------
def _round_up(x, m):
    return (x + m - 1) // m * m


def _row_tile(M):
    tm = min(256, _round_up(M, 8))
    return tm, _round_up(M, tm)


def _pad_rows(a, Mp):
    M = a.shape[0]
    return a if Mp == M else jnp.pad(a, ((0, Mp - M), (0, 0)))


# ----------------------------------------------------------------------------
# Pallas kernels
# ----------------------------------------------------------------------------
def _linear_kernel(x_ref, w_ref, b_ref, o_ref, *, relu):
    y = jnp.dot(x_ref[...], w_ref[...], preferred_element_type=jnp.float32) + b_ref[...]
    if relu:
        y = jnp.maximum(y, 0.0)
    o_ref[...] = y.astype(o_ref.dtype)


def _proj_add_ln_kernel(x_ref, w_ref, b_ref, r_ref, g_ref, bb_ref, o_ref, *, eps):
    # fused: output projection + residual add + LayerNorm (all stats in f32)
    y = jnp.dot(x_ref[...], w_ref[...], preferred_element_type=jnp.float32) + b_ref[...]
    z = y + r_ref[...].astype(jnp.float32)
    mu = jnp.mean(z, axis=-1, keepdims=True)
    var = jnp.mean(jnp.square(z - mu), axis=-1, keepdims=True)
    o_ref[...] = ((z - mu) * jax.lax.rsqrt(var + eps) * g_ref[...] + bb_ref[...]).astype(o_ref.dtype)


def _ffn_ln_kernel(x_ref, w1_ref, b1_ref, w2_ref, b2_ref, g_ref, bb_ref, o_ref, *, eps):
    # fused: position-wise FFN (two matmuls + ReLU) + residual add + LayerNorm
    x = x_ref[...]
    h = jnp.dot(x, w1_ref[...], preferred_element_type=jnp.float32) + b1_ref[...]
    h = jnp.maximum(h, 0.0)
    y = jnp.dot(h.astype(w2_ref.dtype), w2_ref[...], preferred_element_type=jnp.float32) + b2_ref[...]
    z = y + x.astype(jnp.float32)
    mu = jnp.mean(z, axis=-1, keepdims=True)
    var = jnp.mean(jnp.square(z - mu), axis=-1, keepdims=True)
    o_ref[...] = ((z - mu) * jax.lax.rsqrt(var + eps) * g_ref[...] + bb_ref[...]).astype(o_ref.dtype)


def _mha_kernel(q_ref, k_ref, v_ref, bias_ref, o_ref, *, n_head, d_k, d_v, scale):
    # One batch element per grid step; all heads processed here (lane-dense output).
    q = q_ref[0]          # (Lq, H*dk) bf16
    k = k_ref[0]          # (Lk, H*dk) bf16
    v = v_ref[0]          # (Lk, H*dv) bf16
    bias = bias_ref[0]    # (Lq, Lk)   f32 additive mask, shared by all heads
    outs = []
    for h in range(n_head):
        qh = q[:, h * d_k:(h + 1) * d_k]
        kh = k[:, h * d_k:(h + 1) * d_k]
        vh = v[:, h * d_v:(h + 1) * d_v]
        s = jax.lax.dot_general(qh, kh, (((1,), (1,)), ((), ())),
                                preferred_element_type=jnp.float32)
        s = s * scale + bias
        s = s - jnp.max(s, axis=-1, keepdims=True)
        p = jnp.exp(s)
        p = p * pl.reciprocal(jnp.sum(p, axis=-1, keepdims=True), approx=True)
        outs.append(jnp.dot(p.astype(vh.dtype), vh, preferred_element_type=jnp.float32))
    o_ref[0] = jnp.concatenate(outs, axis=-1).astype(o_ref.dtype)


# ----------------------------------------------------------------------------
# Pallas wrappers (row-tiled grids)
# ----------------------------------------------------------------------------
def pallas_linear(x, w, b, *, relu=False, out_dtype=jnp.bfloat16):
    M, K = x.shape
    N = w.shape[1]
    tm, Mp = _row_tile(M)
    xp = _pad_rows(x, Mp)
    out = pl.pallas_call(
        functools.partial(_linear_kernel, relu=relu),
        out_shape=jax.ShapeDtypeStruct((Mp, N), out_dtype),
        grid=(Mp // tm,),
        in_specs=[
            pl.BlockSpec((tm, K), lambda i: (i, 0)),
            pl.BlockSpec((K, N), lambda i: (0, 0)),
            pl.BlockSpec((1, N), lambda i: (0, 0)),
        ],
        out_specs=pl.BlockSpec((tm, N), lambda i: (i, 0)),
        compiler_params=_MOSAIC,
    )(xp, w, b)
    return out[:M] if Mp != M else out


def pallas_proj_add_ln(x, w, b, residual, gamma, beta, *, out_dtype=jnp.bfloat16):
    M, K = x.shape
    D = w.shape[1]
    tm, Mp = _row_tile(M)
    xp, rp = _pad_rows(x, Mp), _pad_rows(residual, Mp)
    out = pl.pallas_call(
        functools.partial(_proj_add_ln_kernel, eps=LN_EPS),
        out_shape=jax.ShapeDtypeStruct((Mp, D), out_dtype),
        grid=(Mp // tm,),
        in_specs=[
            pl.BlockSpec((tm, K), lambda i: (i, 0)),
            pl.BlockSpec((K, D), lambda i: (0, 0)),
            pl.BlockSpec((1, D), lambda i: (0, 0)),
            pl.BlockSpec((tm, D), lambda i: (i, 0)),
            pl.BlockSpec((1, D), lambda i: (0, 0)),
            pl.BlockSpec((1, D), lambda i: (0, 0)),
        ],
        out_specs=pl.BlockSpec((tm, D), lambda i: (i, 0)),
        compiler_params=_MOSAIC,
    )(xp, w, b, rp, gamma, beta)
    return out[:M] if Mp != M else out


def pallas_ffn_ln(x, w1, b1, w2, b2, gamma, beta, *, out_dtype=jnp.bfloat16):
    M, D = x.shape
    H = w1.shape[1]
    tm, Mp = _row_tile(M)
    xp = _pad_rows(x, Mp)
    out = pl.pallas_call(
        functools.partial(_ffn_ln_kernel, eps=LN_EPS),
        out_shape=jax.ShapeDtypeStruct((Mp, D), out_dtype),
        grid=(Mp // tm,),
        in_specs=[
            pl.BlockSpec((tm, D), lambda i: (i, 0)),
            pl.BlockSpec((D, H), lambda i: (0, 0)),
            pl.BlockSpec((1, H), lambda i: (0, 0)),
            pl.BlockSpec((H, D), lambda i: (0, 0)),
            pl.BlockSpec((1, D), lambda i: (0, 0)),
            pl.BlockSpec((1, D), lambda i: (0, 0)),
            pl.BlockSpec((1, D), lambda i: (0, 0)),
        ],
        out_specs=pl.BlockSpec((tm, D), lambda i: (i, 0)),
        compiler_params=_MOSAIC,
    )(xp, w1, b1, w2, b2, gamma, beta)
    return out[:M] if Mp != M else out


def pallas_attention(q_arr, k_arr, v_arr, bias, *, q_col, k_col, v_col, n_head, d_k, d_v):
    B, Lq, _ = q_arr.shape
    Lk = k_arr.shape[1]
    hk, hv = n_head * d_k, n_head * d_v
    scale = 1.0 / math.sqrt(d_k)
    return pl.pallas_call(
        functools.partial(_mha_kernel, n_head=n_head, d_k=d_k, d_v=d_v, scale=scale),
        out_shape=jax.ShapeDtypeStruct((B, Lq, hv), jnp.bfloat16),
        grid=(B,),
        in_specs=[
            pl.BlockSpec((1, Lq, hk), lambda b: (b, 0, q_col)),
            pl.BlockSpec((1, Lk, hk), lambda b: (b, 0, k_col)),
            pl.BlockSpec((1, Lk, hv), lambda b: (b, 0, v_col)),
            pl.BlockSpec((1, Lq, Lk), lambda b: (b, 0, 0)),   # one mask per batch, all heads
        ],
        out_specs=pl.BlockSpec((1, Lq, hv), lambda b: (b, 0, 0)),
        compiler_params=_MOSAIC,
    )(q_arr, k_arr, v_arr, bias)


# ----------------------------------------------------------------------------
# Model composition (glue in plain JAX; hot paths are the Pallas kernels above)
# ----------------------------------------------------------------------------
def multi_head_attention(x_q, x_kv, bias, p, *, n_head, d_k, d_v, self_attn):
    B, Lq, D = x_q.shape
    hk, hv = n_head * d_k, n_head * d_v
    xq2 = x_q.reshape(B * Lq, D)
    # fused-column BlockSpec head selection needs lane-aligned per-slot width
    fused_cols_ok = (d_k == d_v) and (hk % 128 == 0)

    if self_attn:
        qkv = pallas_linear(xq2, p["w_qkv"], p["b_qkv"]).reshape(B, Lq, 3 * hk)
        if fused_cols_ok:
            attn = pallas_attention(qkv, qkv, qkv, bias, q_col=0, k_col=1, v_col=2,
                                    n_head=n_head, d_k=d_k, d_v=d_v)
        else:
            q, k, v = qkv[..., :hk], qkv[..., hk:2 * hk], qkv[..., 2 * hk:]
            attn = pallas_attention(q, k, v, bias, q_col=0, k_col=0, v_col=0,
                                    n_head=n_head, d_k=d_k, d_v=d_v)
    else:
        Lk = x_kv.shape[1]
        q = pallas_linear(xq2, p["w_q"], p["b_q"]).reshape(B, Lq, hk)
        kv = pallas_linear(x_kv.reshape(B * Lk, D), p["w_kv"], p["b_kv"]).reshape(B, Lk, 2 * hk)
        if fused_cols_ok:
            attn = pallas_attention(q, kv, kv, bias, q_col=0, k_col=0, v_col=1,
                                    n_head=n_head, d_k=d_k, d_v=d_v)
        else:
            k, v = kv[..., :hk], kv[..., hk:]
            attn = pallas_attention(q, k, v, bias, q_col=0, k_col=0, v_col=0,
                                    n_head=n_head, d_k=d_k, d_v=d_v)

    attn2 = attn.reshape(B * Lq, hv)
    out = pallas_proj_add_ln(attn2, p["wo"], p["bo"], xq2, p["ln_g"], p["ln_b"])
    return out.reshape(B, Lq, D)


def position_wise_ffn(x, p):
    B, L, D = x.shape
    x2 = x.reshape(B * L, D)
    y = pallas_ffn_ln(x2, p["w1"], p["b1"], p["w2"], p["b2"], p["ln_g"], p["ln_b"])
    return y.reshape(B, L, D)


def encoder_forward(params, src_seq, src_pos, *, n_head, d_k, d_v):
    B, Ls = src_seq.shape
    enc_input = params["word_emb"][src_seq] + params["pos_enc"][src_pos]
    pad_mask = jnp.broadcast_to((src_seq == PAD)[:, None, :], (B, Ls, Ls))
    slf_bias = jnp.where(pad_mask, NEG_INF, 0.0).astype(jnp.float32)

    x = enc_input.astype(jnp.bfloat16)
    for lp in params["enc_layers"]:
        x = multi_head_attention(x, x, slf_bias, lp["slf"],
                                 n_head=n_head, d_k=d_k, d_v=d_v, self_attn=True)
        x = position_wise_ffn(x, lp["ffn"])
    return x


def decoder_forward(params, tgt_seq, tgt_pos, src_seq, enc_output, *, n_head, d_k, d_v):
    B, Lt = tgt_seq.shape
    Ls = src_seq.shape[1]
    dec_input = params["word_emb"][tgt_seq] + params["pos_enc"][tgt_pos]

    # get_attn_padding_mask + get_attn_subsequent_mask semantics (additive -1e9 bias)
    pad_mask = (tgt_seq == PAD)[:, None, :]
    sub_mask = jnp.triu(jnp.ones((Lt, Lt), dtype=bool), k=1)[None]
    slf_mask = jnp.logical_or(jnp.broadcast_to(pad_mask, (B, Lt, Lt)), sub_mask)
    slf_bias = jnp.where(slf_mask, NEG_INF, 0.0).astype(jnp.float32)
    enc_mask = jnp.broadcast_to((src_seq == PAD)[:, None, :], (B, Lt, Ls))
    enc_bias = jnp.where(enc_mask, NEG_INF, 0.0).astype(jnp.float32)

    x = dec_input.astype(jnp.bfloat16)
    for lp in params["dec_layers"]:
        x = multi_head_attention(x, x, slf_bias, lp["slf"],
                                 n_head=n_head, d_k=d_k, d_v=d_v, self_attn=True)
        x = multi_head_attention(x, enc_output, enc_bias, lp["enc"],
                                 n_head=n_head, d_k=d_k, d_v=d_v, self_attn=False)
        x = position_wise_ffn(x, lp["ffn"])
    return x


def transformer_forward(params, src_seq, src_pos, tgt_seq, tgt_pos, *, n_head, d_k, d_v):
    # Transformer.forward: drop the last target token (teacher-forcing shift)
    tgt_seq = tgt_seq[:, :-1]
    tgt_pos = tgt_pos[:, :-1]

    enc_output = encoder_forward(params, src_seq, src_pos, n_head=n_head, d_k=d_k, d_v=d_v)
    dec_output = decoder_forward(params, tgt_seq, tgt_pos, src_seq, enc_output,
                                 n_head=n_head, d_k=d_k, d_v=d_v)

    B, Lt, D = dec_output.shape
    # tied output projection (proj_share_weight=True): logits = dec_out @ word_emb^T
    logits = pallas_linear(dec_output.reshape(B * Lt, D), params["word_emb_t"],
                           params["proj_b"], out_dtype=jnp.float32)
    return logits  # (B * (Lt_in - 1), n_vocab)


# ----------------------------------------------------------------------------
# Main
# ----------------------------------------------------------------------------
if __name__ == "__main__":
    # small config (H*d_k = 128 so head split is lane-aligned for the fused path)
    n_vocab = 20
    n_max_seq = 16
    n_layers = 2
    n_head = 4
    d_k = d_v = 32
    d_model = 128
    d_inner_hid = 256

    B, Lt, Ls = 2, 8, 8

    key = jax.random.PRNGKey(0)
    kp, kt, ks = jax.random.split(key, 3)

    params = init_transformer_params(
        kp, n_vocab=n_vocab, n_max_seq=n_max_seq, n_layers=n_layers,
        n_head=n_head, d_k=d_k, d_v=d_v, d_model=d_model, d_inner_hid=d_inner_hid)

    def make_seq_pos(k, L, n_pad):
        seq = jax.random.randint(k, (B, L), 1, n_vocab, dtype=jnp.int32)
        if n_pad > 0:
            seq = seq.at[:, -n_pad:].set(PAD)
        pos = jnp.where(seq != PAD,
                        jnp.broadcast_to(jnp.arange(1, L + 1, dtype=jnp.int32), (B, L)), 0)
        return seq, pos

    tgt_seq, tgt_pos = make_seq_pos(kt, Lt, n_pad=2)
    src_seq, src_pos = make_seq_pos(ks, Ls, n_pad=1)

    fwd = jax.jit(functools.partial(transformer_forward, n_head=n_head, d_k=d_k, d_v=d_v))
    logits = jax.block_until_ready(fwd(params, src_seq, src_pos, tgt_seq, tgt_pos))

    assert logits.shape == (B * (Lt - 1), n_vocab), logits.shape
    assert bool(jnp.all(jnp.isfinite(logits)))
    print("KERNEL_OK")
</pallas_src>

<mosaic_0001>
module attributes {stable_mosaic.version = 11 : i64} {
  func.func @_linear_kernel(%arg0: i32, %arg1: memref<16x128xbf16, #tpu.memory_space<vmem>>, %arg2: memref<128x384xbf16, #tpu.memory_space<vmem>>, %arg3: memref<1x384xf32, #tpu.memory_space<vmem>>, %arg4: memref<16x384xbf16, #tpu.memory_space<vmem>>) attributes {dimension_semantics = [#tpu.dimension_semantics<parallel>], iteration_bounds = array<i64: 1>, scalar_prefetch = 0 : i64, scratch_operands = 0 : i64, tpu.core_type = #tpu.core_type<tc>, window_params = [{transform_indices = @transform_0, window_bounds = array<i64: 16, 128>}, {pipeline_mode = #tpu.pipeline_mode<synchronous>, transform_indices = @transform_1, window_bounds = array<i64: 128, 384>}, {pipeline_mode = #tpu.pipeline_mode<synchronous>, transform_indices = @transform_2, window_bounds = array<i64: 1, 384>}, {transform_indices = @transform_3, window_bounds = array<i64: 16, 384>}]} {
    %c0 = arith.constant 0 : index
    %c0_0 = arith.constant 0 : index
    %0 = vector.load %arg1[%c0, %c0_0] : memref<16x128xbf16, #tpu.memory_space<vmem>>, vector<16x128xbf16>
    %c0_1 = arith.constant 0 : index
    %c0_2 = arith.constant 0 : index
    %1 = vector.load %arg2[%c0_1, %c0_2] : memref<128x384xbf16, #tpu.memory_space<vmem>>, vector<128x384xbf16>
    %cst = arith.constant dense<0.000000e+00> : vector<16x384xf32>
    %2 = tpu.matmul %0, %1, %cst {dimension_numbers = #tpu.dot_dimension_numbers<[1], [0], [0], [1], [0, 0, 1, 1], [], []>} : vector<16x128xbf16>, vector<128x384xbf16>, vector<16x384xf32> -> vector<16x384xf32>
    %c0_3 = arith.constant 0 : index
    %c0_4 = arith.constant 0 : index
    %3 = vector.load %arg3[%c0_3, %c0_4] : memref<1x384xf32, #tpu.memory_space<vmem>>, vector<1x384xf32>
    %4 = vector.broadcast %3 : vector<1x384xf32> to vector<16x384xf32>
    %5 = arith.addf %2, %4 : vector<16x384xf32>
    %6 = arith.truncf %5 : vector<16x384xf32> to vector<16x384xbf16>
    %c0_5 = arith.constant 0 : index
    %c0_6 = arith.constant 0 : index
    %7 = vector.load %arg4[%c0_5, %c0_6] : memref<16x384xbf16, #tpu.memory_space<vmem>>, vector<16x384xbf16>
    tpu.vector_store %arg4[%c0_5, %c0_6], %6 {strides = array<i32>} : memref<16x384xbf16, #tpu.memory_space<vmem>>, vector<16x384xbf16>,
    return
  }
  func.func @transform_0(%arg0: i32) -> (i32, i32) {
    %c0_i32 = arith.constant 0 : i32
    %c0_i32_0 = arith.constant 0 : i32
    return %arg0, %c0_i32 : i32, i32
  }
  func.func @transform_1(%arg0: i32) -> (i32, i32) {
    %c0_i32 = arith.constant 0 : i32
    %c0_i32_0 = arith.constant 0 : i32
    %c0_i32_1 = arith.constant 0 : i32
    return %c0_i32, %c0_i32_0 : i32, i32
  }
  func.func @transform_2(%arg0: i32) -> (i32, i32) {
    %c0_i32 = arith.constant 0 : i32
    %c0_i32_0 = arith.constant 0 : i32
    %c0_i32_1 = arith.constant 0 : i32
    return %c0_i32, %c0_i32_0 : i32, i32
  }
  func.func @transform_3(%arg0: i32) -> (i32, i32) {
    %c0_i32 = arith.constant 0 : i32
    %c0_i32_0 = arith.constant 0 : i32
    return %arg0, %c0_i32 : i32, i32
  }
}

module attributes {stable_mosaic.version = 11 : i64} {
  func.func @_mha_kernel(%arg0: i32, %arg1: memref<1x8x128xbf16, #tpu.memory_space<vmem>>, %arg2: memref<1x8x128xbf16, #tpu.memory_space<vmem>>, %arg3: memref<1x8x128xbf16, #tpu.memory_space<vmem>>, %arg4: memref<1x8x8xf32, #tpu.memory_space<vmem>>, %arg5: memref<1x8x128xbf16, #tpu.memory_space<vmem>>) attributes {dimension_semantics = [#tpu.dimension_semantics<parallel>], iteration_bounds = array<i64: 2>, scalar_prefetch = 0 : i64, scratch_operands = 0 : i64, tpu.core_type = #tpu.core_type<tc>, window_params = [{transform_indices = @transform_0, window_bounds = array<i64: 1, 8, 128>}, {transform_indices = @transform_1, window_bounds = array<i64: 1, 8, 128>}, {transform_indices = @transform_2, window_bounds = array<i64: 1, 8, 128>}, {transform_indices = @transform_3, window_bounds = array<i64: 1, 8, 8>}, {transform_indices = @transform_4, window_bounds = array<i64: 1, 8, 128>}]} {
    %c0 = arith.constant 0 : index
    %c0_0 = arith.constant 0 : index
    %c0_1 = arith.constant 0 : index
    %0 = vector.load %arg1[%c0, %c0_0, %c0_1] : memref<1x8x128xbf16, #tpu.memory_space<vmem>>, vector<1x8x128xbf16>
    %1 = vector.shape_cast %0 : vector<1x8x128xbf16> to vector<8x128xbf16>
    %c0_2 = arith.constant 0 : index
    %c0_3 = arith.constant 0 : index
    %c0_4 = arith.constant 0 : index
    %2 = vector.load %arg2[%c0_2, %c0_3, %c0_4] : memref<1x8x128xbf16, #tpu.memory_space<vmem>>, vector<1x8x128xbf16>
    %3 = vector.shape_cast %2 : vector<1x8x128xbf16> to vector<8x128xbf16>
    %c0_5 = arith.constant 0 : index
    %c0_6 = arith.constant 0 : index
    %c0_7 = arith.constant 0 : index
    %4 = vector.load %arg3[%c0_5, %c0_6, %c0_7] : memref<1x8x128xbf16, #tpu.memory_space<vmem>>, vector<1x8x128xbf16>
    %5 = vector.shape_cast %4 : vector<1x8x128xbf16> to vector<8x128xbf16>
    %c0_8 = arith.constant 0 : index
    %c0_9 = arith.constant 0 : index
    %c0_10 = arith.constant 0 : index
    %6 = vector.load %arg4[%c0_8, %c0_9, %c0_10] : memref<1x8x8xf32, #tpu.memory_space<vmem>>, vector<1x8x8xf32>
    %7 = vector.shape_cast %6 : vector<1x8x8xf32> to vector<8x8xf32>
    %8 = vector.extract_strided_slice %1 {offsets = [0, 0], sizes = [8, 32], strides = [1, 1]} : vector<8x128xbf16> to vector<8x32xbf16>
    %9 = vector.extract_strided_slice %3 {offsets = [0, 0], sizes = [8, 32], strides = [1, 1]} : vector<8x128xbf16> to vector<8x32xbf16>
    %10 = vector.extract_strided_slice %5 {offsets = [0, 0], sizes = [8, 32], strides = [1, 1]} : vector<8x128xbf16> to vector<8x32xbf16>
    %cst = arith.constant dense<0.000000e+00> : vector<8x8xf32>
    %11 = tpu.matmul %8, %9, %cst {dimension_numbers = #tpu.dot_dimension_numbers<[1], [1], [0], [0], [0, 0, 1, 0], [], []>} : vector<8x32xbf16>, vector<8x32xbf16>, vector<8x8xf32> -> vector<8x8xf32>
    %cst_11 = arith.constant 0.176776692 : f32
    %12 = vector.broadcast %cst_11 : f32 to vector<8x8xf32>
    %13 = arith.mulf %11, %12 : vector<8x8xf32>
    %14 = arith.addf %13, %7 : vector<8x8xf32>
    %cst_12 = arith.constant dense<0xFF800000> : vector<8xf32>
    %15 = vector.multi_reduction <maximumf>, %14, %cst_12 [1] : vector<8x8xf32> to vector<8xf32>
    %16 = vector.shape_cast %15 : vector<8xf32> to vector<8x1xf32>
    %17 = vector.broadcast %16 : vector<8x1xf32> to vector<8x8xf32>
    %18 = arith.subf %14, %17 : vector<8x8xf32>
    %19 = math.exp %18 : vector<8x8xf32>
    %cst_13 = arith.constant dense<0.000000e+00> : vector<8xf32>
    %20 = vector.multi_reduction <add>, %19, %cst_13 [1] : vector<8x8xf32> to vector<8xf32>
    %21 = vector.shape_cast %20 : vector<8xf32> to vector<8x1xf32>
    %22 = tpu.reciprocal %21 {approx = true} : vector<8x1xf32> -> vector<8x1xf32>
    %23 = vector.broadcast %22 : vector<8x1xf32> to vector<8x8xf32>
    %24 = arith.mulf %19, %23 : vector<8x8xf32>
    %25 = arith.truncf %24 : vector<8x8xf32> to vector<8x8xbf16>
    %cst_14 = arith.constant dense<0.000000e+00> : vector<8x32xf32>
    %26 = tpu.matmul %25, %10, %cst_14 {dimension_numbers = #tpu.dot_dimension_numbers<[1], [0], [0], [1], [0, 0, 1, 1], [], []>} : vector<8x8xbf16>, vector<8x32xbf16>, vector<8x32xf32> -> vector<8x32xf32>
    %27 = vector.extract_strided_slice %1 {offsets = [0, 32], sizes = [8, 32], strides = [1, 1]} : vector<8x128xbf16> to vector<8x32xbf16>
    %28 = vector.extract_strided_slice %3 {offsets = [0, 32], sizes = [8, 32], strides = [1, 1]} : vector<8x128xbf16> to vector<8x32xbf16>
    %29 = vector.extract_strided_slice %5 {offsets = [0, 32], sizes = [8, 32], strides = [1, 1]} : vector<8x128xbf16> to vector<8x32xbf16>
    %cst_15 = arith.constant dense<0.000000e+00> : vector<8x8xf32>
    %30 = tpu.matmul %27, %28, %cst_15 {dimension_numbers = #tpu.dot_dimension_numbers<[1], [1], [0], [0], [0, 0, 1, 0], [], []>} : vector<8x32xbf16>, vector<8x32xbf16>, vector<8x8xf32> -> vector<8x8xf32>
    %cst_16 = arith.constant 0.176776692 : f32
    %31 = vector.broadcast %cst_16 : f32 to vector<8x8xf32>
    %32 = arith.mulf %30, %31 : vector<8x8xf32>
    %33 = arith.addf %32, %7 : vector<8x8xf32>
    %cst_17 = arith.constant dense<0xFF800000> : vector<8xf32>
    %34 = vector.multi_reduction <maximumf>, %33, %cst_17 [1] : vector<8x8xf32> to vector<8xf32>
    %35 = vector.shape_cast %34 : vector<8xf32> to vector<8x1xf32>
    %36 = vector.broadcast %35 : vector<8x1xf32> to vector<8x8xf32>
    %37 = arith.subf %33, %36 : vector<8x8xf32>
    %38 = math.exp %37 : vector<8x8xf32>
    %cst_18 = arith.constant dense<0.000000e+00> : vector<8xf32>
    %39 = vector.multi_reduction <add>, %38, %cst_18 [1] : vector<8x8xf32> to vector<8xf32>
    %40 = vector.shape_cast %39 : vector<8xf32> to vector<8x1xf32>
    %41 = tpu.reciprocal %40 {approx = true} : vector<8x1xf32> -> vector<8x1xf32>
    %42 = vector.broadcast %41 : vector<8x1xf32> to vector<8x8xf32>
    %43 = arith.mulf %38, %42 : vector<8x8xf32>
    %44 = arith.truncf %43 : vector<8x8xf32> to vector<8x8xbf16>
    %cst_19 = arith.constant dense<0.000000e+00> : vector<8x32xf32>
    %45 = tpu.matmul %44, %29, %cst_19 {dimension_numbers = #tpu.dot_dimension_numbers<[1], [0], [0], [1], [0, 0, 1, 1], [], []>} : vector<8x8xbf16>, vector<8x32xbf16>, vector<8x32xf32> -> vector<8x32xf32>
    %46 = vector.extract_strided_slice %1 {offsets = [0, 64], sizes = [8, 32], strides = [1, 1]} : vector<8x128xbf16> to vector<8x32xbf16>
    %47 = vector.extract_strided_slice %3 {offsets = [0, 64], sizes = [8, 32], strides = [1, 1]} : vector<8x128xbf16> to vector<8x32xbf16>
    %48 = vector.extract_strided_slice %5 {offsets = [0, 64], sizes = [8, 32], strides = [1, 1]} : vector<8x128xbf16> to vector<8x32xbf16>
    %cst_20 = arith.constant dense<0.000000e+00> : vector<8x8xf32>
    %49 = tpu.matmul %46, %47, %cst_20 {dimension_numbers = #tpu.dot_dimension_numbers<[1], [1], [0], [0], [0, 0, 1, 0], [], []>} : vector<8x32xbf16>, vector<8x32xbf16>, vector<8x8xf32> -> vector<8x8xf32>
    %cst_21 = arith.constant 0.176776692 : f32
    %50 = vector.broadcast %cst_21 : f32 to vector<8x8xf32>
    %51 = arith.mulf %49, %50 : vector<8x8xf32>
    %52 = arith.addf %51, %7 : vector<8x8xf32>
    %cst_22 = arith.constant dense<0xFF800000> : vector<8xf32>
    %53 = vector.multi_reduction <maximumf>, %52, %cst_22 [1] : vector<8x8xf32> to vector<8xf32>
    %54 = vector.shape_cast %53 : vector<8xf32> to vector<8x1xf32>
    %55 = vector.broadcast %54 : vector<8x1xf32> to vector<8x8xf32>
    %56 = arith.subf %52, %55 : vector<8x8xf32>
    %57 = math.exp %56 : vector<8x8xf32>
    %cst_23 = arith.constant dense<0.000000e+00> : vector<8xf32>
    %58 = vector.multi_reduction <add>, %57, %cst_23 [1] : vector<8x8xf32> to vector<8xf32>
    %59 = vector.shape_cast %58 : vector<8xf32> to vector<8x1xf32>
    %60 = tpu.reciprocal %59 {approx = true} : vector<8x1xf32> -> vector<8x1xf32>
    %61 = vector.broadcast %60 : vector<8x1xf32> to vector<8x8xf32>
    %62 = arith.mulf %57, %61 : vector<8x8xf32>
    %63 = arith.truncf %62 : vector<8x8xf32> to vector<8x8xbf16>
    %cst_24 = arith.constant dense<0.000000e+00> : vector<8x32xf32>
    %64 = tpu.matmul %63, %48, %cst_24 {dimension_numbers = #tpu.dot_dimension_numbers<[1], [0], [0], [1], [0, 0, 1, 1], [], []>} : vector<8x8xbf16>, vector<8x32xbf16>, vector<8x32xf32> -> vector<8x32xf32>
    %65 = vector.extract_strided_slice %1 {offsets = [0, 96], sizes = [8, 32], strides = [1, 1]} : vector<8x128xbf16> to vector<8x32xbf16>
    %66 = vector.extract_strided_slice %3 {offsets = [0, 96], sizes = [8, 32], strides = [1, 1]} : vector<8x128xbf16> to vector<8x32xbf16>
    %67 = vector.extract_strided_slice %5 {offsets = [0, 96], sizes = [8, 32], strides = [1, 1]} : vector<8x128xbf16> to vector<8x32xbf16>
    %cst_25 = arith.constant dense<0.000000e+00> : vector<8x8xf32>
    %68 = tpu.matmul %65, %66, %cst_25 {dimension_numbers = #tpu.dot_dimension_numbers<[1], [1], [0], [0], [0, 0, 1, 0], [], []>} : vector<8x32xbf16>, vector<8x32xbf16>, vector<8x8xf32> -> vector<8x8xf32>
    %cst_26 = arith.constant 0.176776692 : f32
    %69 = vector.broadcast %cst_26 : f32 to vector<8x8xf32>
    %70 = arith.mulf %68, %69 : vector<8x8xf32>
    %71 = arith.addf %70, %7 : vector<8x8xf32>
    %cst_27 = arith.constant dense<0xFF800000> : vector<8xf32>
    %72 = vector.multi_reduction <maximumf>, %71, %cst_27 [1] : vector<8x8xf32> to vector<8xf32>
    %73 = vector.shape_cast %72 : vector<8xf32> to vector<8x1xf32>
    %74 = vector.broadcast %73 : vector<8x1xf32> to vector<8x8xf32>
    %75 = arith.subf %71, %74 : vector<8x8xf32>
    %76 = math.exp %75 : vector<8x8xf32>
    %cst_28 = arith.constant dense<0.000000e+00> : vector<8xf32>
    %77 = vector.multi_reduction <add>, %76, %cst_28 [1] : vector<8x8xf32> to vector<8xf32>
    %78 = vector.shape_cast %77 : vector<8xf32> to vector<8x1xf32>
    %79 = tpu.reciprocal %78 {approx = true} : vector<8x1xf32> -> vector<8x1xf32>
    %80 = vector.broadcast %79 : vector<8x1xf32> to vector<8x8xf32>
    %81 = arith.mulf %76, %80 : vector<8x8xf32>
    %82 = arith.truncf %81 : vector<8x8xf32> to vector<8x8xbf16>
    %cst_29 = arith.constant dense<0.000000e+00> : vector<8x32xf32>
    %83 = tpu.matmul %82, %67, %cst_29 {dimension_numbers = #tpu.dot_dimension_numbers<[1], [0], [0], [1], [0, 0, 1, 1], [], []>} : vector<8x8xbf16>, vector<8x32xbf16>, vector<8x32xf32> -> vector<8x32xf32>
    %84 = tpu.concatenate %26, %45, %64, %83 in 1 : vector<8x32xf32>, vector<8x32xf32>, vector<8x32xf32>, vector<8x32xf32> -> vector<8x128xf32>
    %85 = arith.truncf %84 : vector<8x128xf32> to vector<8x128xbf16>
    %c0_30 = arith.constant 0 : index
    %c0_31 = arith.constant 0 : index
    %c0_32 = arith.constant 0 : index
    %86 = vector.load %arg5[%c0_30, %c0_31, %c0_32] : memref<1x8x128xbf16, #tpu.memory_space<vmem>>, vector<1x8x128xbf16>
    %87 = vector.shape_cast %86 : vector<1x8x128xbf16> to vector<8x128xbf16>
    %88 = vector.shape_cast %85 : vector<8x128xbf16> to vector<1x8x128xbf16>
    tpu.vector_store %arg5[%c0_30, %c0_31, %c0_32], %88 {strides = array<i32>} : memref<1x8x128xbf16, #tpu.memory_space<vmem>>, vector<1x8x128xbf16>,
    return
  }
  func.func @transform_0(%arg0: i32) -> (i32, i32, i32) {
    %c0_i32 = arith.constant 0 : i32
    %c0_i32_0 = arith.constant 0 : i32
    %c0_i32_1 = arith.constant 0 : i32
    return %arg0, %c0_i32, %c0_i32_0 : i32, i32, i32
  }
  func.func @transform_1(%arg0: i32) -> (i32, i32, i32) {
    %c0_i32 = arith.constant 0 : i32
    %c1_i32 = arith.constant 1 : i32
    %c0_i32_0 = arith.constant 0 : i32
    return %arg0, %c0_i32, %c1_i32 : i32, i32, i32
  }
  func.func @transform_2(%arg0: i32) -> (i32, i32, i32) {
    %c0_i32 = arith.constant 0 : i32
    %c2_i32 = arith.constant 2 : i32
    %c0_i32_0 = arith.constant 0 : i32
    return %arg0, %c0_i32, %c2_i32 : i32, i32, i32
  }
  func.func @transform_3(%arg0: i32) -> (i32, i32, i32) {
    %c0_i32 = arith.constant 0 : i32
    %c0_i32_0 = arith.constant 0 : i32
    %c0_i32_1 = arith.constant 0 : i32
    return %arg0, %c0_i32, %c0_i32_0 : i32, i32, i32
  }
  func.func @transform_4(%arg0: i32) -> (i32, i32, i32) {
    %c0_i32 = arith.constant 0 : i32
    %c0_i32_0 = arith.constant 0 : i32
    %c0_i32_1 = arith.constant 0 : i32
    return %arg0, %c0_i32, %c0_i32_0 : i32, i32, i32
  }
}

module attributes {stable_mosaic.version = 11 : i64} {
  func.func @_ffn_ln_kernel(%arg0: i32, %arg1: memref<16x128xbf16, #tpu.memory_space<vmem>>, %arg2: memref<128x256xbf16, #tpu.memory_space<vmem>>, %arg3: memref<1x256xf32, #tpu.memory_space<vmem>>, %arg4: memref<256x128xbf16, #tpu.memory_space<vmem>>, %arg5: memref<1x128xf32, #tpu.memory_space<vmem>>, %arg6: memref<1x128xf32, #tpu.memory_space<vmem>>, %arg7: memref<1x128xf32, #tpu.memory_space<vmem>>, %arg8: memref<16x128xbf16, #tpu.memory_space<vmem>>) attributes {dimension_semantics = [#tpu.dimension_semantics<parallel>], iteration_bounds = array<i64: 1>, scalar_prefetch = 0 : i64, scratch_operands = 0 : i64, tpu.core_type = #tpu.core_type<tc>, window_params = [{transform_indices = @transform_0, window_bounds = array<i64: 16, 128>}, {pipeline_mode = #tpu.pipeline_mode<synchronous>, transform_indices = @transform_1, window_bounds = array<i64: 128, 256>}, {pipeline_mode = #tpu.pipeline_mode<synchronous>, transform_indices = @transform_2, window_bounds = array<i64: 1, 256>}, {pipeline_mode = #tpu.pipeline_mode<synchronous>, transform_indices = @transform_3, window_bounds = array<i64: 256, 128>}, {pipeline_mode = #tpu.pipeline_mode<synchronous>, transform_indices = @transform_4, window_bounds = array<i64: 1, 128>}, {pipeline_mode = #tpu.pipeline_mode<synchronous>, transform_indices = @transform_5, window_bounds = array<i64: 1, 128>}, {pipeline_mode = #tpu.pipeline_mode<synchronous>, transform_indices = @transform_6, window_bounds = array<i64: 1, 128>}, {transform_indices = @transform_7, window_bounds = array<i64: 16, 128>}]} {
    %c0 = arith.constant 0 : index
    %c0_0 = arith.constant 0 : index
    %0 = vector.load %arg1[%c0, %c0_0] : memref<16x128xbf16, #tpu.memory_space<vmem>>, vector<16x128xbf16>
    %c0_1 = arith.constant 0 : index
    %c0_2 = arith.constant 0 : index
    %1 = vector.load %arg2[%c0_1, %c0_2] : memref<128x256xbf16, #tpu.memory_space<vmem>>, vector<128x256xbf16>
    %cst = arith.constant dense<0.000000e+00> : vector<16x256xf32>
    %2 = tpu.matmul %0, %1, %cst {dimension_numbers = #tpu.dot_dimension_numbers<[1], [0], [0], [1], [0, 0, 1, 1], [], []>} : vector<16x128xbf16>, vector<128x256xbf16>, vector<16x256xf32> -> vector<16x256xf32>
    %c0_3 = arith.constant 0 : index
    %c0_4 = arith.constant 0 : index
    %3 = vector.load %arg3[%c0_3, %c0_4] : memref<1x256xf32, #tpu.memory_space<vmem>>, vector<1x256xf32>
    %4 = vector.broadcast %3 : vector<1x256xf32> to vector<16x256xf32>
    %5 = arith.addf %2, %4 : vector<16x256xf32>
    %cst_5 = arith.constant 0.000000e+00 : f32
    %6 = vector.broadcast %cst_5 : f32 to vector<16x256xf32>
    %7 = arith.maximumf %5, %6 : vector<16x256xf32>
    %8 = arith.truncf %7 : vector<16x256xf32> to vector<16x256xbf16>
    %c0_6 = arith.constant 0 : index
    %c0_7 = arith.constant 0 : index
    %9 = vector.load %arg4[%c0_6, %c0_7] : memref<256x128xbf16, #tpu.memory_space<vmem>>, vector<256x128xbf16>
    %cst_8 = arith.constant dense<0.000000e+00> : vector<16x128xf32>
    %10 = tpu.matmul %8, %9, %cst_8 {dimension_numbers = #tpu.dot_dimension_numbers<[1], [0], [0], [1], [0, 0, 1, 1], [], []>} : vector<16x256xbf16>, vector<256x128xbf16>, vector<16x128xf32> -> vector<16x128xf32>
    %c0_9 = arith.constant 0 : index
    %c0_10 = arith.constant 0 : index
    %11 = vector.load %arg5[%c0_9, %c0_10] : memref<1x128xf32, #tpu.memory_space<vmem>>, vector<1x128xf32>
    %12 = vector.broadcast %11 : vector<1x128xf32> to vector<16x128xf32>
    %13 = arith.addf %10, %12 : vector<16x128xf32>
    %14 = arith.extf %0 : vector<16x128xbf16> to vector<16x128xf32>
    %15 = arith.addf %13, %14 : vector<16x128xf32>
    %cst_11 = arith.constant dense<0.000000e+00> : vector<16xf32>
    %16 = vector.multi_reduction <add>, %15, %cst_11 [1] : vector<16x128xf32> to vector<16xf32>
    %17 = vector.shape_cast %16 : vector<16xf32> to vector<16x1xf32>
    %cst_12 = arith.constant 1.280000e+02 : f32
    %18 = vector.broadcast %cst_12 : f32 to vector<16x1xf32>
    %19 = arith.divf %17, %18 : vector<16x1xf32>
    %20 = vector.broadcast %19 : vector<16x1xf32> to vector<16x128xf32>
    %21 = arith.subf %15, %20 : vector<16x128xf32>
    %22 = arith.mulf %21, %21 : vector<16x128xf32>
    %cst_13 = arith.constant dense<0.000000e+00> : vector<16xf32>
    %23 = vector.multi_reduction <add>, %22, %cst_13 [1] : vector<16x128xf32> to vector<16xf32>
    %24 = vector.shape_cast %23 : vector<16xf32> to vector<16x1xf32>
    %cst_14 = arith.constant 1.280000e+02 : f32
    %25 = vector.broadcast %cst_14 : f32 to vector<16x1xf32>
    %26 = arith.divf %24, %25 : vector<16x1xf32>
    %27 = vector.broadcast %19 : vector<16x1xf32> to vector<16x128xf32>
    %28 = arith.subf %15, %27 : vector<16x128xf32>
    %cst_15 = arith.constant 9.99999997E-7 : f32
    %29 = vector.broadcast %cst_15 : f32 to vector<16x1xf32>
    %30 = arith.addf %26, %29 : vector<16x1xf32>
    %31 = math.rsqrt %30 : vector<16x1xf32>
    %32 = vector.broadcast %31 : vector<16x1xf32> to vector<16x128xf32>
    %33 = arith.mulf %28, %32 : vector<16x128xf32>
    %c0_16 = arith.constant 0 : index
    %c0_17 = arith.constant 0 : index
    %34 = vector.load %arg6[%c0_16, %c0_17] : memref<1x128xf32, #tpu.memory_space<vmem>>, vector<1x128xf32>
    %35 = vector.broadcast %34 : vector<1x128xf32> to vector<16x128xf32>
    %36 = arith.mulf %33, %35 : vector<16x128xf32>
    %c0_18 = arith.constant 0 : index
    %c0_19 = arith.constant 0 : index
    %37 = vector.load %arg7[%c0_18, %c0_19] : memref<1x128xf32, #tpu.memory_space<vmem>>, vector<1x128xf32>
    %38 = vector.broadcast %37 : vector<1x128xf32> to vector<16x128xf32>
    %39 = arith.addf %36, %38 : vector<16x128xf32>
    %40 = arith.truncf %39 : vector<16x128xf32> to vector<16x128xbf16>
    %c0_20 = arith.constant 0 : index
    %c0_21 = arith.constant 0 : index
    %41 = vector.load %arg8[%c0_20, %c0_21] : memref<16x128xbf16, #tpu.memory_space<vmem>>, vector<16x128xbf16>
    tpu.vector_store %arg8[%c0_20, %c0_21], %40 {strides = array<i32>} : memref<16x128xbf16, #tpu.memory_space<vmem>>, vector<16x128xbf16>,
    return
  }
  func.func @transform_0(%arg0: i32) -> (i32, i32) {
    %c0_i32 = arith.constant 0 : i32
    %c0_i32_0 = arith.constant 0 : i32
    return %arg0, %c0_i32 : i32, i32
  }
  func.func @transform_1(%arg0: i32) -> (i32, i32) {
    %c0_i32 = arith.constant 0 : i32
    %c0_i32_0 = arith.constant 0 : i32
    %c0_i32_1 = arith.constant 0 : i32
    return %c0_i32, %c0_i32_0 : i32, i32
  }
  func.func @transform_2(%arg0: i32) -> (i32, i32) {
    %c0_i32 = arith.constant 0 : i32
    %c0_i32_0 = arith.constant 0 : i32
    %c0_i32_1 = arith.constant 0 : i32
    return %c0_i32, %c0_i32_0 : i32, i32
  }
  func.func @transform_3(%arg0: i32) -> (i32, i32) {
    %c0_i32 = arith.constant 0 : i32
    %c0_i32_0 = arith.constant 0 : i32
    %c0_i32_1 = arith.constant 0 : i32
    return %c0_i32, %c0_i32_0 : i32, i32
  }
  func.func @transform_4(%arg0: i32) -> (i32, i32) {
    %c0_i32 = arith.constant 0 : i32
    %c0_i32_0 = arith.constant 0 : i32
    %c0_i32_1 = arith.constant 0 : i32
    return %c0_i32, %c0_i32_0 : i32, i32
  }
  func.func @transform_5(%arg0: i32) -> (i32, i32) {
    %c0_i32 = arith.constant 0 : i32
    %c0_i32_0 = arith.constant 0 : i32
    %c0_i32_1 = arith.constant 0 : i32
    return %c0_i32, %c0_i32_0 : i32, i32
  }
  func.func @transform_6(%arg0: i32) -> (i32, i32) {
    %c0_i32 = arith.constant 0 : i32
    %c0_i32_0 = arith.constant 0 : i32
    %c0_i32_1 = arith.constant 0 : i32
    return %c0_i32, %c0_i32_0 : i32, i32
  }
  func.func @transform_7(%arg0: i32) -> (i32, i32) {
    %c0_i32 = arith.constant 0 : i32
    %c0_i32_0 = arith.constant 0 : i32
    return %arg0, %c0_i32 : i32, i32
  }
}

module attributes {stable_mosaic.version = 11 : i64} {
  func.func @_proj_add_ln_kernel(%arg0: i32, %arg1: memref<16x128xbf16, #tpu.memory_space<vmem>>, %arg2: memref<128x128xbf16, #tpu.memory_space<vmem>>, %arg3: memref<1x128xf32, #tpu.memory_space<vmem>>, %arg4: memref<16x128xbf16, #tpu.memory_space<vmem>>, %arg5: memref<1x128xf32, #tpu.memory_space<vmem>>, %arg6: memref<1x128xf32, #tpu.memory_space<vmem>>, %arg7: memref<16x128xbf16, #tpu.memory_space<vmem>>) attributes {dimension_semantics = [#tpu.dimension_semantics<parallel>], iteration_bounds = array<i64: 1>, scalar_prefetch = 0 : i64, scratch_operands = 0 : i64, tpu.core_type = #tpu.core_type<tc>, window_params = [{transform_indices = @transform_0, window_bounds = array<i64: 16, 128>}, {pipeline_mode = #tpu.pipeline_mode<synchronous>, transform_indices = @transform_1, window_bounds = array<i64: 128, 128>}, {pipeline_mode = #tpu.pipeline_mode<synchronous>, transform_indices = @transform_2, window_bounds = array<i64: 1, 128>}, {transform_indices = @transform_3, window_bounds = array<i64: 16, 128>}, {pipeline_mode = #tpu.pipeline_mode<synchronous>, transform_indices = @transform_4, window_bounds = array<i64: 1, 128>}, {pipeline_mode = #tpu.pipeline_mode<synchronous>, transform_indices = @transform_5, window_bounds = array<i64: 1, 128>}, {transform_indices = @transform_6, window_bounds = array<i64: 16, 128>}]} {
    %c0 = arith.constant 0 : index
    %c0_0 = arith.constant 0 : index
    %0 = vector.load %arg1[%c0, %c0_0] : memref<16x128xbf16, #tpu.memory_space<vmem>>, vector<16x128xbf16>
    %c0_1 = arith.constant 0 : index
    %c0_2 = arith.constant 0 : index
    %1 = vector.load %arg2[%c0_1, %c0_2] : memref<128x128xbf16, #tpu.memory_space<vmem>>, vector<128x128xbf16>
    %cst = arith.constant dense<0.000000e+00> : vector<16x128xf32>
    %2 = tpu.matmul %0, %1, %cst {dimension_numbers = #tpu.dot_dimension_numbers<[1], [0], [0], [1], [0, 0, 1, 1], [], []>} : vector<16x128xbf16>, vector<128x128xbf16>, vector<16x128xf32> -> vector<16x128xf32>
    %c0_3 = arith.constant 0 : index
    %c0_4 = arith.constant 0 : index
    %3 = vector.load %arg3[%c0_3, %c0_4] : memref<1x128xf32, #tpu.memory_space<vmem>>, vector<1x128xf32>
    %4 = vector.broadcast %3 : vector<1x128xf32> to vector<16x128xf32>
    %5 = arith.addf %2, %4 : vector<16x128xf32>
    %c0_5 = arith.constant 0 : index
    %c0_6 = arith.constant 0 : index
    %6 = vector.load %arg4[%c0_5, %c0_6] : memref<16x128xbf16, #tpu.memory_space<vmem>>, vector<16x128xbf16>
    %7 = arith.extf %6 : vector<16x128xbf16> to vector<16x128xf32>
    %8 = arith.addf %5, %7 : vector<16x128xf32>
    %cst_7 = arith.constant dense<0.000000e+00> : vector<16xf32>
    %9 = vector.multi_reduction <add>, %8, %cst_7 [1] : vector<16x128xf32> to vector<16xf32>
    %10 = vector.shape_cast %9 : vector<16xf32> to vector<16x1xf32>
    %cst_8 = arith.constant 1.280000e+02 : f32
    %11 = vector.broadcast %cst_8 : f32 to vector<16x1xf32>
    %12 = arith.divf %10, %11 : vector<16x1xf32>
    %13 = vector.broadcast %12 : vector<16x1xf32> to vector<16x128xf32>
    %14 = arith.subf %8, %13 : vector<16x128xf32>
    %15 = arith.mulf %14, %14 : vector<16x128xf32>
    %cst_9 = arith.constant dense<0.000000e+00> : vector<16xf32>
    %16 = vector.multi_reduction <add>, %15, %cst_9 [1] : vector<16x128xf32> to vector<16xf32>
    %17 = vector.shape_cast %16 : vector<16xf32> to vector<16x1xf32>
    %cst_10 = arith.constant 1.280000e+02 : f32
    %18 = vector.broadcast %cst_10 : f32 to vector<16x1xf32>
    %19 = arith.divf %17, %18 : vector<16x1xf32>
    %20 = vector.broadcast %12 : vector<16x1xf32> to vector<16x128xf32>
    %21 = arith.subf %8, %20 : vector<16x128xf32>
    %cst_11 = arith.constant 9.99999997E-7 : f32
    %22 = vector.broadcast %cst_11 : f32 to vector<16x1xf32>
    %23 = arith.addf %19, %22 : vector<16x1xf32>
    %24 = math.rsqrt %23 : vector<16x1xf32>
    %25 = vector.broadcast %24 : vector<16x1xf32> to vector<16x128xf32>
    %26 = arith.mulf %21, %25 : vector<16x128xf32>
    %c0_12 = arith.constant 0 : index
    %c0_13 = arith.constant 0 : index
    %27 = vector.load %arg5[%c0_12, %c0_13] : memref<1x128xf32, #tpu.memory_space<vmem>>, vector<1x128xf32>
    %28 = vector.broadcast %27 : vector<1x128xf32> to vector<16x128xf32>
    %29 = arith.mulf %26, %28 : vector<16x128xf32>
    %c0_14 = arith.constant 0 : index
    %c0_15 = arith.constant 0 : index
    %30 = vector.load %arg6[%c0_14, %c0_15] : memref<1x128xf32, #tpu.memory_space<vmem>>, vector<1x128xf32>
    %31 = vector.broadcast %30 : vector<1x128xf32> to vector<16x128xf32>
    %32 = arith.addf %29, %31 : vector<16x128xf32>
    %33 = arith.truncf %32 : vector<16x128xf32> to vector<16x128xbf16>
    %c0_16 = arith.constant 0 : index
    %c0_17 = arith.constant 0 : index
    %34 = vector.load %arg7[%c0_16, %c0_17] : memref<16x128xbf16, #tpu.memory_space<vmem>>, vector<16x128xbf16>
    tpu.vector_store %arg7[%c0_16, %c0_17], %33 {strides = array<i32>} : memref<16x128xbf16, #tpu.memory_space<vmem>>, vector<16x128xbf16>,
    return
  }
  func.func @transform_0(%arg0: i32) -> (i32, i32) {
    %c0_i32 = arith.constant 0 : i32
    %c0_i32_0 = arith.constant 0 : i32
    return %arg0, %c0_i32 : i32, i32
  }
  func.func @transform_1(%arg0: i32) -> (i32, i32) {
    %c0_i32 = arith.constant 0 : i32
    %c0_i32_0 = arith.constant 0 : i32
    %c0_i32_1 = arith.constant 0 : i32
    return %c0_i32, %c0_i32_0 : i32, i32
  }
  func.func @transform_2(%arg0: i32) -> (i32, i32) {
    %c0_i32 = arith.constant 0 : i32
    %c0_i32_0 = arith.constant 0 : i32
    %c0_i32_1 = arith.constant 0 : i32
    return %c0_i32, %c0_i32_0 : i32, i32
  }
  func.func @transform_3(%arg0: i32) -> (i32, i32) {
    %c0_i32 = arith.constant 0 : i32
    %c0_i32_0 = arith.constant 0 : i32
    return %arg0, %c0_i32 : i32, i32
  }
  func.func @transform_4(%arg0: i32) -> (i32, i32) {
    %c0_i32 = arith.constant 0 : i32
    %c0_i32_0 = arith.constant 0 : i32
    %c0_i32_1 = arith.constant 0 : i32
    return %c0_i32, %c0_i32_0 : i32, i32
  }
  func.func @transform_5(%arg0: i32) -> (i32, i32) {
    %c0_i32 = arith.constant 0 : i32
    %c0_i32_0 = arith.constant 0 : i32
    %c0_i32_1 = arith.constant 0 : i32
    return %c0_i32, %c0_i32_0 : i32, i32
  }
  func.func @transform_6(%arg0: i32) -> (i32, i32) {
    %c0_i32 = arith.constant 0 : i32
    %c0_i32_0 = arith.constant 0 : i32
    return %arg0, %c0_i32 : i32, i32
  }
}

module attributes {stable_mosaic.version = 11 : i64} {
  func.func @_linear_kernel(%arg0: i32, %arg1: memref<16x128xbf16, #tpu.memory_space<vmem>>, %arg2: memref<128x256xbf16, #tpu.memory_space<vmem>>, %arg3: memref<1x256xf32, #tpu.memory_space<vmem>>, %arg4: memref<16x256xbf16, #tpu.memory_space<vmem>>) attributes {dimension_semantics = [#tpu.dimension_semantics<parallel>], iteration_bounds = array<i64: 1>, scalar_prefetch = 0 : i64, scratch_operands = 0 : i64, tpu.core_type = #tpu.core_type<tc>, window_params = [{transform_indices = @transform_0, window_bounds = array<i64: 16, 128>}, {pipeline_mode = #tpu.pipeline_mode<synchronous>, transform_indices = @transform_1, window_bounds = array<i64: 128, 256>}, {pipeline_mode = #tpu.pipeline_mode<synchronous>, transform_indices = @transform_2, window_bounds = array<i64: 1, 256>}, {transform_indices = @transform_3, window_bounds = array<i64: 16, 256>}]} {
    %c0 = arith.constant 0 : index
    %c0_0 = arith.constant 0 : index
    %0 = vector.load %arg1[%c0, %c0_0] : memref<16x128xbf16, #tpu.memory_space<vmem>>, vector<16x128xbf16>
    %c0_1 = arith.constant 0 : index
    %c0_2 = arith.constant 0 : index
    %1 = vector.load %arg2[%c0_1, %c0_2] : memref<128x256xbf16, #tpu.memory_space<vmem>>, vector<128x256xbf16>
    %cst = arith.constant dense<0.000000e+00> : vector<16x256xf32>
    %2 = tpu.matmul %0, %1, %cst {dimension_numbers = #tpu.dot_dimension_numbers<[1], [0], [0], [1], [0, 0, 1, 1], [], []>} : vector<16x128xbf16>, vector<128x256xbf16>, vector<16x256xf32> -> vector<16x256xf32>
    %c0_3 = arith.constant 0 : index
    %c0_4 = arith.constant 0 : index
    %3 = vector.load %arg3[%c0_3, %c0_4] : memref<1x256xf32, #tpu.memory_space<vmem>>, vector<1x256xf32>
    %4 = vector.broadcast %3 : vector<1x256xf32> to vector<16x256xf32>
    %5 = arith.addf %2, %4 : vector<16x256xf32>
    %6 = arith.truncf %5 : vector<16x256xf32> to vector<16x256xbf16>
    %c0_5 = arith.constant 0 : index
    %c0_6 = arith.constant 0 : index
    %7 = vector.load %arg4[%c0_5, %c0_6] : memref<16x256xbf16, #tpu.memory_space<vmem>>, vector<16x256xbf16>
    tpu.vector_store %arg4[%c0_5, %c0_6], %6 {strides = array<i32>} : memref<16x256xbf16, #tpu.memory_space<vmem>>, vector<16x256xbf16>,
    return
  }
  func.func @transform_0(%arg0: i32) -> (i32, i32) {
    %c0_i32 = arith.constant 0 : i32
    %c0_i32_0 = arith.constant 0 : i32
    return %arg0, %c0_i32 : i32, i32
  }
  func.func @transform_1(%arg0: i32) -> (i32, i32) {
    %c0_i32 = arith.constant 0 : i32
    %c0_i32_0 = arith.constant 0 : i32
    %c0_i32_1 = arith.constant 0 : i32
    return %c0_i32, %c0_i32_0 : i32, i32
  }
  func.func @transform_2(%arg0: i32) -> (i32, i32) {
    %c0_i32 = arith.constant 0 : i32
    %c0_i32_0 = arith.constant 0 : i32
    %c0_i32_1 = arith.constant 0 : i32
    return %c0_i32, %c0_i32_0 : i32, i32
  }
  func.func @transform_3(%arg0: i32) -> (i32, i32) {
    %c0_i32 = arith.constant 0 : i32
    %c0_i32_0 = arith.constant 0 : i32
    return %arg0, %c0_i32 : i32, i32
  }
}

module attributes {stable_mosaic.version = 11 : i64} {
  func.func @_mha_kernel(%arg0: i32, %arg1: memref<1x7x128xbf16, #tpu.memory_space<vmem>>, %arg2: memref<1x7x128xbf16, #tpu.memory_space<vmem>>, %arg3: memref<1x7x128xbf16, #tpu.memory_space<vmem>>, %arg4: memref<1x7x7xf32, #tpu.memory_space<vmem>>, %arg5: memref<1x7x128xbf16, #tpu.memory_space<vmem>>) attributes {dimension_semantics = [#tpu.dimension_semantics<parallel>], iteration_bounds = array<i64: 2>, scalar_prefetch = 0 : i64, scratch_operands = 0 : i64, tpu.core_type = #tpu.core_type<tc>, window_params = [{transform_indices = @transform_0, window_bounds = array<i64: 1, 7, 128>}, {transform_indices = @transform_1, window_bounds = array<i64: 1, 7, 128>}, {transform_indices = @transform_2, window_bounds = array<i64: 1, 7, 128>}, {transform_indices = @transform_3, window_bounds = array<i64: 1, 7, 7>}, {transform_indices = @transform_4, window_bounds = array<i64: 1, 7, 128>}]} {
    %c0 = arith.constant 0 : index
    %c0_0 = arith.constant 0 : index
    %c0_1 = arith.constant 0 : index
    %0 = vector.load %arg1[%c0, %c0_0, %c0_1] : memref<1x7x128xbf16, #tpu.memory_space<vmem>>, vector<1x7x128xbf16>
    %1 = vector.shape_cast %0 : vector<1x7x128xbf16> to vector<7x128xbf16>
    %c0_2 = arith.constant 0 : index
    %c0_3 = arith.constant 0 : index
    %c0_4 = arith.constant 0 : index
    %2 = vector.load %arg2[%c0_2, %c0_3, %c0_4] : memref<1x7x128xbf16, #tpu.memory_space<vmem>>, vector<1x7x128xbf16>
    %3 = vector.shape_cast %2 : vector<1x7x128xbf16> to vector<7x128xbf16>
    %c0_5 = arith.constant 0 : index
    %c0_6 = arith.constant 0 : index
    %c0_7 = arith.constant 0 : index
    %4 = vector.load %arg3[%c0_5, %c0_6, %c0_7] : memref<1x7x128xbf16, #tpu.memory_space<vmem>>, vector<1x7x128xbf16>
    %5 = vector.shape_cast %4 : vector<1x7x128xbf16> to vector<7x128xbf16>
    %c0_8 = arith.constant 0 : index
    %c0_9 = arith.constant 0 : index
    %c0_10 = arith.constant 0 : index
    %6 = vector.load %arg4[%c0_8, %c0_9, %c0_10] : memref<1x7x7xf32, #tpu.memory_space<vmem>>, vector<1x7x7xf32>
    %7 = vector.shape_cast %6 : vector<1x7x7xf32> to vector<7x7xf32>
    %8 = vector.extract_strided_slice %1 {offsets = [0, 0], sizes = [7, 32], strides = [1, 1]} : vector<7x128xbf16> to vector<7x32xbf16>
    %9 = vector.extract_strided_slice %3 {offsets = [0, 0], sizes = [7, 32], strides = [1, 1]} : vector<7x128xbf16> to vector<7x32xbf16>
    %10 = vector.extract_strided_slice %5 {offsets = [0, 0], sizes = [7, 32], strides = [1, 1]} : vector<7x128xbf16> to vector<7x32xbf16>
    %cst = arith.constant dense<0.000000e+00> : vector<7x7xf32>
    %11 = tpu.matmul %8, %9, %cst {dimension_numbers = #tpu.dot_dimension_numbers<[1], [1], [0], [0], [0, 0, 1, 0], [], []>} : vector<7x32xbf16>, vector<7x32xbf16>, vector<7x7xf32> -> vector<7x7xf32>
    %cst_11 = arith.constant 0.176776692 : f32
    %12 = vector.broadcast %cst_11 : f32 to vector<7x7xf32>
    %13 = arith.mulf %11, %12 : vector<7x7xf32>
    %14 = arith.addf %13, %7 : vector<7x7xf32>
    %cst_12 = arith.constant dense<0xFF800000> : vector<7xf32>
    %15 = vector.multi_reduction <maximumf>, %14, %cst_12 [1] : vector<7x7xf32> to vector<7xf32>
    %16 = vector.shape_cast %15 : vector<7xf32> to vector<7x1xf32>
    %17 = vector.broadcast %16 : vector<7x1xf32> to vector<7x7xf32>
    %18 = arith.subf %14, %17 : vector<7x7xf32>
    %19 = math.exp %18 : vector<7x7xf32>
    %cst_13 = arith.constant dense<0.000000e+00> : vector<7xf32>
    %20 = vector.multi_reduction <add>, %19, %cst_13 [1] : vector<7x7xf32> to vector<7xf32>
    %21 = vector.shape_cast %20 : vector<7xf32> to vector<7x1xf32>
    %22 = tpu.reciprocal %21 {approx = true} : vector<7x1xf32> -> vector<7x1xf32>
    %23 = vector.broadcast %22 : vector<7x1xf32> to vector<7x7xf32>
    %24 = arith.mulf %19, %23 : vector<7x7xf32>
    %25 = arith.truncf %24 : vector<7x7xf32> to vector<7x7xbf16>
    %cst_14 = arith.constant dense<0.000000e+00> : vector<7x32xf32>
    %26 = tpu.matmul %25, %10, %cst_14 {dimension_numbers = #tpu.dot_dimension_numbers<[1], [0], [0], [1], [0, 0, 1, 1], [], []>} : vector<7x7xbf16>, vector<7x32xbf16>, vector<7x32xf32> -> vector<7x32xf32>
    %27 = vector.extract_strided_slice %1 {offsets = [0, 32], sizes = [7, 32], strides = [1, 1]} : vector<7x128xbf16> to vector<7x32xbf16>
    %28 = vector.extract_strided_slice %3 {offsets = [0, 32], sizes = [7, 32], strides = [1, 1]} : vector<7x128xbf16> to vector<7x32xbf16>
    %29 = vector.extract_strided_slice %5 {offsets = [0, 32], sizes = [7, 32], strides = [1, 1]} : vector<7x128xbf16> to vector<7x32xbf16>
    %cst_15 = arith.constant dense<0.000000e+00> : vector<7x7xf32>
    %30 = tpu.matmul %27, %28, %cst_15 {dimension_numbers = #tpu.dot_dimension_numbers<[1], [1], [0], [0], [0, 0, 1, 0], [], []>} : vector<7x32xbf16>, vector<7x32xbf16>, vector<7x7xf32> -> vector<7x7xf32>
    %cst_16 = arith.constant 0.176776692 : f32
    %31 = vector.broadcast %cst_16 : f32 to vector<7x7xf32>
    %32 = arith.mulf %30, %31 : vector<7x7xf32>
    %33 = arith.addf %32, %7 : vector<7x7xf32>
    %cst_17 = arith.constant dense<0xFF800000> : vector<7xf32>
    %34 = vector.multi_reduction <maximumf>, %33, %cst_17 [1] : vector<7x7xf32> to vector<7xf32>
    %35 = vector.shape_cast %34 : vector<7xf32> to vector<7x1xf32>
    %36 = vector.broadcast %35 : vector<7x1xf32> to vector<7x7xf32>
    %37 = arith.subf %33, %36 : vector<7x7xf32>
    %38 = math.exp %37 : vector<7x7xf32>
    %cst_18 = arith.constant dense<0.000000e+00> : vector<7xf32>
    %39 = vector.multi_reduction <add>, %38, %cst_18 [1] : vector<7x7xf32> to vector<7xf32>
    %40 = vector.shape_cast %39 : vector<7xf32> to vector<7x1xf32>
    %41 = tpu.reciprocal %40 {approx = true} : vector<7x1xf32> -> vector<7x1xf32>
    %42 = vector.broadcast %41 : vector<7x1xf32> to vector<7x7xf32>
    %43 = arith.mulf %38, %42 : vector<7x7xf32>
    %44 = arith.truncf %43 : vector<7x7xf32> to vector<7x7xbf16>
    %cst_19 = arith.constant dense<0.000000e+00> : vector<7x32xf32>
    %45 = tpu.matmul %44, %29, %cst_19 {dimension_numbers = #tpu.dot_dimension_numbers<[1], [0], [0], [1], [0, 0, 1, 1], [], []>} : vector<7x7xbf16>, vector<7x32xbf16>, vector<7x32xf32> -> vector<7x32xf32>
    %46 = vector.extract_strided_slice %1 {offsets = [0, 64], sizes = [7, 32], strides = [1, 1]} : vector<7x128xbf16> to vector<7x32xbf16>
    %47 = vector.extract_strided_slice %3 {offsets = [0, 64], sizes = [7, 32], strides = [1, 1]} : vector<7x128xbf16> to vector<7x32xbf16>
    %48 = vector.extract_strided_slice %5 {offsets = [0, 64], sizes = [7, 32], strides = [1, 1]} : vector<7x128xbf16> to vector<7x32xbf16>
    %cst_20 = arith.constant dense<0.000000e+00> : vector<7x7xf32>
    %49 = tpu.matmul %46, %47, %cst_20 {dimension_numbers = #tpu.dot_dimension_numbers<[1], [1], [0], [0], [0, 0, 1, 0], [], []>} : vector<7x32xbf16>, vector<7x32xbf16>, vector<7x7xf32> -> vector<7x7xf32>
    %cst_21 = arith.constant 0.176776692 : f32
    %50 = vector.broadcast %cst_21 : f32 to vector<7x7xf32>
    %51 = arith.mulf %49, %50 : vector<7x7xf32>
    %52 = arith.addf %51, %7 : vector<7x7xf32>
    %cst_22 = arith.constant dense<0xFF800000> : vector<7xf32>
    %53 = vector.multi_reduction <maximumf>, %52, %cst_22 [1] : vector<7x7xf32> to vector<7xf32>
    %54 = vector.shape_cast %53 : vector<7xf32> to vector<7x1xf32>
    %55 = vector.broadcast %54 : vector<7x1xf32> to vector<7x7xf32>
    %56 = arith.subf %52, %55 : vector<7x7xf32>
    %57 = math.exp %56 : vector<7x7xf32>
    %cst_23 = arith.constant dense<0.000000e+00> : vector<7xf32>
    %58 = vector.multi_reduction <add>, %57, %cst_23 [1] : vector<7x7xf32> to vector<7xf32>
    %59 = vector.shape_cast %58 : vector<7xf32> to vector<7x1xf32>
    %60 = tpu.reciprocal %59 {approx = true} : vector<7x1xf32> -> vector<7x1xf32>
    %61 = vector.broadcast %60 : vector<7x1xf32> to vector<7x7xf32>
    %62 = arith.mulf %57, %61 : vector<7x7xf32>
    %63 = arith.truncf %62 : vector<7x7xf32> to vector<7x7xbf16>
    %cst_24 = arith.constant dense<0.000000e+00> : vector<7x32xf32>
    %64 = tpu.matmul %63, %48, %cst_24 {dimension_numbers = #tpu.dot_dimension_numbers<[1], [0], [0], [1], [0, 0, 1, 1], [], []>} : vector<7x7xbf16>, vector<7x32xbf16>, vector<7x32xf32> -> vector<7x32xf32>
    %65 = vector.extract_strided_slice %1 {offsets = [0, 96], sizes = [7, 32], strides = [1, 1]} : vector<7x128xbf16> to vector<7x32xbf16>
    %66 = vector.extract_strided_slice %3 {offsets = [0, 96], sizes = [7, 32], strides = [1, 1]} : vector<7x128xbf16> to vector<7x32xbf16>
    %67 = vector.extract_strided_slice %5 {offsets = [0, 96], sizes = [7, 32], strides = [1, 1]} : vector<7x128xbf16> to vector<7x32xbf16>
    %cst_25 = arith.constant dense<0.000000e+00> : vector<7x7xf32>
    %68 = tpu.matmul %65, %66, %cst_25 {dimension_numbers = #tpu.dot_dimension_numbers<[1], [1], [0], [0], [0, 0, 1, 0], [], []>} : vector<7x32xbf16>, vector<7x32xbf16>, vector<7x7xf32> -> vector<7x7xf32>
    %cst_26 = arith.constant 0.176776692 : f32
    %69 = vector.broadcast %cst_26 : f32 to vector<7x7xf32>
    %70 = arith.mulf %68, %69 : vector<7x7xf32>
    %71 = arith.addf %70, %7 : vector<7x7xf32>
    %cst_27 = arith.constant dense<0xFF800000> : vector<7xf32>
    %72 = vector.multi_reduction <maximumf>, %71, %cst_27 [1] : vector<7x7xf32> to vector<7xf32>
    %73 = vector.shape_cast %72 : vector<7xf32> to vector<7x1xf32>
    %74 = vector.broadcast %73 : vector<7x1xf32> to vector<7x7xf32>
    %75 = arith.subf %71, %74 : vector<7x7xf32>
    %76 = math.exp %75 : vector<7x7xf32>
    %cst_28 = arith.constant dense<0.000000e+00> : vector<7xf32>
    %77 = vector.multi_reduction <add>, %76, %cst_28 [1] : vector<7x7xf32> to vector<7xf32>
    %78 = vector.shape_cast %77 : vector<7xf32> to vector<7x1xf32>
    %79 = tpu.reciprocal %78 {approx = true} : vector<7x1xf32> -> vector<7x1xf32>
    %80 = vector.broadcast %79 : vector<7x1xf32> to vector<7x7xf32>
    %81 = arith.mulf %76, %80 : vector<7x7xf32>
    %82 = arith.truncf %81 : vector<7x7xf32> to vector<7x7xbf16>
    %cst_29 = arith.constant dense<0.000000e+00> : vector<7x32xf32>
    %83 = tpu.matmul %82, %67, %cst_29 {dimension_numbers = #tpu.dot_dimension_numbers<[1], [0], [0], [1], [0, 0, 1, 1], [], []>} : vector<7x7xbf16>, vector<7x32xbf16>, vector<7x32xf32> -> vector<7x32xf32>
    %84 = tpu.concatenate %26, %45, %64, %83 in 1 : vector<7x32xf32>, vector<7x32xf32>, vector<7x32xf32>, vector<7x32xf32> -> vector<7x128xf32>
    %85 = arith.truncf %84 : vector<7x128xf32> to vector<7x128xbf16>
    %c0_30 = arith.constant 0 : index
    %c0_31 = arith.constant 0 : index
    %c0_32 = arith.constant 0 : index
    %86 = vector.load %arg5[%c0_30, %c0_31, %c0_32] : memref<1x7x128xbf16, #tpu.memory_space<vmem>>, vector<1x7x128xbf16>
    %87 = vector.shape_cast %86 : vector<1x7x128xbf16> to vector<7x128xbf16>
    %88 = vector.shape_cast %85 : vector<7x128xbf16> to vector<1x7x128xbf16>
    tpu.vector_store %arg5[%c0_30, %c0_31, %c0_32], %88 {strides = array<i32>} : memref<1x7x128xbf16, #tpu.memory_space<vmem>>, vector<1x7x128xbf16>,
    return
  }
  func.func @transform_0(%arg0: i32) -> (i32, i32, i32) {
    %c0_i32 = arith.constant 0 : i32
    %c0_i32_0 = arith.constant 0 : i32
    %c0_i32_1 = arith.constant 0 : i32
    return %arg0, %c0_i32, %c0_i32_0 : i32, i32, i32
  }
  func.func @transform_1(%arg0: i32) -> (i32, i32, i32) {
    %c0_i32 = arith.constant 0 : i32
    %c1_i32 = arith.constant 1 : i32
    %c0_i32_0 = arith.constant 0 : i32
    return %arg0, %c0_i32, %c1_i32 : i32, i32, i32
  }
  func.func @transform_2(%arg0: i32) -> (i32, i32, i32) {
    %c0_i32 = arith.constant 0 : i32
    %c2_i32 = arith.constant 2 : i32
    %c0_i32_0 = arith.constant 0 : i32
    return %arg0, %c0_i32, %c2_i32 : i32, i32, i32
  }
  func.func @transform_3(%arg0: i32) -> (i32, i32, i32) {
    %c0_i32 = arith.constant 0 : i32
    %c0_i32_0 = arith.constant 0 : i32
    %c0_i32_1 = arith.constant 0 : i32
    return %arg0, %c0_i32, %c0_i32_0 : i32, i32, i32
  }
  func.func @transform_4(%arg0: i32) -> (i32, i32, i32) {
    %c0_i32 = arith.constant 0 : i32
    %c0_i32_0 = arith.constant 0 : i32
    %c0_i32_1 = arith.constant 0 : i32
    return %arg0, %c0_i32, %c0_i32_0 : i32, i32, i32
  }
}

module attributes {stable_mosaic.version = 11 : i64} {
  func.func @_linear_kernel(%arg0: i32, %arg1: memref<16x128xbf16, #tpu.memory_space<vmem>>, %arg2: memref<128x128xbf16, #tpu.memory_space<vmem>>, %arg3: memref<1x128xf32, #tpu.memory_space<vmem>>, %arg4: memref<16x128xbf16, #tpu.memory_space<vmem>>) attributes {dimension_semantics = [#tpu.dimension_semantics<parallel>], iteration_bounds = array<i64: 1>, scalar_prefetch = 0 : i64, scratch_operands = 0 : i64, tpu.core_type = #tpu.core_type<tc>, window_params = [{transform_indices = @transform_0, window_bounds = array<i64: 16, 128>}, {pipeline_mode = #tpu.pipeline_mode<synchronous>, transform_indices = @transform_1, window_bounds = array<i64: 128, 128>}, {pipeline_mode = #tpu.pipeline_mode<synchronous>, transform_indices = @transform_2, window_bounds = array<i64: 1, 128>}, {transform_indices = @transform_3, window_bounds = array<i64: 16, 128>}]} {
    %c0 = arith.constant 0 : index
    %c0_0 = arith.constant 0 : index
    %0 = vector.load %arg1[%c0, %c0_0] : memref<16x128xbf16, #tpu.memory_space<vmem>>, vector<16x128xbf16>
    %c0_1 = arith.constant 0 : index
    %c0_2 = arith.constant 0 : index
    %1 = vector.load %arg2[%c0_1, %c0_2] : memref<128x128xbf16, #tpu.memory_space<vmem>>, vector<128x128xbf16>
    %cst = arith.constant dense<0.000000e+00> : vector<16x128xf32>
    %2 = tpu.matmul %0, %1, %cst {dimension_numbers = #tpu.dot_dimension_numbers<[1], [0], [0], [1], [0, 0, 1, 1], [], []>} : vector<16x128xbf16>, vector<128x128xbf16>, vector<16x128xf32> -> vector<16x128xf32>
    %c0_3 = arith.constant 0 : index
    %c0_4 = arith.constant 0 : index
    %3 = vector.load %arg3[%c0_3, %c0_4] : memref<1x128xf32, #tpu.memory_space<vmem>>, vector<1x128xf32>
    %4 = vector.broadcast %3 : vector<1x128xf32> to vector<16x128xf32>
    %5 = arith.addf %2, %4 : vector<16x128xf32>
    %6 = arith.truncf %5 : vector<16x128xf32> to vector<16x128xbf16>
    %c0_5 = arith.constant 0 : index
    %c0_6 = arith.constant 0 : index
    %7 = vector.load %arg4[%c0_5, %c0_6] : memref<16x128xbf16, #tpu.memory_space<vmem>>, vector<16x128xbf16>
    tpu.vector_store %arg4[%c0_5, %c0_6], %6 {strides = array<i32>} : memref<16x128xbf16, #tpu.memory_space<vmem>>, vector<16x128xbf16>,
    return
  }
  func.func @transform_0(%arg0: i32) -> (i32, i32) {
    %c0_i32 = arith.constant 0 : i32
    %c0_i32_0 = arith.constant 0 : i32
    return %arg0, %c0_i32 : i32, i32
  }
  func.func @transform_1(%arg0: i32) -> (i32, i32) {
    %c0_i32 = arith.constant 0 : i32
    %c0_i32_0 = arith.constant 0 : i32
    %c0_i32_1 = arith.constant 0 : i32
    return %c0_i32, %c0_i32_0 : i32, i32
  }
  func.func @transform_2(%arg0: i32) -> (i32, i32) {
    %c0_i32 = arith.constant 0 : i32
    %c0_i32_0 = arith.constant 0 : i32
    %c0_i32_1 = arith.constant 0 : i32
    return %c0_i32, %c0_i32_0 : i32, i32
  }
  func.func @transform_3(%arg0: i32) -> (i32, i32) {
    %c0_i32 = arith.constant 0 : i32
    %c0_i32_0 = arith.constant 0 : i32
    return %arg0, %c0_i32 : i32, i32
  }
}

module attributes {stable_mosaic.version = 11 : i64} {
  func.func @_mha_kernel(%arg0: i32, %arg1: memref<1x7x128xbf16, #tpu.memory_space<vmem>>, %arg2: memref<1x8x128xbf16, #tpu.memory_space<vmem>>, %arg3: memref<1x8x128xbf16, #tpu.memory_space<vmem>>, %arg4: memref<1x7x8xf32, #tpu.memory_space<vmem>>, %arg5: memref<1x7x128xbf16, #tpu.memory_space<vmem>>) attributes {dimension_semantics = [#tpu.dimension_semantics<parallel>], iteration_bounds = array<i64: 2>, scalar_prefetch = 0 : i64, scratch_operands = 0 : i64, tpu.core_type = #tpu.core_type<tc>, window_params = [{transform_indices = @transform_0, window_bounds = array<i64: 1, 7, 128>}, {transform_indices = @transform_1, window_bounds = array<i64: 1, 8, 128>}, {transform_indices = @transform_2, window_bounds = array<i64: 1, 8, 128>}, {transform_indices = @transform_3, window_bounds = array<i64: 1, 7, 8>}, {transform_indices = @transform_4, window_bounds = array<i64: 1, 7, 128>}]} {
    %c0 = arith.constant 0 : index
    %c0_0 = arith.constant 0 : index
    %c0_1 = arith.constant 0 : index
    %0 = vector.load %arg1[%c0, %c0_0, %c0_1] : memref<1x7x128xbf16, #tpu.memory_space<vmem>>, vector<1x7x128xbf16>
    %1 = vector.shape_cast %0 : vector<1x7x128xbf16> to vector<7x128xbf16>
    %c0_2 = arith.constant 0 : index
    %c0_3 = arith.constant 0 : index
    %c0_4 = arith.constant 0 : index
    %2 = vector.load %arg2[%c0_2, %c0_3, %c0_4] : memref<1x8x128xbf16, #tpu.memory_space<vmem>>, vector<1x8x128xbf16>
    %3 = vector.shape_cast %2 : vector<1x8x128xbf16> to vector<8x128xbf16>
    %c0_5 = arith.constant 0 : index
    %c0_6 = arith.constant 0 : index
    %c0_7 = arith.constant 0 : index
    %4 = vector.load %arg3[%c0_5, %c0_6, %c0_7] : memref<1x8x128xbf16, #tpu.memory_space<vmem>>, vector<1x8x128xbf16>
    %5 = vector.shape_cast %4 : vector<1x8x128xbf16> to vector<8x128xbf16>
    %c0_8 = arith.constant 0 : index
    %c0_9 = arith.constant 0 : index
    %c0_10 = arith.constant 0 : index
    %6 = vector.load %arg4[%c0_8, %c0_9, %c0_10] : memref<1x7x8xf32, #tpu.memory_space<vmem>>, vector<1x7x8xf32>
    %7 = vector.shape_cast %6 : vector<1x7x8xf32> to vector<7x8xf32>
    %8 = vector.extract_strided_slice %1 {offsets = [0, 0], sizes = [7, 32], strides = [1, 1]} : vector<7x128xbf16> to vector<7x32xbf16>
    %9 = vector.extract_strided_slice %3 {offsets = [0, 0], sizes = [8, 32], strides = [1, 1]} : vector<8x128xbf16> to vector<8x32xbf16>
    %10 = vector.extract_strided_slice %5 {offsets = [0, 0], sizes = [8, 32], strides = [1, 1]} : vector<8x128xbf16> to vector<8x32xbf16>
    %cst = arith.constant dense<0.000000e+00> : vector<7x8xf32>
    %11 = tpu.matmul %8, %9, %cst {dimension_numbers = #tpu.dot_dimension_numbers<[1], [1], [0], [0], [0, 0, 1, 0], [], []>} : vector<7x32xbf16>, vector<8x32xbf16>, vector<7x8xf32> -> vector<7x8xf32>
    %cst_11 = arith.constant 0.176776692 : f32
    %12 = vector.broadcast %cst_11 : f32 to vector<7x8xf32>
    %13 = arith.mulf %11, %12 : vector<7x8xf32>
    %14 = arith.addf %13, %7 : vector<7x8xf32>
    %cst_12 = arith.constant dense<0xFF800000> : vector<7xf32>
    %15 = vector.multi_reduction <maximumf>, %14, %cst_12 [1] : vector<7x8xf32> to vector<7xf32>
    %16 = vector.shape_cast %15 : vector<7xf32> to vector<7x1xf32>
    %17 = vector.broadcast %16 : vector<7x1xf32> to vector<7x8xf32>
    %18 = arith.subf %14, %17 : vector<7x8xf32>
    %19 = math.exp %18 : vector<7x8xf32>
    %cst_13 = arith.constant dense<0.000000e+00> : vector<7xf32>
    %20 = vector.multi_reduction <add>, %19, %cst_13 [1] : vector<7x8xf32> to vector<7xf32>
    %21 = vector.shape_cast %20 : vector<7xf32> to vector<7x1xf32>
    %22 = tpu.reciprocal %21 {approx = true} : vector<7x1xf32> -> vector<7x1xf32>
    %23 = vector.broadcast %22 : vector<7x1xf32> to vector<7x8xf32>
    %24 = arith.mulf %19, %23 : vector<7x8xf32>
    %25 = arith.truncf %24 : vector<7x8xf32> to vector<7x8xbf16>
    %cst_14 = arith.constant dense<0.000000e+00> : vector<7x32xf32>
    %26 = tpu.matmul %25, %10, %cst_14 {dimension_numbers = #tpu.dot_dimension_numbers<[1], [0], [0], [1], [0, 0, 1, 1], [], []>} : vector<7x8xbf16>, vector<8x32xbf16>, vector<7x32xf32> -> vector<7x32xf32>
    %27 = vector.extract_strided_slice %1 {offsets = [0, 32], sizes = [7, 32], strides = [1, 1]} : vector<7x128xbf16> to vector<7x32xbf16>
    %28 = vector.extract_strided_slice %3 {offsets = [0, 32], sizes = [8, 32], strides = [1, 1]} : vector<8x128xbf16> to vector<8x32xbf16>
    %29 = vector.extract_strided_slice %5 {offsets = [0, 32], sizes = [8, 32], strides = [1, 1]} : vector<8x128xbf16> to vector<8x32xbf16>
    %cst_15 = arith.constant dense<0.000000e+00> : vector<7x8xf32>
    %30 = tpu.matmul %27, %28, %cst_15 {dimension_numbers = #tpu.dot_dimension_numbers<[1], [1], [0], [0], [0, 0, 1, 0], [], []>} : vector<7x32xbf16>, vector<8x32xbf16>, vector<7x8xf32> -> vector<7x8xf32>
    %cst_16 = arith.constant 0.176776692 : f32
    %31 = vector.broadcast %cst_16 : f32 to vector<7x8xf32>
    %32 = arith.mulf %30, %31 : vector<7x8xf32>
    %33 = arith.addf %32, %7 : vector<7x8xf32>
    %cst_17 = arith.constant dense<0xFF800000> : vector<7xf32>
    %34 = vector.multi_reduction <maximumf>, %33, %cst_17 [1] : vector<7x8xf32> to vector<7xf32>
    %35 = vector.shape_cast %34 : vector<7xf32> to vector<7x1xf32>
    %36 = vector.broadcast %35 : vector<7x1xf32> to vector<7x8xf32>
    %37 = arith.subf %33, %36 : vector<7x8xf32>
    %38 = math.exp %37 : vector<7x8xf32>
    %cst_18 = arith.constant dense<0.000000e+00> : vector<7xf32>
    %39 = vector.multi_reduction <add>, %38, %cst_18 [1] : vector<7x8xf32> to vector<7xf32>
    %40 = vector.shape_cast %39 : vector<7xf32> to vector<7x1xf32>
    %41 = tpu.reciprocal %40 {approx = true} : vector<7x1xf32> -> vector<7x1xf32>
    %42 = vector.broadcast %41 : vector<7x1xf32> to vector<7x8xf32>
    %43 = arith.mulf %38, %42 : vector<7x8xf32>
    %44 = arith.truncf %43 : vector<7x8xf32> to vector<7x8xbf16>
    %cst_19 = arith.constant dense<0.000000e+00> : vector<7x32xf32>
    %45 = tpu.matmul %44, %29, %cst_19 {dimension_numbers = #tpu.dot_dimension_numbers<[1], [0], [0], [1], [0, 0, 1, 1], [], []>} : vector<7x8xbf16>, vector<8x32xbf16>, vector<7x32xf32> -> vector<7x32xf32>
    %46 = vector.extract_strided_slice %1 {offsets = [0, 64], sizes = [7, 32], strides = [1, 1]} : vector<7x128xbf16> to vector<7x32xbf16>
    %47 = vector.extract_strided_slice %3 {offsets = [0, 64], sizes = [8, 32], strides = [1, 1]} : vector<8x128xbf16> to vector<8x32xbf16>
    %48 = vector.extract_strided_slice %5 {offsets = [0, 64], sizes = [8, 32], strides = [1, 1]} : vector<8x128xbf16> to vector<8x32xbf16>
    %cst_20 = arith.constant dense<0.000000e+00> : vector<7x8xf32>
    %49 = tpu.matmul %46, %47, %cst_20 {dimension_numbers = #tpu.dot_dimension_numbers<[1], [1], [0], [0], [0, 0, 1, 0], [], []>} : vector<7x32xbf16>, vector<8x32xbf16>, vector<7x8xf32> -> vector<7x8xf32>
    %cst_21 = arith.constant 0.176776692 : f32
    %50 = vector.broadcast %cst_21 : f32 to vector<7x8xf32>
    %51 = arith.mulf %49, %50 : vector<7x8xf32>
    %52 = arith.addf %51, %7 : vector<7x8xf32>
    %cst_22 = arith.constant dense<0xFF800000> : vector<7xf32>
    %53 = vector.multi_reduction <maximumf>, %52, %cst_22 [1] : vector<7x8xf32> to vector<7xf32>
    %54 = vector.shape_cast %53 : vector<7xf32> to vector<7x1xf32>
    %55 = vector.broadcast %54 : vector<7x1xf32> to vector<7x8xf32>
    %56 = arith.subf %52, %55 : vector<7x8xf32>
    %57 = math.exp %56 : vector<7x8xf32>
    %cst_23 = arith.constant dense<0.000000e+00> : vector<7xf32>
    %58 = vector.multi_reduction <add>, %57, %cst_23 [1] : vector<7x8xf32> to vector<7xf32>
    %59 = vector.shape_cast %58 : vector<7xf32> to vector<7x1xf32>
    %60 = tpu.reciprocal %59 {approx = true} : vector<7x1xf32> -> vector<7x1xf32>
    %61 = vector.broadcast %60 : vector<7x1xf32> to vector<7x8xf32>
    %62 = arith.mulf %57, %61 : vector<7x8xf32>
    %63 = arith.truncf %62 : vector<7x8xf32> to vector<7x8xbf16>
    %cst_24 = arith.constant dense<0.000000e+00> : vector<7x32xf32>
    %64 = tpu.matmul %63, %48, %cst_24 {dimension_numbers = #tpu.dot_dimension_numbers<[1], [0], [0], [1], [0, 0, 1, 1], [], []>} : vector<7x8xbf16>, vector<8x32xbf16>, vector<7x32xf32> -> vector<7x32xf32>
    %65 = vector.extract_strided_slice %1 {offsets = [0, 96], sizes = [7, 32], strides = [1, 1]} : vector<7x128xbf16> to vector<7x32xbf16>
    %66 = vector.extract_strided_slice %3 {offsets = [0, 96], sizes = [8, 32], strides = [1, 1]} : vector<8x128xbf16> to vector<8x32xbf16>
    %67 = vector.extract_strided_slice %5 {offsets = [0, 96], sizes = [8, 32], strides = [1, 1]} : vector<8x128xbf16> to vector<8x32xbf16>
    %cst_25 = arith.constant dense<0.000000e+00> : vector<7x8xf32>
    %68 = tpu.matmul %65, %66, %cst_25 {dimension_numbers = #tpu.dot_dimension_numbers<[1], [1], [0], [0], [0, 0, 1, 0], [], []>} : vector<7x32xbf16>, vector<8x32xbf16>, vector<7x8xf32> -> vector<7x8xf32>
    %cst_26 = arith.constant 0.176776692 : f32
    %69 = vector.broadcast %cst_26 : f32 to vector<7x8xf32>
    %70 = arith.mulf %68, %69 : vector<7x8xf32>
    %71 = arith.addf %70, %7 : vector<7x8xf32>
    %cst_27 = arith.constant dense<0xFF800000> : vector<7xf32>
    %72 = vector.multi_reduction <maximumf>, %71, %cst_27 [1] : vector<7x8xf32> to vector<7xf32>
    %73 = vector.shape_cast %72 : vector<7xf32> to vector<7x1xf32>
    %74 = vector.broadcast %73 : vector<7x1xf32> to vector<7x8xf32>
    %75 = arith.subf %71, %74 : vector<7x8xf32>
    %76 = math.exp %75 : vector<7x8xf32>
    %cst_28 = arith.constant dense<0.000000e+00> : vector<7xf32>
    %77 = vector.multi_reduction <add>, %76, %cst_28 [1] : vector<7x8xf32> to vector<7xf32>
    %78 = vector.shape_cast %77 : vector<7xf32> to vector<7x1xf32>
    %79 = tpu.reciprocal %78 {approx = true} : vector<7x1xf32> -> vector<7x1xf32>
    %80 = vector.broadcast %79 : vector<7x1xf32> to vector<7x8xf32>
    %81 = arith.mulf %76, %80 : vector<7x8xf32>
    %82 = arith.truncf %81 : vector<7x8xf32> to vector<7x8xbf16>
    %cst_29 = arith.constant dense<0.000000e+00> : vector<7x32xf32>
    %83 = tpu.matmul %82, %67, %cst_29 {dimension_numbers = #tpu.dot_dimension_numbers<[1], [0], [0], [1], [0, 0, 1, 1], [], []>} : vector<7x8xbf16>, vector<8x32xbf16>, vector<7x32xf32> -> vector<7x32xf32>
    %84 = tpu.concatenate %26, %45, %64, %83 in 1 : vector<7x32xf32>, vector<7x32xf32>, vector<7x32xf32>, vector<7x32xf32> -> vector<7x128xf32>
    %85 = arith.truncf %84 : vector<7x128xf32> to vector<7x128xbf16>
    %c0_30 = arith.constant 0 : index
    %c0_31 = arith.constant 0 : index
    %c0_32 = arith.constant 0 : index
    %86 = vector.load %arg5[%c0_30, %c0_31, %c0_32] : memref<1x7x128xbf16, #tpu.memory_space<vmem>>, vector<1x7x128xbf16>
    %87 = vector.shape_cast %86 : vector<1x7x128xbf16> to vector<7x128xbf16>
    %88 = vector.shape_cast %85 : vector<7x128xbf16> to vector<1x7x128xbf16>
    tpu.vector_store %arg5[%c0_30, %c0_31, %c0_32], %88 {strides = array<i32>} : memref<1x7x128xbf16, #tpu.memory_space<vmem>>, vector<1x7x128xbf16>,
    return
  }
  func.func @transform_0(%arg0: i32) -> (i32, i32, i32) {
    %c0_i32 = arith.constant 0 : i32
    %c0_i32_0 = arith.constant 0 : i32
    %c0_i32_1 = arith.constant 0 : i32
    return %arg0, %c0_i32, %c0_i32_0 : i32, i32, i32
  }
  func.func @transform_1(%arg0: i32) -> (i32, i32, i32) {
    %c0_i32 = arith.constant 0 : i32
    %c0_i32_0 = arith.constant 0 : i32
    %c0_i32_1 = arith.constant 0 : i32
    return %arg0, %c0_i32, %c0_i32_0 : i32, i32, i32
  }
  func.func @transform_2(%arg0: i32) -> (i32, i32, i32) {
    %c0_i32 = arith.constant 0 : i32
    %c1_i32 = arith.constant 1 : i32
    %c0_i32_0 = arith.constant 0 : i32
    return %arg0, %c0_i32, %c1_i32 : i32, i32, i32
  }
  func.func @transform_3(%arg0: i32) -> (i32, i32, i32) {
    %c0_i32 = arith.constant 0 : i32
    %c0_i32_0 = arith.constant 0 : i32
    %c0_i32_1 = arith.constant 0 : i32
    return %arg0, %c0_i32, %c0_i32_0 : i32, i32, i32
  }
  func.func @transform_4(%arg0: i32) -> (i32, i32, i32) {
    %c0_i32 = arith.constant 0 : i32
    %c0_i32_0 = arith.constant 0 : i32
    %c0_i32_1 = arith.constant 0 : i32
    return %arg0, %c0_i32, %c0_i32_0 : i32, i32, i32
  }
}

module attributes {stable_mosaic.version = 11 : i64} {
  func.func @_linear_kernel(%arg0: i32, %arg1: memref<16x128xbf16, #tpu.memory_space<vmem>>, %arg2: memref<128x20xbf16, #tpu.memory_space<vmem>>, %arg3: memref<1x20xf32, #tpu.memory_space<vmem>>, %arg4: memref<16x20xf32, #tpu.memory_space<vmem>>) attributes {dimension_semantics = [#tpu.dimension_semantics<parallel>], iteration_bounds = array<i64: 1>, scalar_prefetch = 0 : i64, scratch_operands = 0 : i64, tpu.core_type = #tpu.core_type<tc>, window_params = [{transform_indices = @transform_0, window_bounds = array<i64: 16, 128>}, {pipeline_mode = #tpu.pipeline_mode<synchronous>, transform_indices = @transform_1, window_bounds = array<i64: 128, 20>}, {pipeline_mode = #tpu.pipeline_mode<synchronous>, transform_indices = @transform_2, window_bounds = array<i64: 1, 20>}, {transform_indices = @transform_3, window_bounds = array<i64: 16, 20>}]} {
    %c0 = arith.constant 0 : index
    %c0_0 = arith.constant 0 : index
    %0 = vector.load %arg1[%c0, %c0_0] : memref<16x128xbf16, #tpu.memory_space<vmem>>, vector<16x128xbf16>
    %c0_1 = arith.constant 0 : index
    %c0_2 = arith.constant 0 : index
    %1 = vector.load %arg2[%c0_1, %c0_2] : memref<128x20xbf16, #tpu.memory_space<vmem>>, vector<128x20xbf16>
    %cst = arith.constant dense<0.000000e+00> : vector<16x20xf32>
    %2 = tpu.matmul %0, %1, %cst {dimension_numbers = #tpu.dot_dimension_numbers<[1], [0], [0], [1], [0, 0, 1, 1], [], []>} : vector<16x128xbf16>, vector<128x20xbf16>, vector<16x20xf32> -> vector<16x20xf32>
    %c0_3 = arith.constant 0 : index
    %c0_4 = arith.constant 0 : index
    %3 = vector.load %arg3[%c0_3, %c0_4] : memref<1x20xf32, #tpu.memory_space<vmem>>, vector<1x20xf32>
    %4 = vector.broadcast %3 : vector<1x20xf32> to vector<16x20xf32>
    %5 = arith.addf %2, %4 : vector<16x20xf32>
    %c0_5 = arith.constant 0 : index
    %c0_6 = arith.constant 0 : index
    %6 = vector.load %arg4[%c0_5, %c0_6] : memref<16x20xf32, #tpu.memory_space<vmem>>, vector<16x20xf32>
    tpu.vector_store %arg4[%c0_5, %c0_6], %5 {strides = array<i32>} : memref<16x20xf32, #tpu.memory_space<vmem>>, vector<16x20xf32>,
    return
  }
  func.func @transform_0(%arg0: i32) -> (i32, i32) {
    %c0_i32 = arith.constant 0 : i32
    %c0_i32_0 = arith.constant 0 : i32
    return %arg0, %c0_i32 : i32, i32
  }
  func.func @transform_1(%arg0: i32) -> (i32, i32) {
    %c0_i32 = arith.constant 0 : i32
    %c0_i32_0 = arith.constant 0 : i32
    %c0_i32_1 = arith.constant 0 : i32
    return %c0_i32, %c0_i32_0 : i32, i32
  }
  func.func @transform_2(%arg0: i32) -> (i32, i32) {
    %c0_i32 = arith.constant 0 : i32
    %c0_i32_0 = arith.constant 0 : i32
    %c0_i32_1 = arith.constant 0 : i32
    return %c0_i32, %c0_i32_0 : i32, i32
  }
  func.func @transform_3(%arg0: i32) -> (i32, i32) {
    %c0_i32 = arith.constant 0 : i32
    %c0_i32_0 = arith.constant 0 : i32
    return %arg0, %c0_i32 : i32, i32
  }
}

</mosaic_0001>

<llo_original>
// kernel: transformer_forward.25
$region0: #{transformer_forward.25}
  #allocation0 [shape = 'u32[]', space=smem, size = 0x4, offset = 0x4, fixed_abs, tag = 'smem constant byte address 0x4 - core index']
  #allocation1 [shape = 'u32[144,128]{1,0:T(1,128)}', space=vmem, size = 0x12000, scoped, tag = 'internal scratch']
  %s0 = inlined_call_operand.vmem [shape: bf16[16,128], index: 0, kind: input, shape index: {}]
  %s1 = inlined_call_operand.vmem [shape: bf16[128,384], index: 1, kind: input, shape index: {}]
  %s2 = inlined_call_operand.vmem [shape: f32[1,384], index: 2, kind: input, shape index: {}]
  %s3 = inlined_call_operand.vmem [shape: bf16[16,384], index: 3, kind: output, shape index: {}]
  %s4 = sld [smem:[#allocation0]]
  $region22: #{transformer_forward.25} parent=0
    _
  %s6 = ssub.s32 1, %s4
  %s7 = scalar_select 0, %s6, %s4
  // Predicated region
  $region2: #{transformer_forward.25} parent=0 // pred_check
    _
  $region3: #{transformer_forward.25} parent=0 // pred_check_branch
    %9 = sbr.rel (0) target = $region5
  $region4: #{transformer_forward.25} parent=0 // pred_region
    _
  $region5: #{transformer_forward.25} parent=0 // pred_fallthru
    _
  // Predicated region
  $region6: #{transformer_forward.25} parent=0 // pred_check
    _
  $region7: #{transformer_forward.25} parent=0 // pred_check_branch
    %11 = sbr.rel (0) target = $region9
  $region8: #{transformer_forward.25} parent=0 // pred_region
    _
  $region9: #{transformer_forward.25} parent=0 // pred_fallthru
    _
  // Predicated region
  $region10: #{transformer_forward.25} parent=0 // pred_check
    _
  $region11: #{transformer_forward.25} parent=0 // pred_check_branch
    %13 = sbr.rel (0) target = $region13
  $region12: #{transformer_forward.25} parent=0 // pred_region
    _
  $region13: #{transformer_forward.25} parent=0 // pred_fallthru
    _
  %v15 = vld [vmem:[%s0] sm:$0xf]
  %v16 = vld [vmem:[%s0 + $0x4] sm:$0xf]
  %v17 = vld [vmem:[%s1] sm:$0xff]
  %v18 = vld [vmem:[%s1 + $0x8] sm:$0xf]
  %v19 = vld [vmem:[%s1 + $0xc] sm:$0xff]
  %v20 = vld [vmem:[%s1 + $0x14] sm:$0xf]
  %v21 = vld [vmem:[%s1 + $0x18] sm:$0xff]
  %v22 = vld [vmem:[%s1 + $0x20] sm:$0xf]
  %v23 = vld [vmem:[%s1 + $0x24] sm:$0xff]
  %v24 = vld [vmem:[%s1 + $0x2c] sm:$0xf]
  %v25 = vld [vmem:[%s1 + $0x30] sm:$0xff]
  %v26 = vld [vmem:[%s1 + $0x38] sm:$0xf]
  %v27 = vld [vmem:[%s1 + $0x3c] sm:$0xff]
  %v28 = vld [vmem:[%s1 + $0x44] sm:$0xf]
  %v29 = vld [vmem:[%s1 + $0x48] sm:$0xff]
  %v30 = vld [vmem:[%s1 + $0x50] sm:$0xf]
  %v31 = vld [vmem:[%s1 + $0x54] sm:$0xff]
  %v32 = vld [vmem:[%s1 + $0x5c] sm:$0xf]
  %v33 = vld [vmem:[%s1 + $0x60] sm:$0xff]
  %v34 = vld [vmem:[%s1 + $0x68] sm:$0xf]
  %v35 = vld [vmem:[%s1 + $0x6c] sm:$0xff]
  %v36 = vld [vmem:[%s1 + $0x74] sm:$0xf]
  %v37 = vld [vmem:[%s1 + $0x78] sm:$0xff]
  %v38 = vld [vmem:[%s1 + $0x80] sm:$0xf]
  %v39 = vld [vmem:[%s1 + $0x84] sm:$0xff]
  %v40 = vld [vmem:[%s1 + $0x8c] sm:$0xf]
  %v41 = vld [vmem:[%s1 + $0x90] sm:$0xff]
  %v42 = vld [vmem:[%s1 + $0x98] sm:$0xf]
  %v43 = vld [vmem:[%s1 + $0x9c] sm:$0xff]
  %v44 = vld [vmem:[%s1 + $0xa4] sm:$0xf]
  %v45 = vld [vmem:[%s1 + $0xa8] sm:$0xff]
  %v46 = vld [vmem:[%s1 + $0xb0] sm:$0xf]
  %v47 = vld [vmem:[%s1 + $0xb4] sm:$0xff]
  %v48 = vld [vmem:[%s1 + $0xbc] sm:$0xf]
  %v49 = vld [vmem:[%s2] sm:$0x7]
  %v51 = vlaneseq
  %v52 = vshrl.u32 %v51, 7
  %v53 = vsub.s32 0, %v52
  %v54 = vrot.slane %v49, %v53
  %v55 = vlaneseq
  %v56 = vshrl.u32 %v55, 7
  %v57 = vsub.s32 1, %v56
  %v58 = vrot.slane %v49, %v57
  %v59 = vlaneseq
  %v60 = vshrl.u32 %v59, 7
  %v61 = vsub.s32 2, %v60
  %v62 = vrot.slane %v49, %v61
  %v68 = vunpack.c.l.b16 %v15
  %v69 = vunpack.c.l.b16 %v16
  %v70 = vpack.c.b16 %v69, %v68
  %v104 = vunpack.c.l.b16 %v17
  %v105 = vunpack.c.h.b16 %v17
  %v106 = vunpack.c.l.b16 %v18
  %v107 = vunpack.c.l.b16 %v19
  %v108 = vunpack.c.h.b16 %v19
  %v109 = vunpack.c.l.b16 %v20
  %v110 = vunpack.c.l.b16 %v21
  %v111 = vunpack.c.h.b16 %v21
  %v112 = vunpack.c.l.b16 %v22
  %v113 = vunpack.c.l.b16 %v23
  %v114 = vunpack.c.h.b16 %v23
  %v115 = vunpack.c.l.b16 %v24
  %v116 = vunpack.c.l.b16 %v25
  %v117 = vunpack.c.h.b16 %v25
  %v118 = vunpack.c.l.b16 %v26
  %v119 = vunpack.c.l.b16 %v27
  %v120 = vunpack.c.h.b16 %v27
  %v121 = vunpack.c.l.b16 %v28
  %v122 = vunpack.c.l.b16 %v29
  %v123 = vunpack.c.h.b16 %v29
  %v124 = vunpack.c.l.b16 %v30
  %v125 = vunpack.c.l.b16 %v31
  %v126 = vunpack.c.h.b16 %v31
  %v127 = vunpack.c.l.b16 %v32
  %v128 = vunpack.c.l.b16 %v33
  %v129 = vunpack.c.h.b16 %v33
  %v130 = vunpack.c.l.b16 %v34
  %v131 = vunpack.c.l.b16 %v35
  %v132 = vunpack.c.h.b16 %v35
  %v133 = vunpack.c.l.b16 %v36
  %v134 = vunpack.c.l.b16 %v37
  %v135 = vunpack.c.h.b16 %v37
  %v136 = vunpack.c.l.b16 %v38
  %v137 = vunpack.c.l.b16 %v39
  %v138 = vunpack.c.h.b16 %v39
  %v139 = vunpack.c.l.b16 %v40
  %v140 = vunpack.c.l.b16 %v41
  %v141 = vunpack.c.h.b16 %v41
  %v142 = vunpack.c.l.b16 %v42
  %v143 = vunpack.c.l.b16 %v43
  %v144 = vunpack.c.h.b16 %v43
  %v145 = vunpack.c.l.b16 %v44
  %v146 = vunpack.c.l.b16 %v45
  %v147 = vunpack.c.h.b16 %v45
  %v148 = vunpack.c.l.b16 %v46
  %v149 = vunpack.c.l.b16 %v47
  %v150 = vunpack.c.h.b16 %v47
  %v151 = vunpack.c.l.b16 %v48
  %v152 = vpack.c.b16 %v107, %v104
  %v153 = vpack.c.b16 %v108, %v105
  %v154 = vpack.c.b16 %v109, %v106
  %v155 = vpack.c.b16 %v113, %v110
  %v156 = vpack.c.b16 %v114, %v111
  %v157 = vpack.c.b16 %v115, %v112
  %v158 = vpack.c.b16 %v119, %v116
  %v159 = vpack.c.b16 %v120, %v117
  %v160 = vpack.c.b16 %v121, %v118
  %v161 = vpack.c.b16 %v125, %v122
  %v162 = vpack.c.b16 %v126, %v123
  %v163 = vpack.c.b16 %v127, %v124
  %v164 = vpack.c.b16 %v131, %v128
  %v165 = vpack.c.b16 %v132, %v129
  %v166 = vpack.c.b16 %v133, %v130
  %v167 = vpack.c.b16 %v137, %v134
  %v168 = vpack.c.b16 %v138, %v135
  %v169 = vpack.c.b16 %v139, %v136
  %v170 = vpack.c.b16 %v143, %v140
  %v171 = vpack.c.b16 %v144, %v141
  %v172 = vpack.c.b16 %v145, %v142
  %v173 = vpack.c.b16 %v149, %v146
  %v174 = vpack.c.b16 %v150, %v147
  %v175 = vpack.c.b16 %v151, %v148
  %200 = vmatprep.subr.bf16.mxu0 %v153
  %201 = vmatpush1.bf16.msra.mxu0 %v152
  %202 = vmatprep.subr.bf16.mxu0 %v156
  %203 = vmatpush1.bf16.msra.mxu0 %v155
  %204 = vmatprep.subr.bf16.mxu0 %v159
  %205 = vmatpush1.bf16.msra.mxu0 %v158
  %206 = vmatprep.subr.bf16.mxu0 %v162
  %207 = vmatpush1.bf16.msra.mxu0 %v161
  %208 = vmatprep.subr.bf16.mxu0 %v165
  %209 = vmatpush1.bf16.msra.mxu0 %v164
  %210 = vmatprep.subr.bf16.mxu0 %v168
  %211 = vmatpush1.bf16.msra.mxu0 %v167
  %212 = vmatprep.subr.bf16.mxu0 %v171
  %213 = vmatpush1.bf16.msra.mxu0 %v170
  %214 = vmatprep.subr.bf16.mxu0 %v174
  %215 = vmatpush1.bf16.msra.mxu0 %v173
  %216 = vmatprep.subr.bf16.mxu0 0
  %217 = vmatpush1.bf16.msra.mxu0 0
  %218 = vmatprep.subr.bf16.mxu0 0
  %219 = vmatpush1.bf16.msra.mxu0 0
  %220 = vmatprep.subr.bf16.mxu0 0
  %221 = vmatpush1.bf16.msra.mxu0 0
  %222 = vmatprep.subr.bf16.mxu0 0
  %223 = vmatpush1.bf16.msra.mxu0 0
  %224 = vmatprep.subr.bf16.mxu0 0
  %225 = vmatpush1.bf16.msra.mxu0 0
  %226 = vmatprep.subr.bf16.mxu0 0
  %227 = vmatpush1.bf16.msra.mxu0 0
  %228 = vmatprep.subr.bf16.mxu0 0
  %229 = vmatpush1.bf16.msra.mxu0 0
  %230 = vmatprep.subr.bf16.mxu0 0
  %231 = vmatpush1.bf16.msra.mxu0 0
  %232 = vmatprep.mubr.bf16.mxu0 0
  %233 = vmatmul.mubr.bf16.gmra.mrb[0].mxu0 %v70
  %v234 = vpop.f32.mrb[0].mxu0
  %v235 = vadd.f32 %v54, %v234
  %v236 = vpop.f32.mrb[0].mxu0
  %v237 = vadd.f32 %v58, %v236
  %v238 = vpop.f32.mrb[0].mxu0
  %v239 = vadd.f32 %v54, %v238
  %v240 = vpop.f32.mrb[0].mxu0
  %v241 = vadd.f32 %v58, %v240
  %242 = vdwg.mxu0
  %243 = vmatprep.subr.bf16.mxu0 0
  %244 = vmatpush1.bf16.msra.mxu0 %v154
  %245 = vmatprep.subr.bf16.mxu0 0
  %246 = vmatpush1.bf16.msra.mxu0 %v157
  %247 = vmatprep.subr.bf16.mxu0 0
  %248 = vmatpush1.bf16.msra.mxu0 %v160
  %249 = vmatprep.subr.bf16.mxu0 0
  %250 = vmatpush1.bf16.msra.mxu0 %v163
  %251 = vmatprep.subr.bf16.mxu0 0
  %252 = vmatpush1.bf16.msra.mxu0 %v166
  %253 = vmatprep.subr.bf16.mxu0 0
  %254 = vmatpush1.bf16.msra.mxu0 %v169
  %255 = vmatprep.subr.bf16.mxu0 0
  %256 = vmatpush1.bf16.msra.mxu0 %v172
  %257 = vmatprep.subr.bf16.mxu0 0
  %258 = vmatpush1.bf16.msra.mxu0 %v175
  %259 = vmatprep.subr.bf16.mxu0 0
  %260 = vmatpush1.bf16.msra.mxu0 0
  %261 = vmatprep.subr.bf16.mxu0 0
  %262 = vmatpush1.bf16.msra.mxu0 0
  %263 = vmatprep.subr.bf16.mxu0 0
  %264 = vmatpush1.bf16.msra.mxu0 0
  %265 = vmatprep.subr.bf16.mxu0 0
  %266 = vmatpush1.bf16.msra.mxu0 0
  %267 = vmatprep.subr.bf16.mxu0 0
  %268 = vmatpush1.bf16.msra.mxu0 0
  %269 = vmatprep.subr.bf16.mxu0 0
  %270 = vmatpush1.bf16.msra.mxu0 0
  %271 = vmatprep.subr.bf16.mxu0 0
  %272 = vmatpush1.bf16.msra.mxu0 0
  %273 = vmatprep.subr.bf16.mxu0 0
  %274 = vmatpush1.bf16.msra.mxu0 0
  %275 = vmatprep.mubr.bf16.mxu0 0
  %276 = vmatmul.mubr.bf16.gmra.mrb[0].mxu0 %v70
  %v277 = vpop.f32.mrb[0].mxu0
  %v278 = vadd.f32 %v62, %v277
  %v279 = vpop.f32.mrb[0].mxu0
  %v280 = vpop.f32.mrb[0].mxu0
  %v281 = vadd.f32 %v62, %v280
  %v282 = vpop.f32.mrb[0].mxu0
  %283 = vdwg.mxu0
  %v284 = vpack.c.bf16 %v239, %v235
  %v285 = vpack.c.bf16 %v241, %v237
  %v286 = vpack.c.bf16 %v281, %v278
  %v290 = vunpack.c.l.b16 %v284
  %v291 = vunpack.c.l.b16 %v285
  %v292 = vunpack.c.l.b16 %v286
  %v293 = vunpack.c.h.b16 %v284
  %v294 = vunpack.c.h.b16 %v285
  %v295 = vunpack.c.h.b16 %v286
  %v296 = vpack.c.b16 %v291, %v290
  %v297 = vpack.c.b16 %v292, %v292
  %v298 = vpack.c.b16 %v294, %v293
  %v299 = vpack.c.b16 %v295, %v295
  %304 = vst [vmem:[%s3] sm:$0xff] %v296
  %305 = vst [vmem:[%s3 + $0x8] sm:$0xf] %v297
  %306 = vst [vmem:[%s3 + $0xc] sm:$0xff] %v298
  %307 = vst [vmem:[%s3 + $0x14] sm:$0xf] %v299
  // Predicated region
  $region14: #{transformer_forward.25} parent=0 // pred_check
    _
  $region15: #{transformer_forward.25} parent=0 // pred_check_branch
    %309 = sbr.rel (0) target = $region17
  $region16: #{transformer_forward.25} parent=0 // pred_region
    _
  $region17: #{transformer_forward.25} parent=0 // pred_fallthru
    _
  // Predicated region
  $region18: #{transformer_forward.25} parent=0 // pred_check
    _
  $region19: #{transformer_forward.25} parent=0 // pred_check_branch
    %311 = sbr.rel (0) target = $region21
  $region20: #{transformer_forward.25} parent=0 // pred_region
    _
  $region21: #{transformer_forward.25} parent=0 // pred_fallthru
    _

// kernel: transformer_forward.27
$region0: #{transformer_forward.27}
  #allocation0 [shape = 'u32[]', space=smem, size = 0x4, offset = 0x4, fixed_abs, tag = 'smem constant byte address 0x4 - core index']
  #allocation1 [shape = 'u32[144,128]{1,0:T(1,128)}', space=vmem, size = 0x12000, scoped, tag = 'internal scratch']
  %s0 = inlined_call_operand.vmem [shape: bf16[16,128], index: 0, kind: input, shape index: {}]
  %s1 = inlined_call_operand.vmem [shape: bf16[128,128], index: 1, kind: input, shape index: {}]
  %s2 = inlined_call_operand.vmem [shape: f32[1,128], index: 2, kind: input, shape index: {}]
  %s3 = inlined_call_operand.vmem [shape: bf16[16,128], index: 3, kind: input, shape index: {}]
  %s4 = inlined_call_operand.vmem [shape: f32[1,128], index: 4, kind: input, shape index: {}]
  %s5 = inlined_call_operand.vmem [shape: f32[1,128], index: 5, kind: input, shape index: {}]
  %s6 = inlined_call_operand.vmem [shape: bf16[16,128], index: 6, kind: output, shape index: {}]
  %s7 = sld [smem:[#allocation0]]
  $region34: #{transformer_forward.27} parent=0
    _
  %s9 = ssub.s32 1, %s7
  %s10 = scalar_select 0, %s9, %s7
  // Predicated region
  $region2: #{transformer_forward.27} parent=0 // pred_check
    _
  $region3: #{transformer_forward.27} parent=0 // pred_check_branch
    %12 = sbr.rel (0) target = $region5
  $region4: #{transformer_forward.27} parent=0 // pred_region
    _
  $region5: #{transformer_forward.27} parent=0 // pred_fallthru
    _
  // Predicated region
  $region6: #{transformer_forward.27} parent=0 // pred_check
    _
  $region7: #{transformer_forward.27} parent=0 // pred_check_branch
    %14 = sbr.rel (0) target = $region9
  $region8: #{transformer_forward.27} parent=0 // pred_region
    _
  $region9: #{transformer_forward.27} parent=0 // pred_fallthru
    _
  // Predicated region
  $region10: #{transformer_forward.27} parent=0 // pred_check
    _
  $region11: #{transformer_forward.27} parent=0 // pred_check_branch
    %16 = sbr.rel (0) target = $region13
  $region12: #{transformer_forward.27} parent=0 // pred_region
    _
  $region13: #{transformer_forward.27} parent=0 // pred_fallthru
    _
  // Predicated region
  $region14: #{transformer_forward.27} parent=0 // pred_check
    _
  $region15: #{transformer_forward.27} parent=0 // pred_check_branch
    %18 = sbr.rel (0) target = $region17
  $region16: #{transformer_forward.27} parent=0 // pred_region
    _
  $region17: #{transformer_forward.27} parent=0 // pred_fallthru
    _
  // Predicated region
  $region18: #{transformer_forward.27} parent=0 // pred_check
    _
  $region19: #{transformer_forward.27} parent=0 // pred_check_branch
    %20 = sbr.rel (0) target = $region21
  $region20: #{transformer_forward.27} parent=0 // pred_region
    _
  $region21: #{transformer_forward.27} parent=0 // pred_fallthru
    _
  // Predicated region
  $region22: #{transformer_forward.27} parent=0 // pred_check
    _
  $region23: #{transformer_forward.27} parent=0 // pred_check_branch
    %22 = sbr.rel (0) target = $region25
  $region24: #{transformer_forward.27} parent=0 // pred_region
    _
  $region25: #{transformer_forward.27} parent=0 // pred_fallthru
    _
  %v24 = vld [vmem:[%s0] sm:$0xf]
  %v25 = vld [vmem:[%s0 + $0x4] sm:$0xf]
  %v26 = vld [vmem:[%s1] sm:$0xf]
  %v27 = vld [vmem:[%s1 + $0x4] sm:$0xf]
  %v28 = vld [vmem:[%s1 + $0x8] sm:$0xf]
  %v29 = vld [vmem:[%s1 + $0xc] sm:$0xf]
  %v30 = vld [vmem:[%s1 + $0x10] sm:$0xf]
  %v31 = vld [vmem:[%s1 + $0x14] sm:$0xf]
  %v32 = vld [vmem:[%s1 + $0x18] sm:$0xf]
  %v33 = vld [vmem:[%s1 + $0x1c] sm:$0xf]
  %v34 = vld [vmem:[%s1 + $0x20] sm:$0xf]
  %v35 = vld [vmem:[%s1 + $0x24] sm:$0xf]
  %v36 = vld [vmem:[%s1 + $0x28] sm:$0xf]
  %v37 = vld [vmem:[%s1 + $0x2c] sm:$0xf]
  %v38 = vld [vmem:[%s1 + $0x30] sm:$0xf]
  %v39 = vld [vmem:[%s1 + $0x34] sm:$0xf]
  %v40 = vld [vmem:[%s1 + $0x38] sm:$0xf]
  %v41 = vld [vmem:[%s1 + $0x3c] sm:$0xf]
  %v42 = vld [vmem:[%s2] sm:$0x1]
  %v44 = vlaneseq
  %v45 = vshrl.u32 %v44, 7
  %v46 = vsub.s32 0, %v45
  %v47 = vrot.slane %v42, %v46
  %v51 = vunpack.c.l.b16 %v24
  %v52 = vunpack.c.l.b16 %v25
  %v53 = vpack.c.b16 %v52, %v51
  %v71 = vunpack.c.l.b16 %v26
  %v72 = vunpack.c.l.b16 %v27
  %v73 = vunpack.c.l.b16 %v28
  %v74 = vunpack.c.l.b16 %v29
  %v75 = vunpack.c.l.b16 %v30
  %v76 = vunpack.c.l.b16 %v31
  %v77 = vunpack.c.l.b16 %v32
  %v78 = vunpack.c.l.b16 %v33
  %v79 = vunpack.c.l.b16 %v34
  %v80 = vunpack.c.l.b16 %v35
  %v81 = vunpack.c.l.b16 %v36
  %v82 = vunpack.c.l.b16 %v37
  %v83 = vunpack.c.l.b16 %v38
  %v84 = vunpack.c.l.b16 %v39
  %v85 = vunpack.c.l.b16 %v40
  %v86 = vunpack.c.l.b16 %v41
  %v87 = vpack.c.b16 %v72, %v71
  %v88 = vpack.c.b16 %v74, %v73
  %v89 = vpack.c.b16 %v76, %v75
  %v90 = vpack.c.b16 %v78, %v77
  %v91 = vpack.c.b16 %v80, %v79
  %v92 = vpack.c.b16 %v82, %v81
  %v93 = vpack.c.b16 %v84, %v83
  %v94 = vpack.c.b16 %v86, %v85
  %103 = vmatprep.subr.bf16.mxu0 0
  %104 = vmatpush1.bf16.msra.mxu0 %v87
  %105 = vmatprep.subr.bf16.mxu0 0
  %106 = vmatpush1.bf16.msra.mxu0 %v88
  %107 = vmatprep.subr.bf16.mxu0 0
  %108 = vmatpush1.bf16.msra.mxu0 %v89
  %109 = vmatprep.subr.bf16.mxu0 0
  %110 = vmatpush1.bf16.msra.mxu0 %v90
  %111 = vmatprep.subr.bf16.mxu0 0
  %112 = vmatpush1.bf16.msra.mxu0 %v91
  %113 = vmatprep.subr.bf16.mxu0 0
  %114 = vmatpush1.bf16.msra.mxu0 %v92
  %115 = vmatprep.subr.bf16.mxu0 0
  %116 = vmatpush1.bf16.msra.mxu0 %v93
  %117 = vmatprep.subr.bf16.mxu0 0
  %118 = vmatpush1.bf16.msra.mxu0 %v94
  %119 = vmatprep.subr.bf16.mxu0 0
  %120 = vmatpush1.bf16.msra.mxu0 0
  %121 = vmatprep.subr.bf16.mxu0 0
  %122 = vmatpush1.bf16.msra.mxu0 0
  %123 = vmatprep.subr.bf16.mxu0 0
  %124 = vmatpush1.bf16.msra.mxu0 0
  %125 = vmatprep.subr.bf16.mxu0 0
  %126 = vmatpush1.bf16.msra.mxu0 0
  %127 = vmatprep.subr.bf16.mxu0 0
  %128 = vmatpush1.bf16.msra.mxu0 0
  %129 = vmatprep.subr.bf16.mxu0 0
  %130 = vmatpush1.bf16.msra.mxu0 0
  %131 = vmatprep.subr.bf16.mxu0 0
  %132 = vmatpush1.bf16.msra.mxu0 0
  %133 = vmatprep.subr.bf16.mxu0 0
  %134 = vmatpush1.bf16.msra.mxu0 0
  %135 = vmatprep.mubr.bf16.mxu0 0
  %136 = vmatmul.mubr.bf16.gmra.mrb[0].mxu0 %v53
  %v137 = vpop.f32.mrb[0].mxu0
  %v138 = vadd.f32 %v47, %v137
  %v139 = vpop.f32.mrb[0].mxu0
  %v140 = vpop.f32.mrb[0].mxu0
  %v141 = vadd.f32 %v47, %v140
  %v142 = vpop.f32.mrb[0].mxu0
  %143 = vdwg.mxu0
  %v144 = vld [vmem:[%s3] sm:$0xf]
  %v145 = vld [vmem:[%s3 + $0x4] sm:$0xf]
  %v146 = vunpack.c.l.bf16 %v144
  %v147 = vunpack.c.l.bf16 %v145
  %v148 = vadd.f32 %v138, %v146
  %v149 = vadd.f32 %v141, %v147
  %150 = vadd.xlane.f32.xlu0 %v148
  %v151 = vpop.xlane.xlu0 %150
  %152 = vadd.xlane.f32.xlu0 %v149
  %v153 = vpop.xlane.xlu0 %152
  %v154 = vrcp.pop 128.0
  %v155 = vmul.f32 %v151, %v154
  %v156 = vmul.f32 %v153, %v154
  %v157 = vsub.f32 %v148, %v155
  %v158 = vsub.f32 %v149, %v156
  %v159 = vmul.f32 %v157, %v157
  %v160 = vmul.f32 %v158, %v158
  %161 = vadd.xlane.f32.xlu0 %v159
  %v162 = vpop.xlane.xlu0 %161
  %163 = vadd.xlane.f32.xlu0 %v160
  %v164 = vpop.xlane.xlu0 %163
  %v165 = vmul.f32 %v162, %v154
  %v166 = vmul.f32 %v164, %v154
  %v167 = vadd.f32 %v165, 1e-06
  %v168 = vadd.f32 %v166, 1e-06
  %v169 = vrsqrt.pop %v167
  %v170 = vrsqrt.pop %v168
  %v171 = vmul.f32 %v157, %v169
  %v172 = vmul.f32 %v158, %v170
  %v173 = vld [vmem:[%s4] sm:$0x1]
  %v175 = vlaneseq
  %v176 = vshrl.u32 %v175, 7
  %v177 = vsub.s32 0, %v176
  %v178 = vrot.slane %v173, %v177
  %v180 = vmul.f32 %v171, %v178
  %v181 = vmul.f32 %v172, %v178
  %v182 = vld [vmem:[%s5] sm:$0x1]
  %v184 = vlaneseq
  %v185 = vshrl.u32 %v184, 7
  %v186 = vsub.s32 0, %v185
  %v187 = vrot.slane %v182, %v186
  %v189 = vadd.f32 %v180, %v187
  %v190 = vadd.f32 %v181, %v187
  %v191 = vpack.c.bf16 %v190, %v189
  %v193 = vunpack.c.l.b16 %v191
  %v194 = vunpack.c.h.b16 %v191
  %v195 = vpack.c.b16 %v193, %v193
  %v196 = vpack.c.b16 %v194, %v194
  %199 = vst [vmem:[%s6] sm:$0xf] %v195
  %200 = vst [vmem:[%s6 + $0x4] sm:$0xf] %v196
  // Predicated region
  $region26: #{transformer_forward.27} parent=0 // pred_check
    _
  $region27: #{transformer_forward.27} parent=0 // pred_check_branch
    %202 = sbr.rel (0) target = $region29
  $region28: #{transformer_forward.27} parent=0 // pred_region
    _
  $region29: #{transformer_forward.27} parent=0 // pred_fallthru
    _
  // Predicated region
  $region30: #{transformer_forward.27} parent=0 // pred_check
    _
  $region31: #{transformer_forward.27} parent=0 // pred_check_branch
    %204 = sbr.rel (0) target = $region33
  $region32: #{transformer_forward.27} parent=0 // pred_region
    _
  $region33: #{transformer_forward.27} parent=0 // pred_fallthru
    _

// kernel: transformer_forward.28
$region0: #{transformer_forward.28}
  #allocation0 [shape = 'u32[]', space=smem, size = 0x4, offset = 0x4, fixed_abs, tag = 'smem constant byte address 0x4 - core index']
  #allocation1 [shape = 'u32[144,128]{1,0:T(1,128)}', space=vmem, size = 0x12000, scoped, tag = 'internal scratch']
  %s0 = inlined_call_operand.vmem [shape: bf16[16,128], index: 0, kind: input, shape index: {}]
  %s1 = inlined_call_operand.vmem [shape: bf16[128,256], index: 1, kind: input, shape index: {}]
  %s2 = inlined_call_operand.vmem [shape: f32[1,256], index: 2, kind: input, shape index: {}]
  %s3 = inlined_call_operand.vmem [shape: bf16[256,128], index: 3, kind: input, shape index: {}]
  %s4 = inlined_call_operand.vmem [shape: f32[1,128], index: 4, kind: input, shape index: {}]
  %s5 = inlined_call_operand.vmem [shape: f32[1,128], index: 5, kind: input, shape index: {}]
  %s6 = inlined_call_operand.vmem [shape: f32[1,128], index: 6, kind: input, shape index: {}]
  %s7 = inlined_call_operand.vmem [shape: bf16[16,128], index: 7, kind: output, shape index: {}]
  %s8 = sld [smem:[#allocation0]]
  $region38: #{transformer_forward.28} parent=0
    _
  %s10 = ssub.s32 1, %s8
  %s11 = scalar_select 0, %s10, %s8
  // Predicated region
  $region2: #{transformer_forward.28} parent=0 // pred_check
    _
  $region3: #{transformer_forward.28} parent=0 // pred_check_branch
    %13 = sbr.rel (0) target = $region5
  $region4: #{transformer_forward.28} parent=0 // pred_region
    _
  $region5: #{transformer_forward.28} parent=0 // pred_fallthru
    _
  // Predicated region
  $region6: #{transformer_forward.28} parent=0 // pred_check
    _
  $region7: #{transformer_forward.28} parent=0 // pred_check_branch
    %15 = sbr.rel (0) target = $region9
  $region8: #{transformer_forward.28} parent=0 // pred_region
    _
  $region9: #{transformer_forward.28} parent=0 // pred_fallthru
    _
  // Predicated region
  $region10: #{transformer_forward.28} parent=0 // pred_check
    _
  $region11: #{transformer_forward.28} parent=0 // pred_check_branch
    %17 = sbr.rel (0) target = $region13
  $region12: #{transformer_forward.28} parent=0 // pred_region
    _
  $region13: #{transformer_forward.28} parent=0 // pred_fallthru
    _
  // Predicated region
  $region14: #{transformer_forward.28} parent=0 // pred_check
    _
  $region15: #{transformer_forward.28} parent=0 // pred_check_branch
    %19 = sbr.rel (0) target = $region17
  $region16: #{transformer_forward.28} parent=0 // pred_region
    _
  $region17: #{transformer_forward.28} parent=0 // pred_fallthru
    _
  // Predicated region
  $region18: #{transformer_forward.28} parent=0 // pred_check
    _
  $region19: #{transformer_forward.28} parent=0 // pred_check_branch
    %21 = sbr.rel (0) target = $region21
  $region20: #{transformer_forward.28} parent=0 // pred_region
    _
  $region21: #{transformer_forward.28} parent=0 // pred_fallthru
    _
  // Predicated region
  $region22: #{transformer_forward.28} parent=0 // pred_check
    _
  $region23: #{transformer_forward.28} parent=0 // pred_check_branch
    %23 = sbr.rel (0) target = $region25
  $region24: #{transformer_forward.28} parent=0 // pred_region
    _
  $region25: #{transformer_forward.28} parent=0 // pred_fallthru
    _
  // Predicated region
  $region26: #{transformer_forward.28} parent=0 // pred_check
    _
  $region27: #{transformer_forward.28} parent=0 // pred_check_branch
    %25 = sbr.rel (0) target = $region29
  $region28: #{transformer_forward.28} parent=0 // pred_region
    _
  $region29: #{transformer_forward.28} parent=0 // pred_fallthru
    _
  %v27 = vld [vmem:[%s0] sm:$0xf]
  %v28 = vld [vmem:[%s0 + $0x4] sm:$0xf]
  %v29 = vld [vmem:[%s1] sm:$0xff]
  %v30 = vld [vmem:[%s1 + $0x8] sm:$0xff]
  %v31 = vld [vmem:[%s1 + $0x10] sm:$0xff]
  %v32 = vld [vmem:[%s1 + $0x18] sm:$0xff]
  %v33 = vld [vmem:[%s1 + $0x20] sm:$0xff]
  %v34 = vld [vmem:[%s1 + $0x28] sm:$0xff]
  %v35 = vld [vmem:[%s1 + $0x30] sm:$0xff]
  %v36 = vld [vmem:[%s1 + $0x38] sm:$0xff]
  %v37 = vld [vmem:[%s1 + $0x40] sm:$0xff]
  %v38 = vld [vmem:[%s1 + $0x48] sm:$0xff]
  %v39 = vld [vmem:[%s1 + $0x50] sm:$0xff]
  %v40 = vld [vmem:[%s1 + $0x58] sm:$0xff]
  %v41 = vld [vmem:[%s1 + $0x60] sm:$0xff]
  %v42 = vld [vmem:[%s1 + $0x68] sm:$0xff]
  %v43 = vld [vmem:[%s1 + $0x70] sm:$0xff]
  %v44 = vld [vmem:[%s1 + $0x78] sm:$0xff]
  %v45 = vld [vmem:[%s2] sm:$0x3]
  %v47 = vlaneseq
  %v48 = vshrl.u32 %v47, 7
  %v49 = vsub.s32 0, %v48
  %v50 = vrot.slane %v45, %v49
  %v51 = vlaneseq
  %v52 = vshrl.u32 %v51, 7
  %v53 = vsub.s32 1, %v52
  %v54 = vrot.slane %v45, %v53
  %v59 = vunpack.c.l.b16 %v27
  %v60 = vunpack.c.l.b16 %v28
  %v61 = vpack.c.b16 %v60, %v59
  %v79 = vunpack.c.l.b16 %v29
  %v80 = vunpack.c.h.b16 %v29
  %v81 = vunpack.c.l.b16 %v30
  %v82 = vunpack.c.h.b16 %v30
  %v83 = vunpack.c.l.b16 %v31
  %v84 = vunpack.c.h.b16 %v31
  %v85 = vunpack.c.l.b16 %v32
  %v86 = vunpack.c.h.b16 %v32
  %v87 = vunpack.c.l.b16 %v33
  %v88 = vunpack.c.h.b16 %v33
  %v89 = vunpack.c.l.b16 %v34
  %v90 = vunpack.c.h.b16 %v34
  %v91 = vunpack.c.l.b16 %v35
  %v92 = vunpack.c.h.b16 %v35
  %v93 = vunpack.c.l.b16 %v36
  %v94 = vunpack.c.h.b16 %v36
  %v95 = vunpack.c.l.b16 %v37
  %v96 = vunpack.c.h.b16 %v37
  %v97 = vunpack.c.l.b16 %v38
  %v98 = vunpack.c.h.b16 %v38
  %v99 = vunpack.c.l.b16 %v39
  %v100 = vunpack.c.h.b16 %v39
  %v101 = vunpack.c.l.b16 %v40
  %v102 = vunpack.c.h.b16 %v40
  %v103 = vunpack.c.l.b16 %v41
  %v104 = vunpack.c.h.b16 %v41
  %v105 = vunpack.c.l.b16 %v42
  %v106 = vunpack.c.h.b16 %v42
  %v107 = vunpack.c.l.b16 %v43
  %v108 = vunpack.c.h.b16 %v43
  %v109 = vunpack.c.l.b16 %v44
  %v110 = vunpack.c.h.b16 %v44
  %v111 = vpack.c.b16 %v81, %v79
  %v112 = vpack.c.b16 %v82, %v80
  %v113 = vpack.c.b16 %v85, %v83
  %v114 = vpack.c.b16 %v86, %v84
  %v115 = vpack.c.b16 %v89, %v87
  %v116 = vpack.c.b16 %v90, %v88
  %v117 = vpack.c.b16 %v93, %v91
  %v118 = vpack.c.b16 %v94, %v92
  %v119 = vpack.c.b16 %v97, %v95
  %v120 = vpack.c.b16 %v98, %v96
  %v121 = vpack.c.b16 %v101, %v99
  %v122 = vpack.c.b16 %v102, %v100
  %v123 = vpack.c.b16 %v105, %v103
  %v124 = vpack.c.b16 %v106, %v104
  %v125 = vpack.c.b16 %v109, %v107
  %v126 = vpack.c.b16 %v110, %v108
  %143 = vmatprep.subr.bf16.mxu0 %v112
  %144 = vmatpush1.bf16.msra.mxu0 %v111
  %145 = vmatprep.subr.bf16.mxu0 %v114
  %146 = vmatpush1.bf16.msra.mxu0 %v113
  %147 = vmatprep.subr.bf16.mxu0 %v116
  %148 = vmatpush1.bf16.msra.mxu0 %v115
  %149 = vmatprep.subr.bf16.mxu0 %v118
  %150 = vmatpush1.bf16.msra.mxu0 %v117
  %151 = vmatprep.subr.bf16.mxu0 %v120
  %152 = vmatpush1.bf16.msra.mxu0 %v119
  %153 = vmatprep.subr.bf16.mxu0 %v122
  %154 = vmatpush1.bf16.msra.mxu0 %v121
  %155 = vmatprep.subr.bf16.mxu0 %v124
  %156 = vmatpush1.bf16.msra.mxu0 %v123
  %157 = vmatprep.subr.bf16.mxu0 %v126
  %158 = vmatpush1.bf16.msra.mxu0 %v125
  %159 = vmatprep.subr.bf16.mxu0 0
  %160 = vmatpush1.bf16.msra.mxu0 0
  %161 = vmatprep.subr.bf16.mxu0 0
  %162 = vmatpush1.bf16.msra.mxu0 0
  %163 = vmatprep.subr.bf16.mxu0 0
  %164 = vmatpush1.bf16.msra.mxu0 0
  %165 = vmatprep.subr.bf16.mxu0 0
  %166 = vmatpush1.bf16.msra.mxu0 0
  %167 = vmatprep.subr.bf16.mxu0 0
  %168 = vmatpush1.bf16.msra.mxu0 0
  %169 = vmatprep.subr.bf16.mxu0 0
  %170 = vmatpush1.bf16.msra.mxu0 0
  %171 = vmatprep.subr.bf16.mxu0 0
  %172 = vmatpush1.bf16.msra.mxu0 0
  %173 = vmatprep.subr.bf16.mxu0 0
  %174 = vmatpush1.bf16.msra.mxu0 0
  %175 = vmatprep.mubr.bf16.mxu0 0
  %176 = vmatmul.mubr.bf16.gmra.mrb[0].mxu0 %v61
  %v177 = vpop.f32.mrb[0].mxu0
  %v178 = vadd.f32 %v50, %v177
  %v179 = vpop.f32.mrb[0].mxu0
  %v180 = vadd.f32 %v54, %v179
  %v181 = vpop.f32.mrb[0].mxu0
  %v182 = vadd.f32 %v50, %v181
  %v183 = vpop.f32.mrb[0].mxu0
  %v184 = vadd.f32 %v54, %v183
  %185 = vdwg.mxu0
  %v186 = vmax.f32 %v178, 0.0
  %v187 = vmax.f32 %v180, 0.0
  %v188 = vmax.f32 %v182, 0.0
  %v189 = vmax.f32 %v184, 0.0
  %v190 = vpack.c.bf16 %v188, %v186
  %v191 = vpack.c.bf16 %v189, %v187
  %v192 = vld [vmem:[%s3] sm:$0xf]
  %v193 = vld [vmem:[%s3 + $0x4] sm:$0xf]
  %v194 = vld [vmem:[%s3 + $0x8] sm:$0xf]
  %v195 = vld [vmem:[%s3 + $0xc] sm:$0xf]
  %v196 = vld [vmem:[%s3 + $0x10] sm:$0xf]
  %v197 = vld [vmem:[%s3 + $0x14] sm:$0xf]
  %v198 = vld [vmem:[%s3 + $0x18] sm:$0xf]
  %v199 = vld [vmem:[%s3 + $0x1c] sm:$0xf]
  %v200 = vld [vmem:[%s3 + $0x20] sm:$0xf]
  %v201 = vld [vmem:[%s3 + $0x24] sm:$0xf]
  %v202 = vld [vmem:[%s3 + $0x28] sm:$0xf]
  %v203 = vld [vmem:[%s3 + $0x2c] sm:$0xf]
  %v204 = vld [vmem:[%s3 + $0x30] sm:$0xf]
  %v205 = vld [vmem:[%s3 + $0x34] sm:$0xf]
  %v206 = vld [vmem:[%s3 + $0x38] sm:$0xf]
  %v207 = vld [vmem:[%s3 + $0x3c] sm:$0xf]
  %v208 = vld [vmem:[%s3 + $0x40] sm:$0xf]
  %v209 = vld [vmem:[%s3 + $0x44] sm:$0xf]
  %v210 = vld [vmem:[%s3 + $0x48] sm:$0xf]
  %v211 = vld [vmem:[%s3 + $0x4c] sm:$0xf]
  %v212 = vld [vmem:[%s3 + $0x50] sm:$0xf]
  %v213 = vld [vmem:[%s3 + $0x54] sm:$0xf]
  %v214 = vld [vmem:[%s3 + $0x58] sm:$0xf]
  %v215 = vld [vmem:[%s3 + $0x5c] sm:$0xf]
  %v216 = vld [vmem:[%s3 + $0x60] sm:$0xf]
  %v217 = vld [vmem:[%s3 + $0x64] sm:$0xf]
  %v218 = vld [vmem:[%s3 + $0x68] sm:$0xf]
  %v219 = vld [vmem:[%s3 + $0x6c] sm:$0xf]
  %v220 = vld [vmem:[%s3 + $0x70] sm:$0xf]
  %v221 = vld [vmem:[%s3 + $0x74] sm:$0xf]
  %v222 = vld [vmem:[%s3 + $0x78] sm:$0xf]
  %v223 = vld [vmem:[%s3 + $0x7c] sm:$0xf]
  %v224 = vld [vmem:[%s4] sm:$0x1]
  %v226 = vlaneseq
  %v227 = vshrl.u32 %v226, 7
  %v228 = vsub.s32 0, %v227
  %v229 = vrot.slane %v224, %v228
  %v263 = vunpack.c.l.b16 %v192
  %v264 = vunpack.c.l.b16 %v193
  %v265 = vunpack.c.l.b16 %v194
  %v266 = vunpack.c.l.b16 %v195
  %v267 = vunpack.c.l.b16 %v196
  %v268 = vunpack.c.l.b16 %v197
  %v269 = vunpack.c.l.b16 %v198
  %v270 = vunpack.c.l.b16 %v199
  %v271 = vunpack.c.l.b16 %v200
  %v272 = vunpack.c.l.b16 %v201
  %v273 = vunpack.c.l.b16 %v202
  %v274 = vunpack.c.l.b16 %v203
  %v275 = vunpack.c.l.b16 %v204
  %v276 = vunpack.c.l.b16 %v205
  %v277 = vunpack.c.l.b16 %v206
  %v278 = vunpack.c.l.b16 %v207
  %v279 = vunpack.c.l.b16 %v208
  %v280 = vunpack.c.l.b16 %v209
  %v281 = vunpack.c.l.b16 %v210
  %v282 = vunpack.c.l.b16 %v211
  %v283 = vunpack.c.l.b16 %v212
  %v284 = vunpack.c.l.b16 %v213
  %v285 = vunpack.c.l.b16 %v214
  %v286 = vunpack.c.l.b16 %v215
  %v287 = vunpack.c.l.b16 %v216
  %v288 = vunpack.c.l.b16 %v217
  %v289 = vunpack.c.l.b16 %v218
  %v290 = vunpack.c.l.b16 %v219
  %v291 = vunpack.c.l.b16 %v220
  %v292 = vunpack.c.l.b16 %v221
  %v293 = vunpack.c.l.b16 %v222
  %v294 = vunpack.c.l.b16 %v223
  %v295 = vpack.c.b16 %v264, %v263
  %v296 = vpack.c.b16 %v266, %v265
  %v297 = vpack.c.b16 %v268, %v267
  %v298 = vpack.c.b16 %v270, %v269
  %v299 = vpack.c.b16 %v272, %v271
  %v300 = vpack.c.b16 %v274, %v273
  %v301 = vpack.c.b16 %v276, %v275
  %v302 = vpack.c.b16 %v278, %v277
  %v303 = vpack.c.b16 %v280, %v279
  %v304 = vpack.c.b16 %v282, %v281
  %v305 = vpack.c.b16 %v284, %v283
  %v306 = vpack.c.b16 %v286, %v285
  %v307 = vpack.c.b16 %v288, %v287
  %v308 = vpack.c.b16 %v290, %v289
  %v309 = vpack.c.b16 %v292, %v291
  %v310 = vpack.c.b16 %v294, %v293
  %327 = vmatprep.subr.bf16.mxu0 0
  %328 = vmatpush1.bf16.msra.mxu0 %v295
  %329 = vmatprep.subr.bf16.mxu0 0
  %330 = vmatpush1.bf16.msra.mxu0 %v296
  %331 = vmatprep.subr.bf16.mxu0 0
  %332 = vmatpush1.bf16.msra.mxu0 %v297
  %333 = vmatprep.subr.bf16.mxu0 0
  %334 = vmatpush1.bf16.msra.mxu0 %v298
  %335 = vmatprep.subr.bf16.mxu0 0
  %336 = vmatpush1.bf16.msra.mxu0 %v299
  %337 = vmatprep.subr.bf16.mxu0 0
  %338 = vmatpush1.bf16.msra.mxu0 %v300
  %339 = vmatprep.subr.bf16.mxu0 0
  %340 = vmatpush1.bf16.msra.mxu0 %v301
  %341 = vmatprep.subr.bf16.mxu0 0
  %342 = vmatpush1.bf16.msra.mxu0 %v302
  %343 = vmatprep.subr.bf16.mxu0 0
  %344 = vmatpush1.bf16.msra.mxu0 %v303
  %345 = vmatprep.subr.bf16.mxu0 0
  %346 = vmatpush1.bf16.msra.mxu0 %v304
  %347 = vmatprep.subr.bf16.mxu0 0
  %348 = vmatpush1.bf16.msra.mxu0 %v305
  %349 = vmatprep.subr.bf16.mxu0 0
  %350 = vmatpush1.bf16.msra.mxu0 %v306
  %351 = vmatprep.subr.bf16.mxu0 0
  %352 = vmatpush1.bf16.msra.mxu0 %v307
  %353 = vmatprep.subr.bf16.mxu0 0
  %354 = vmatpush1.bf16.msra.mxu0 %v308
  %355 = vmatprep.subr.bf16.mxu0 0
  %356 = vmatpush1.bf16.msra.mxu0 %v309
  %357 = vmatprep.subr.bf16.mxu0 0
  %358 = vmatpush1.bf16.msra.mxu0 %v310
  %359 = vmatprep.mubr.bf16.mxu0 %v191
  %360 = vmatmul.mubr.bf16.gmra.mrb[0].mxu0 %v190
  %v361 = vpop.f32.mrb[0].mxu0
  %v362 = vadd.f32 %v229, %v361
  %v363 = vpop.f32.mrb[0].mxu0
  %v364 = vpop.f32.mrb[0].mxu0
  %v365 = vadd.f32 %v229, %v364
  %v366 = vpop.f32.mrb[0].mxu0
  %367 = vdwg.mxu0
  %v368 = vunpack.c.l.bf16 %v27
  %v369 = vunpack.c.l.bf16 %v28
  %v370 = vadd.f32 %v362, %v368
  %v371 = vadd.f32 %v365, %v369
  %372 = vadd.xlane.f32.xlu0 %v370
  %v373 = vpop.xlane.xlu0 %372
  %374 = vadd.xlane.f32.xlu0 %v371
  %v375 = vpop.xlane.xlu0 %374
  %v376 = vrcp.pop 128.0
  %v377 = vmul.f32 %v373, %v376
  %v378 = vmul.f32 %v375, %v376
  %v379 = vsub.f32 %v370, %v377
  %v380 = vsub.f32 %v371, %v378
  %v381 = vmul.f32 %v379, %v379
  %v382 = vmul.f32 %v380, %v380
  %383 = vadd.xlane.f32.xlu0 %v381
  %v384 = vpop.xlane.xlu0 %383
  %385 = vadd.xlane.f32.xlu0 %v382
  %v386 = vpop.xlane.xlu0 %385
  %v387 = vmul.f32 %v384, %v376
  %v388 = vmul.f32 %v386, %v376
  %v389 = vadd.f32 %v387, 1e-06
  %v390 = vadd.f32 %v388, 1e-06
  %v391 = vrsqrt.pop %v389
  %v392 = vrsqrt.pop %v390
  %v393 = vmul.f32 %v379, %v391
  %v394 = vmul.f32 %v380, %v392
  %v395 = vld [vmem:[%s5] sm:$0x1]
  %v397 = vlaneseq
  %v398 = vshrl.u32 %v397, 7
  %v399 = vsub.s32 0, %v398
  %v400 = vrot.slane %v395, %v399
  %v402 = vmul.f32 %v393, %v400
  %v403 = vmul.f32 %v394, %v400
  %v404 = vld [vmem:[%s6] sm:$0x1]
  %v406 = vlaneseq
  %v407 = vshrl.u32 %v406, 7
  %v408 = vsub.s32 0, %v407
  %v409 = vrot.slane %v404, %v408
  %v411 = vadd.f32 %v402, %v409
  %v412 = vadd.f32 %v403, %v409
  %v413 = vpack.c.bf16 %v412, %v411
  %v415 = vunpack.c.l.b16 %v413
  %v416 = vunpack.c.h.b16 %v413
  %v417 = vpack.c.b16 %v415, %v415
  %v418 = vpack.c.b16 %v416, %v416
  %421 = vst [vmem:[%s7] sm:$0xf] %v417
  %422 = vst [vmem:[%s7 + $0x4] sm:$0xf] %v418
  // Predicated region
  $region30: #{transformer_forward.28} parent=0 // pred_check
    _
  $region31: #{transformer_forward.28} parent=0 // pred_check_branch
    %424 = sbr.rel (0) target = $region33
  $region32: #{transformer_forward.28} parent=0 // pred_region
    _
  $region33: #{transformer_forward.28} parent=0 // pred_fallthru
    _
  // Predicated region
  $region34: #{transformer_forward.28} parent=0 // pred_check
    _
  $region35: #{transformer_forward.28} parent=0 // pred_check_branch
    %426 = sbr.rel (0) target = $region37
  $region36: #{transformer_forward.28} parent=0 // pred_region
    _
  $region37: #{transformer_forward.28} parent=0 // pred_fallthru
    _

// kernel: transformer_forward.26
$region0: #{transformer_forward.26}
  #allocation0 [shape = 'u32[]', space=smem, size = 0x4, offset = 0x4, fixed_abs, tag = 'smem constant byte address 0x4 - core index']
  #allocation1 [shape = 'u32[144,128]{1,0:T(1,128)}', space=vmem, size = 0x12000, scoped, tag = 'internal scratch']
  %s0 = inlined_call_operand.vmem [shape: bf16[2,8,384], index: 0, kind: input, shape index: {}, may-alias: {0,1,2}]
  %s1 = inlined_call_operand.vmem [shape: bf16[2,8,384], index: 1, kind: input, shape index: {}, may-alias: {0,1,2}]
  %s2 = inlined_call_operand.vmem [shape: bf16[2,8,384], index: 2, kind: input, shape index: {}, may-alias: {0,1,2}]
  %s3 = inlined_call_operand.vmem [shape: f32[2,8,8], index: 3, kind: input, shape index: {}]
  %s4 = inlined_call_operand.vmem [shape: bf16[2,8,128], index: 4, kind: output, shape index: {}]
  %s5 = sld [smem:[#allocation0]]
  $region49: #{transformer_forward.26} parent=0
    _
  %s7 = ssub.s32 1, %s5
  %s8 = scalar_select 0, %s7, %s5
  loop: start=0, step=1, limit=4
  $region2: #{transformer_forward.26} parent=0 // loop_pre_header
    _
  $region3: #{transformer_forward.26} parent=0 // loop_header
    %s10 = sphi 0, %s14
    %p11 = scmp.ge.s32.totalorder %s10, 4
    %s20 = sphi 0, %s22
    %s23 = sphi 0, %s20
    %s24 = sphi 0, %s23
    %s40 = sphi 0, %s24
    %s46 = sphi 0, %s48
    %s49 = sphi 0, %s46
    %s50 = sphi 0, %s49
    %s66 = sphi 0, %s50
    %s72 = sphi 0, %s74
    %s75 = sphi 0, %s72
    %s76 = sphi 0, %s75
    %s92 = sphi 0, %s76
    %s98 = sphi 0, %s100
    %s101 = sphi 0, %s98
    %s102 = sphi 0, %s101
    %s118 = sphi 0, %s102
    %s124 = sphi 0, %s126
    %s127 = sphi 0, %s124
    %s128 = sphi 0, %s127
    %s144 = sphi 0, %s128
  $region4: #{transformer_forward.26} parent=0 // loop_header_branch
    %13 = sbr.rel (%p11) target = $region8
  $region5: #{transformer_forward.26} parent=0 // loop_body
    %s15 = ssub.s32 %s10, 1
    %s16 = ssub.s32 %s10, 2
    %s17 = sadd.s32 %s10, 1
    %s18 = ssub.s32 %s10, %s17
    %p19 = scmp.eq.s32.totalorder %s18, 0
    %s21 = sadd.s32 %s20, 1
    %s22 = scalar_select %p19, %s20, %s21
    %p25 = pneg %p19
    %p26 = scmp.eq.s32.totalorder %s10, 1
    %p27 = por %p25, %p26
    %p28 = scmp.ne.s32.totalorder %s20, %s23
    %p29 = scmp.eq.s32.totalorder %s10, 0
    %p30 = por %p28, %p29
    %p31 = scmp.ne.s32.totalorder %s20, %s23
    %p32 = scmp.eq.s32.totalorder %s15, 1
    %p33 = por %p31, %p32
    %p34 = scmp.ne.s32.totalorder %s23, %s24
    %p35 = scmp.eq.s32.totalorder %s15, 0
    %p36 = por %p34, %p35
    %p37 = scmp.ne.s32.totalorder %s23, %s24
    %p38 = scmp.eq.s32.totalorder %s16, 1
    %p39 = por %p37, %p38
    %p41 = scmp.ne.s32.totalorder %s24, %s40
    %p42 = scmp.eq.s32.totalorder %s16, 0
    %p43 = por %p41, %p42
    %s44 = ssub.s32 %s10, %s17
    %p45 = scmp.eq.s32.totalorder %s44, 0
    %s47 = sadd.s32 %s46, 1
    %s48 = scalar_select %p45, %s46, %s47
    %p51 = pneg %p45
    %p52 = scmp.eq.s32.totalorder %s10, 1
    %p53 = por %p51, %p52
    %p54 = scmp.ne.s32.totalorder %s46, %s49
    %p55 = scmp.eq.s32.totalorder %s10, 0
    %p56 = por %p54, %p55
    %p57 = scmp.ne.s32.totalorder %s46, %s49
    %p58 = scmp.eq.s32.totalorder %s15, 1
    %p59 = por %p57, %p58
    %p60 = scmp.ne.s32.totalorder %s49, %s50
    %p61 = scmp.eq.s32.totalorder %s15, 0
    %p62 = por %p60, %p61
    %p63 = scmp.ne.s32.totalorder %s49, %s50
    %p64 = scmp.eq.s32.totalorder %s16, 1
    %p65 = por %p63, %p64
    %p67 = scmp.ne.s32.totalorder %s50, %s66
    %p68 = scmp.eq.s32.totalorder %s16, 0
    %p69 = por %p67, %p68
    %s70 = ssub.s32 %s10, %s17
    %p71 = scmp.eq.s32.totalorder %s70, 0
    %s73 = sadd.s32 %s72, 1
    %s74 = scalar_select %p71, %s72, %s73
    %p77 = pneg %p71
    %p78 = scmp.eq.s32.totalorder %s10, 1
    %p79 = por %p77, %p78
    %p80 = scmp.ne.s32.totalorder %s72, %s75
    %p81 = scmp.eq.s32.totalorder %s10, 0
    %p82 = por %p80, %p81
    %p83 = scmp.ne.s32.totalorder %s72, %s75
    %p84 = scmp.eq.s32.totalorder %s15, 1
    %p85 = por %p83, %p84
    %p86 = scmp.ne.s32.totalorder %s75, %s76
    %p87 = scmp.eq.s32.totalorder %s15, 0
    %p88 = por %p86, %p87
    %p89 = scmp.ne.s32.totalorder %s75, %s76
    %p90 = scmp.eq.s32.totalorder %s16, 1
    %p91 = por %p89, %p90
    %p93 = scmp.ne.s32.totalorder %s76, %s92
    %p94 = scmp.eq.s32.totalorder %s16, 0
    %p95 = por %p93, %p94
    %s96 = ssub.s32 %s10, %s17
    %p97 = scmp.eq.s32.totalorder %s96, 0
    %s99 = sadd.s32 %s98, 1
    %s100 = scalar_select %p97, %s98, %s99
    %p103 = pneg %p97
    %p104 = scmp.eq.s32.totalorder %s10, 1
    %p105 = por %p103, %p104
    %p106 = scmp.ne.s32.totalorder %s98, %s101
    %p107 = scmp.eq.s32.totalorder %s10, 0
    %p108 = por %p106, %p107
    %p109 = scmp.ne.s32.totalorder %s98, %s101
    %p110 = scmp.eq.s32.totalorder %s15, 1
    %p111 = por %p109, %p110
    %p112 = scmp.ne.s32.totalorder %s101, %s102
    %p113 = scmp.eq.s32.totalorder %s15, 0
    %p114 = por %p112, %p113
    %p115 = scmp.ne.s32.totalorder %s101, %s102
    %p116 = scmp.eq.s32.totalorder %s16, 1
    %p117 = por %p115, %p116
    %p119 = scmp.ne.s32.totalorder %s102, %s118
    %p120 = scmp.eq.s32.totalorder %s16, 0
    %p121 = por %p119, %p120
    %s122 = ssub.s32 %s10, %s17
    %p123 = scmp.eq.s32.totalorder %s122, 0
    %s125 = sadd.s32 %s124, 1
    %s126 = scalar_select %p123, %s124, %s125
    %p129 = pneg %p123
    %p130 = scmp.eq.s32.totalorder %s10, 1
    %p131 = por %p129, %p130
    %p132 = scmp.ne.s32.totalorder %s124, %s127
    %p133 = scmp.eq.s32.totalorder %s10, 0
    %p134 = por %p132, %p133
    %p135 = scmp.ne.s32.totalorder %s124, %s127
    %p136 = scmp.eq.s32.totalorder %s15, 1
    %p137 = por %p135, %p136
    %p138 = scmp.ne.s32.totalorder %s127, %s128
    %p139 = scmp.eq.s32.totalorder %s15, 0
    %p140 = por %p138, %p139
    %p141 = scmp.ne.s32.totalorder %s127, %s128
    %p142 = scmp.eq.s32.totalorder %s16, 1
    %p143 = por %p141, %p142
    %p145 = scmp.ne.s32.totalorder %s128, %s144
    %p146 = scmp.eq.s32.totalorder %s16, 0
    %p147 = por %p145, %p146
    %p148 = scmp.le.s32.totalorder 1, %s10
    %p149 = scmp.lt.s32.totalorder %s10, 3
    %p150 = pnand %p148, %p149
    %p151 = pneg %p150
    // Predicated region
    $region9: #{transformer_forward.26} parent=5 // pred_check
      _
    $region10: #{transformer_forward.26} parent=5 // pred_check_branch
      %153 = sbr.rel (%p150) target = $region12
    $region11: #{transformer_forward.26} parent=5 // pred_region
      %s154 = ssub.s32 %s10, 1
    $region12: #{transformer_forward.26} parent=5 // pred_fallthru
      _
    %p155 = scmp.lt.s32.totalorder %s10, 2
    // Predicated region
    $region13: #{transformer_forward.26} parent=5 // pred_check
      %p156 = pneg %p155
    $region14: #{transformer_forward.26} parent=5 // pred_check_branch
      %158 = sbr.rel (%p156) target = $region16
    $region15: #{transformer_forward.26} parent=5 // pred_region
      // Predicated region
      $region17: #{transformer_forward.26} parent=15 // pred_check
        %p159 = pneg %p30
      $region18: #{transformer_forward.26} parent=15 // pred_check_branch
        %161 = sbr.rel (%p159) target = $region20
      $region19: #{transformer_forward.26} parent=15 // pred_region
        %p162 = scmp.lt.s32.totalorder %s10, 1
        %s163 = scalar_select %p162, %s10, 1
        %s164 = smul.addr %s163, 3
        %s165 = smul.addr %s164, 4
        %s166 = scalar_lea.vmem %s0, %s165
      $region20: #{transformer_forward.26} parent=15 // pred_fallthru
        _
      // Predicated region
      $region21: #{transformer_forward.26} parent=15 // pred_check
        %p167 = pneg %p56
      $region22: #{transformer_forward.26} parent=15 // pred_check_branch
        %169 = sbr.rel (%p167) target = $region24
      $region23: #{transformer_forward.26} parent=15 // pred_region
        %p170 = scmp.lt.s32.totalorder %s10, 1
        %s171 = scalar_select %p170, %s10, 1
        %s172 = smul.addr %s171, 3
        %s173 = sadd.s32 1, %s172
        %s174 = smul.addr %s173, 4
        %s175 = scalar_lea.vmem %s1, %s174
      $region24: #{transformer_forward.26} parent=15 // pred_fallthru
        _
      // Predicated region
      $region25: #{transformer_forward.26} parent=15 // pred_check
        %p176 = pneg %p82
      $region26: #{transformer_forward.26} parent=15 // pred_check_branch
        %178 = sbr.rel (%p176) target = $region28
      $region27: #{transformer_forward.26} parent=15 // pred_region
        %p179 = scmp.lt.s32.totalorder %s10, 1
        %s180 = scalar_select %p179, %s10, 1
        %s181 = smul.addr %s180, 3
        %s182 = sadd.s32 2, %s181
        %s183 = smul.addr %s182, 4
        %s184 = scalar_lea.vmem %s2, %s183
      $region28: #{transformer_forward.26} parent=15 // pred_fallthru
        _
      // Predicated region
      $region29: #{transformer_forward.26} parent=15 // pred_check
        %p185 = pneg %p108
      $region30: #{transformer_forward.26} parent=15 // pred_check_branch
        %187 = sbr.rel (%p185) target = $region32
      $region31: #{transformer_forward.26} parent=15 // pred_region
        %p188 = scmp.lt.s32.totalorder %s10, 1
        %s189 = scalar_select %p188, %s10, 1
        %s190 = smul.addr %s189, 8
        %s191 = scalar_lea.vmem %s3, %s190
      $region32: #{transformer_forward.26} parent=15 // pred_fallthru
        _
    $region16: #{transformer_forward.26} parent=5 // pred_fallthru
      _
    %p192 = scmp.le.s32.totalorder 1, %s10
    %p193 = scmp.lt.s32.totalorder %s10, 3
    %p194 = pnand %p192, %p193
    %p195 = pneg %p194
    // Predicated region
    $region33: #{transformer_forward.26} parent=5 // pred_check
      _
    $region34: #{transformer_forward.26} parent=5 // pred_check_branch
      %197 = sbr.rel (%p194) target = $region36
    $region35: #{transformer_forward.26} parent=5 // pred_region
      %s198 = ssub.s32 %s10, 1
      %p199 = scmp.lt.s32.totalorder %s15, 1
      %s200 = scalar_select %p199, %s15, 1
      %s201 = smul.addr %s200, 3
      %s202 = smul.addr %s201, 4
      %s203 = scalar_lea.vmem %s0, %s202
      %p204 = pneg %p36
      %p205 = pneg %p33
      %p206 = scmp.lt.s32.totalorder %s15, 1
      %s207 = scalar_select %p206, %s15, 1
      %s208 = smul.addr %s207, 3
      %s209 = sadd.s32 1, %s208
      %s210 = smul.addr %s209, 4
      %s211 = scalar_lea.vmem %s1, %s210
      %p212 = pneg %p62
      %p213 = pneg %p59
      %p214 = scmp.lt.s32.totalorder %s15, 1
      %s215 = scalar_select %p214, %s15, 1
      %s216 = smul.addr %s215, 3
      %s217 = sadd.s32 2, %s216
      %s218 = smul.addr %s217, 4
      %s219 = scalar_lea.vmem %s2, %s218
      %p220 = pneg %p88
      %p221 = pneg %p85
      %p222 = scmp.lt.s32.totalorder %s15, 1
      %s223 = scalar_select %p222, %s15, 1
      %s224 = smul.addr %s223, 8
      %s225 = scalar_lea.vmem %s3, %s224
      %p226 = pneg %p114
      %p227 = pneg %p111
      %p228 = pneg %p140
      %p229 = pneg %p137
      %p230 = scmp.lt.s32.totalorder %s15, 1
      %s231 = scalar_select %p230, %s15, 1
      %s232 = smul.addr %s231, 4
      %s233 = scalar_lea.vmem %s4, %s232
      %p234 = scmp.lt.s32.totalorder %s15, 1
      %s235 = scalar_select %p234, %s15, 1
      %s236 = smul.addr %s235, 3
      %s237 = smul.addr %s236, 4
      %s238 = scalar_lea.vmem %s0, %s237
      %p239 = scmp.lt.s32.totalorder %s15, 1
      %s240 = scalar_select %p239, %s15, 1
      %s241 = smul.addr %s240, 3
      %s242 = sadd.s32 1, %s241
      %s243 = smul.addr %s242, 4
      %s244 = scalar_lea.vmem %s1, %s243
      %p245 = scmp.lt.s32.totalorder %s15, 1
      %s246 = scalar_select %p245, %s15, 1
      %s247 = smul.addr %s246, 3
      %s248 = sadd.s32 2, %s247
      %s249 = smul.addr %s248, 4
      %s250 = scalar_lea.vmem %s2, %s249
      %p251 = scmp.lt.s32.totalorder %s15, 1
      %s252 = scalar_select %p251, %s15, 1
      %s253 = smul.addr %s252, 8
      %s254 = scalar_lea.vmem %s3, %s253
      %p255 = scmp.lt.s32.totalorder %s15, 1
      %s256 = scalar_select %p255, %s15, 1
      %s257 = smul.addr %s256, 4
      %s258 = scalar_lea.vmem %s4, %s257
      %v260 = vld [vmem:[%s238] sm:$0xf]
      %v261 = vld [vmem:[%s244] sm:$0xf]
      %v262 = vld [vmem:[%s250] sm:$0xf]
      %v263 = vld [vmem:[%s254] sm:$0xff]
      %vm264 = vcmask 261120
      %v266 = vsel %vm264, %v260, 0
      %v269 = vsel %vm264, %v261, 0
      %271 = vmatprep.subr.bf16.mxu0 0
      %272 = vmatpush1.bf16.xpose.msra.mxu0 %v269
      %273 = vmatprep.subr.bf16.mxu0 0
      %274 = vmatpush1.bf16.xpose.msra.mxu0 0
      %275 = vmatprep.subr.bf16.mxu0 0
      %276 = vmatpush1.bf16.xpose.msra.mxu0 0
      %277 = vmatprep.subr.bf16.mxu0 0
      %278 = vmatpush1.bf16.xpose.msra.mxu0 0
      %279 = vmatprep.subr.bf16.mxu0 0
      %280 = vmatpush1.bf16.xpose.msra.mxu0 0
      %281 = vmatprep.subr.bf16.mxu0 0
      %282 = vmatpush1.bf16.xpose.msra.mxu0 0
      %283 = vmatprep.subr.bf16.mxu0 0
      %284 = vmatpush1.bf16.xpose.msra.mxu0 0
      %285 = vmatprep.subr.bf16.mxu0 0
      %286 = vmatpush1.bf16.xpose.msra.mxu0 0
      %287 = vmatprep.subr.bf16.mxu0 0
      %288 = vmatpush1.bf16.xpose.msra.mxu0 0
      %289 = vmatprep.subr.bf16.mxu0 0
      %290 = vmatpush1.bf16.xpose.msra.mxu0 0
      %291 = vmatprep.subr.bf16.mxu0 0
      %292 = vmatpush1.bf16.xpose.msra.mxu0 0
      %293 = vmatprep.subr.bf16.mxu0 0
      %294 = vmatpush1.bf16.xpose.msra.mxu0 0
      %295 = vmatprep.subr.bf16.mxu0 0
      %296 = vmatpush1.bf16.xpose.msra.mxu0 0
      %297 = vmatprep.subr.bf16.mxu0 0
      %298 = vmatpush1.bf16.xpose.msra.mxu0 0
      %299 = vmatprep.subr.bf16.mxu0 0
      %300 = vmatpush1.bf16.xpose.msra.mxu0 0
      %301 = vmatprep.subr.bf16.mxu0 0
      %302 = vmatpush1.bf16.xpose.msra.mxu0 0
      %303 = vmatprep.mubr.bf16.mxu0 0
      %304 = vmatmul.mubr.bf16.gmra.mrb[0].mxu0 %v266
      %v305 = vpop.f32.mrb[0].mxu0
      %v306 = vadd.f32 0.0, %v305
      %v307 = vpop.f32.mrb[0].mxu0
      %v308 = vpop.f32.mrb[0].mxu0
      %v309 = vpop.f32.mrb[0].mxu0
      %310 = vdwg.mxu0
      %v311 = vmul.f32 %v306, 0.17677669
      %v312 = vadd.f32 %v311, %v263
      %vm313 = vcmask 64512
      %v314 = vsel %vm313, %v312, -inf
      %315 = vmax.xlane.f32.xlu0 %v314
      %v316 = vpop.xlane.xlu0 %315
      %v317 = vsub.f32 %v312, %v316
      %v318 = vmul.f32 %v317, 1.442695
      %v319 = vpow.pop %v318
      %v320 = vsel %vm313, %v319, 0.0
      %321 = vadd.xlane.f32.xlu0 %v320
      %v322 = vpop.xlane.xlu0 %321
      %v323 = vrcp.pop %v322
      %v324 = vmul.f32 %v319, %v323
      %v325 = vpack.c.bf16 %v324, %v324
      %v327 = vsel %vm313, %v325, 0
      %vm329 = vcmask 1043456
      %v331 = vsel %vm329, %v262, 0
      %333 = vmatprep.subr.bf16.mxu0 0
      %334 = vmatpush1.bf16.msra.mxu0 %v331
      %335 = vmatprep.subr.bf16.mxu0 0
      %336 = vmatpush1.bf16.msra.mxu0 0
      %337 = vmatprep.subr.bf16.mxu0 0
      %338 = vmatpush1.bf16.msra.mxu0 0
      %339 = vmatprep.subr.bf16.mxu0 0
      %340 = vmatpush1.bf16.msra.mxu0 0
      %341 = vmatprep.subr.bf16.mxu0 0
      %342 = vmatpush1.bf16.msra.mxu0 0
      %343 = vmatprep.subr.bf16.mxu0 0
      %344 = vmatpush1.bf16.msra.mxu0 0
      %345 = vmatprep.subr.bf16.mxu0 0
      %346 = vmatpush1.bf16.msra.mxu0 0
      %347 = vmatprep.subr.bf16.mxu0 0
      %348 = vmatpush1.bf16.msra.mxu0 0
      %349 = vmatprep.subr.bf16.mxu0 0
      %350 = vmatpush1.bf16.msra.mxu0 0
      %351 = vmatprep.subr.bf16.mxu0 0
      %352 = vmatpush1.bf16.msra.mxu0 0
      %353 = vmatprep.subr.bf16.mxu0 0
      %354 = vmatpush1.bf16.msra.mxu0 0
      %355 = vmatprep.subr.bf16.mxu0 0
      %356 = vmatpush1.bf16.msra.mxu0 0
      %357 = vmatprep.subr.bf16.mxu0 0
      %358 = vmatpush1.bf16.msra.mxu0 0
      %359 = vmatprep.subr.bf16.mxu0 0
      %360 = vmatpush1.bf16.msra.mxu0 0
      %361 = vmatprep.subr.bf16.mxu0 0
      %362 = vmatpush1.bf16.msra.mxu0 0
      %363 = vmatprep.subr.bf16.mxu0 0
      %364 = vmatpush1.bf16.msra.mxu0 0
      %365 = vmatprep.mubr.bf16.mxu0 0
      %366 = vmatmul.mubr.bf16.gmra.mrb[0].mxu0 %v327
      %v367 = vpop.f32.mrb[0].mxu0
      %v368 = vadd.f32 0.0, %v367
      %v369 = vpop.f32.mrb[0].mxu0
      %v370 = vpop.f32.mrb[0].mxu0
      %v371 = vpop.f32.mrb[0].mxu0
      %372 = vdwg.mxu0
      %v374 = vunpack.c.l.b16 %v260
      %v375 = vpack.c.b16 %v374, %v374
      %376 = vrot.lane.b32.xlu0 %v375, 96
      %v377 = vpop.permute.xlu0 %376
      %v379 = vunpack.c.l.b16 %v261
      %v380 = vpack.c.b16 %v379, %v379
      %381 = vrot.lane.b32.xlu0 %v380, 96
      %v382 = vpop.permute.xlu0 %381
      %v384 = vsel %vm264, %v377, 0
      %v387 = vsel %vm264, %v382, 0
      %389 = vmatprep.subr.bf16.mxu0 0
      %390 = vmatpush1.bf16.xpose.msra.mxu0 %v387
      %391 = vmatprep.subr.bf16.mxu0 0
      %392 = vmatpush1.bf16.xpose.msra.mxu0 0
      %393 = vmatprep.subr.bf16.mxu0 0
      %394 = vmatpush1.bf16.xpose.msra.mxu0 0
      %395 = vmatprep.subr.bf16.mxu0 0
      %396 = vmatpush1.bf16.xpose.msra.mxu0 0
      %397 = vmatprep.subr.bf16.mxu0 0
      %398 = vmatpush1.bf16.xpose.msra.mxu0 0
      %399 = vmatprep.subr.bf16.mxu0 0
      %400 = vmatpush1.bf16.xpose.msra.mxu0 0
      %401 = vmatprep.subr.bf16.mxu0 0
      %402 = vmatpush1.bf16.xpose.msra.mxu0 0
      %403 = vmatprep.subr.bf16.mxu0 0
      %404 = vmatpush1.bf16.xpose.msra.mxu0 0
      %405 = vmatprep.subr.bf16.mxu0 0
      %406 = vmatpush1.bf16.xpose.msra.mxu0 0
      %407 = vmatprep.subr.bf16.mxu0 0
      %408 = vmatpush1.bf16.xpose.msra.mxu0 0
      %409 = vmatprep.subr.bf16.mxu0 0
      %410 = vmatpush1.bf16.xpose.msra.mxu0 0
      %411 = vmatprep.subr.bf16.mxu0 0
      %412 = vmatpush1.bf16.xpose.msra.mxu0 0
      %413 = vmatprep.subr.bf16.mxu0 0
      %414 = vmatpush1.bf16.xpose.msra.mxu0 0
      %415 = vmatprep.subr.bf16.mxu0 0
      %416 = vmatpush1.bf16.xpose.msra.mxu0 0
      %417 = vmatprep.subr.bf16.mxu0 0
      %418 = vmatpush1.bf16.xpose.msra.mxu0 0
      %419 = vmatprep.subr.bf16.mxu0 0
      %420 = vmatpush1.bf16.xpose.msra.mxu0 0
      %421 = vmatprep.mubr.bf16.mxu0 0
      %422 = vmatmul.mubr.bf16.gmra.mrb[0].mxu0 %v384
      %v423 = vpop.f32.mrb[0].mxu0
      %v424 = vadd.f32 0.0, %v423
      %v425 = vpop.f32.mrb[0].mxu0
      %v426 = vpop.f32.mrb[0].mxu0
      %v427 = vpop.f32.mrb[0].mxu0
      %428 = vdwg.mxu0
      %v429 = vmul.f32 %v424, 0.17677669
      %v430 = vadd.f32 %v429, %v263
      %v431 = vsel %vm313, %v430, -inf
      %432 = vmax.xlane.f32.xlu0 %v431
      %v433 = vpop.xlane.xlu0 %432
      %v434 = vsub.f32 %v430, %v433
      %v435 = vmul.f32 %v434, 1.442695
      %v436 = vpow.pop %v435
      %v437 = vsel %vm313, %v436, 0.0
      %438 = vadd.xlane.f32.xlu0 %v437
      %v439 = vpop.xlane.xlu0 %438
      %v440 = vrcp.pop %v439
      %v441 = vmul.f32 %v436, %v440
      %v442 = vpack.c.bf16 %v441, %v441
      %v444 = vunpack.c.l.b16 %v262
      %v445 = vpack.c.b16 %v444, %v444
      %446 = vrot.lane.b32.xlu0 %v445, 96
      %v447 = vpop.permute.xlu0 %446
      %v449 = vsel %vm313, %v442, 0
      %v452 = vsel %vm329, %v447, 0
      %454 = vmatprep.subr.bf16.mxu0 0
      %455 = vmatpush1.bf16.msra.mxu0 %v452
      %456 = vmatprep.subr.bf16.mxu0 0
      %457 = vmatpush1.bf16.msra.mxu0 0
      %458 = vmatprep.subr.bf16.mxu0 0
      %459 = vmatpush1.bf16.msra.mxu0 0
      %460 = vmatprep.subr.bf16.mxu0 0
      %461 = vmatpush1.bf16.msra.mxu0 0
      %462 = vmatprep.subr.bf16.mxu0 0
      %463 = vmatpush1.bf16.msra.mxu0 0
      %464 = vmatprep.subr.bf16.mxu0 0
      %465 = vmatpush1.bf16.msra.mxu0 0
      %466 = vmatprep.subr.bf16.mxu0 0
      %467 = vmatpush1.bf16.msra.mxu0 0
      %468 = vmatprep.subr.bf16.mxu0 0
      %469 = vmatpush1.bf16.msra.mxu0 0
      %470 = vmatprep.subr.bf16.mxu0 0
      %471 = vmatpush1.bf16.msra.mxu0 0
      %472 = vmatprep.subr.bf16.mxu0 0
      %473 = vmatpush1.bf16.msra.mxu0 0
      %474 = vmatprep.subr.bf16.mxu0 0
      %475 = vmatpush1.bf16.msra.mxu0 0
      %476 = vmatprep.subr.bf16.mxu0 0
      %477 = vmatpush1.bf16.msra.mxu0 0
      %478 = vmatprep.subr.bf16.mxu0 0
      %479 = vmatpush1.bf16.msra.mxu0 0
      %480 = vmatprep.subr.bf16.mxu0 0
      %481 = vmatpush1.bf16.msra.mxu0 0
      %482 = vmatprep.subr.bf16.mxu0 0
      %483 = vmatpush1.bf16.msra.mxu0 0
      %484 = vmatprep.subr.bf16.mxu0 0
      %485 = vmatpush1.bf16.msra.mxu0 0
      %486 = vmatprep.mubr.bf16.mxu0 0
      %487 = vmatmul.mubr.bf16.gmra.mrb[0].mxu0 %v449
      %v488 = vpop.f32.mrb[0].mxu0
      %v489 = vadd.f32 0.0, %v488
      %v490 = vpop.f32.mrb[0].mxu0
      %v491 = vpop.f32.mrb[0].mxu0
      %v492 = vpop.f32.mrb[0].mxu0
      %493 = vdwg.mxu0
      %494 = vrot.lane.b32.xlu0 %v375, 64
      %v495 = vpop.permute.xlu0 %494
      %496 = vrot.lane.b32.xlu0 %v380, 64
      %v497 = vpop.permute.xlu0 %496
      %v499 = vsel %vm264, %v495, 0
      %v502 = vsel %vm264, %v497, 0
      %504 = vmatprep.subr.bf16.mxu0 0
      %505 = vmatpush1.bf16.xpose.msra.mxu0 %v502
      %506 = vmatprep.subr.bf16.mxu0 0
      %507 = vmatpush1.bf16.xpose.msra.mxu0 0
      %508 = vmatprep.subr.bf16.mxu0 0
      %509 = vmatpush1.bf16.xpose.msra.mxu0 0
      %510 = vmatprep.subr.bf16.mxu0 0
      %511 = vmatpush1.bf16.xpose.msra.mxu0 0
      %512 = vmatprep.subr.bf16.mxu0 0
      %513 = vmatpush1.bf16.xpose.msra.mxu0 0
      %514 = vmatprep.subr.bf16.mxu0 0
      %515 = vmatpush1.bf16.xpose.msra.mxu0 0
      %516 = vmatprep.subr.bf16.mxu0 0
      %517 = vmatpush1.bf16.xpose.msra.mxu0 0
      %518 = vmatprep.subr.bf16.mxu0 0
      %519 = vmatpush1.bf16.xpose.msra.mxu0 0
      %520 = vmatprep.subr.bf16.mxu0 0
      %521 = vmatpush1.bf16.xpose.msra.mxu0 0
      %522 = vmatprep.subr.bf16.mxu0 0
      %523 = vmatpush1.bf16.xpose.msra.mxu0 0
      %524 = vmatprep.subr.bf16.mxu0 0
      %525 = vmatpush1.bf16.xpose.msra.mxu0 0
      %526 = vmatprep.subr.bf16.mxu0 0
      %527 = vmatpush1.bf16.xpose.msra.mxu0 0
      %528 = vmatprep.subr.bf16.mxu0 0
      %529 = vmatpush1.bf16.xpose.msra.mxu0 0
      %530 = vmatprep.subr.bf16.mxu0 0
      %531 = vmatpush1.bf16.xpose.msra.mxu0 0
      %532 = vmatprep.subr.bf16.mxu0 0
      %533 = vmatpush1.bf16.xpose.msra.mxu0 0
      %534 = vmatprep.subr.bf16.mxu0 0
      %535 = vmatpush1.bf16.xpose.msra.mxu0 0
      %536 = vmatprep.mubr.bf16.mxu0 0
      %537 = vmatmul.mubr.bf16.gmra.mrb[0].mxu0 %v499
      %v538 = vpop.f32.mrb[0].mxu0
      %v539 = vadd.f32 0.0, %v538
      %v540 = vpop.f32.mrb[0].mxu0
      %v541 = vpop.f32.mrb[0].mxu0
      %v542 = vpop.f32.mrb[0].mxu0
      %543 = vdwg.mxu0
      %v544 = vmul.f32 %v539, 0.17677669
      %v545 = vadd.f32 %v544, %v263
      %v546 = vsel %vm313, %v545, -inf
      %547 = vmax.xlane.f32.xlu0 %v546
      %v548 = vpop.xlane.xlu0 %547
      %v549 = vsub.f32 %v545, %v548
      %v550 = vmul.f32 %v549, 1.442695
      %v551 = vpow.pop %v550
      %v552 = vsel %vm313, %v551, 0.0
      %553 = vadd.xlane.f32.xlu0 %v552
      %v554 = vpop.xlane.xlu0 %553
      %v555 = vrcp.pop %v554
      %v556 = vmul.f32 %v551, %v555
      %v557 = vpack.c.bf16 %v556, %v556
      %558 = vrot.lane.b32.xlu0 %v445, 64
      %v559 = vpop.permute.xlu0 %558
      %v561 = vsel %vm313, %v557, 0
      %v564 = vsel %vm329, %v559, 0
      %566 = vmatprep.subr.bf16.mxu0 0
      %567 = vmatpush1.bf16.msra.mxu0 %v564
      %568 = vmatprep.subr.bf16.mxu0 0
      %569 = vmatpush1.bf16.msra.mxu0 0
      %570 = vmatprep.subr.bf16.mxu0 0
      %571 = vmatpush1.bf16.msra.mxu0 0
      %572 = vmatprep.subr.bf16.mxu0 0
      %573 = vmatpush1.bf16.msra.mxu0 0
      %574 = vmatprep.subr.bf16.mxu0 0
      %575 = vmatpush1.bf16.msra.mxu0 0
      %576 = vmatprep.subr.bf16.mxu0 0
      %577 = vmatpush1.bf16.msra.mxu0 0
      %578 = vmatprep.subr.bf16.mxu0 0
      %579 = vmatpush1.bf16.msra.mxu0 0
      %580 = vmatprep.subr.bf16.mxu0 0
      %581 = vmatpush1.bf16.msra.mxu0 0
      %582 = vmatprep.subr.bf16.mxu0 0
      %583 = vmatpush1.bf16.msra.mxu0 0
      %584 = vmatprep.subr.bf16.mxu0 0
      %585 = vmatpush1.bf16.msra.mxu0 0
      %586 = vmatprep.subr.bf16.mxu0 0
      %587 = vmatpush1.bf16.msra.mxu0 0
      %588 = vmatprep.subr.bf16.mxu0 0
      %589 = vmatpush1.bf16.msra.mxu0 0
      %590 = vmatprep.subr.bf16.mxu0 0
      %591 = vmatpush1.bf16.msra.mxu0 0
      %592 = vmatprep.subr.bf16.mxu0 0
      %593 = vmatpush1.bf16.msra.mxu0 0
      %594 = vmatprep.subr.bf16.mxu0 0
      %595 = vmatpush1.bf16.msra.mxu0 0
      %596 = vmatprep.subr.bf16.mxu0 0
      %597 = vmatpush1.bf16.msra.mxu0 0
      %598 = vmatprep.mubr.bf16.mxu0 0
      %599 = vmatmul.mubr.bf16.gmra.mrb[0].mxu0 %v561
      %v600 = vpop.f32.mrb[0].mxu0
      %v601 = vadd.f32 0.0, %v600
      %v602 = vpop.f32.mrb[0].mxu0
      %v603 = vpop.f32.mrb[0].mxu0
      %v604 = vpop.f32.mrb[0].mxu0
      %605 = vdwg.mxu0
      %606 = vrot.lane.b32.xlu0 %v375, 32
      %v607 = vpop.permute.xlu0 %606
      %608 = vrot.lane.b32.xlu0 %v380, 32
      %v609 = vpop.permute.xlu0 %608
      %v611 = vsel %vm264, %v607, 0
      %v614 = vsel %vm264, %v609, 0
      %616 = vmatprep.subr.bf16.mxu0 0
      %617 = vmatpush1.bf16.xpose.msra.mxu0 %v614
      %618 = vmatprep.subr.bf16.mxu0 0
      %619 = vmatpush1.bf16.xpose.msra.mxu0 0
      %620 = vmatprep.subr.bf16.mxu0 0
      %621 = vmatpush1.bf16.xpose.msra.mxu0 0
      %622 = vmatprep.subr.bf16.mxu0 0
      %623 = vmatpush1.bf16.xpose.msra.mxu0 0
      %624 = vmatprep.subr.bf16.mxu0 0
      %625 = vmatpush1.bf16.xpose.msra.mxu0 0
      %626 = vmatprep.subr.bf16.mxu0 0
      %627 = vmatpush1.bf16.xpose.msra.mxu0 0
      %628 = vmatprep.subr.bf16.mxu0 0
      %629 = vmatpush1.bf16.xpose.msra.mxu0 0
      %630 = vmatprep.subr.bf16.mxu0 0
      %631 = vmatpush1.bf16.xpose.msra.mxu0 0
      %632 = vmatprep.subr.bf16.mxu0 0
      %633 = vmatpush1.bf16.xpose.msra.mxu0 0
      %634 = vmatprep.subr.bf16.mxu0 0
      %635 = vmatpush1.bf16.xpose.msra.mxu0 0
      %636 = vmatprep.subr.bf16.mxu0 0
      %637 = vmatpush1.bf16.xpose.msra.mxu0 0
      %638 = vmatprep.subr.bf16.mxu0 0
      %639 = vmatpush1.bf16.xpose.msra.mxu0 0
      %640 = vmatprep.subr.bf16.mxu0 0
      %641 = vmatpush1.bf16.xpose.msra.mxu0 0
      %642 = vmatprep.subr.bf16.mxu0 0
      %643 = vmatpush1.bf16.xpose.msra.mxu0 0
      %644 = vmatprep.subr.bf16.mxu0 0
      %645 = vmatpush1.bf16.xpose.msra.mxu0 0
      %646 = vmatprep.subr.bf16.mxu0 0
      %647 = vmatpush1.bf16.xpose.msra.mxu0 0
      %648 = vmatprep.mubr.bf16.mxu0 0
      %649 = vmatmul.mubr.bf16.gmra.mrb[0].mxu0 %v611
      %v650 = vpop.f32.mrb[0].mxu0
      %v651 = vadd.f32 0.0, %v650
      %v652 = vpop.f32.mrb[0].mxu0
      %v653 = vpop.f32.mrb[0].mxu0
      %v654 = vpop.f32.mrb[0].mxu0
      %655 = vdwg.mxu0
      %v656 = vmul.f32 %v651, 0.17677669
      %v657 = vadd.f32 %v656, %v263
      %v658 = vsel %vm313, %v657, -inf
      %659 = vmax.xlane.f32.xlu0 %v658
      %v660 = vpop.xlane.xlu0 %659
      %v661 = vsub.f32 %v657, %v660
      %v662 = vmul.f32 %v661, 1.442695
      %v663 = vpow.pop %v662
      %v664 = vsel %vm313, %v663, 0.0
      %665 = vadd.xlane.f32.xlu0 %v664
      %v666 = vpop.xlane.xlu0 %665
      %v667 = vrcp.pop %v666
      %v668 = vmul.f32 %v663, %v667
      %v669 = vpack.c.bf16 %v668, %v668
      %670 = vrot.lane.b32.xlu0 %v445, 32
      %v671 = vpop.permute.xlu0 %670
      %v673 = vsel %vm313, %v669, 0
      %v676 = vsel %vm329, %v671, 0
      %678 = vmatprep.subr.bf16.mxu0 0
      %679 = vmatpush1.bf16.msra.mxu0 %v676
      %680 = vmatprep.subr.bf16.mxu0 0
      %681 = vmatpush1.bf16.msra.mxu0 0
      %682 = vmatprep.subr.bf16.mxu0 0
      %683 = vmatpush1.bf16.msra.mxu0 0
      %684 = vmatprep.subr.bf16.mxu0 0
      %685 = vmatpush1.bf16.msra.mxu0 0
      %686 = vmatprep.subr.bf16.mxu0 0
      %687 = vmatpush1.bf16.msra.mxu0 0
      %688 = vmatprep.subr.bf16.mxu0 0
      %689 = vmatpush1.bf16.msra.mxu0 0
      %690 = vmatprep.subr.bf16.mxu0 0
      %691 = vmatpush1.bf16.msra.mxu0 0
      %692 = vmatprep.subr.bf16.mxu0 0
      %693 = vmatpush1.bf16.msra.mxu0 0
      %694 = vmatprep.subr.bf16.mxu0 0
      %695 = vmatpush1.bf16.msra.mxu0 0
      %696 = vmatprep.subr.bf16.mxu0 0
      %697 = vmatpush1.bf16.msra.mxu0 0
      %698 = vmatprep.subr.bf16.mxu0 0
      %699 = vmatpush1.bf16.msra.mxu0 0
      %700 = vmatprep.subr.bf16.mxu0 0
      %701 = vmatpush1.bf16.msra.mxu0 0
      %702 = vmatprep.subr.bf16.mxu0 0
      %703 = vmatpush1.bf16.msra.mxu0 0
      %704 = vmatprep.subr.bf16.mxu0 0
      %705 = vmatpush1.bf16.msra.mxu0 0
      %706 = vmatprep.subr.bf16.mxu0 0
      %707 = vmatpush1.bf16.msra.mxu0 0
      %708 = vmatprep.subr.bf16.mxu0 0
      %709 = vmatpush1.bf16.msra.mxu0 0
      %710 = vmatprep.mubr.bf16.mxu0 0
      %711 = vmatmul.mubr.bf16.gmra.mrb[0].mxu0 %v673
      %v712 = vpop.f32.mrb[0].mxu0
      %v713 = vadd.f32 0.0, %v712
      %v714 = vpop.f32.mrb[0].mxu0
      %v715 = vpop.f32.mrb[0].mxu0
      %v716 = vpop.f32.mrb[0].mxu0
      %717 = vdwg.mxu0
      %719 = vrot.lane.b32.xlu0 %v489, 32
      %v720 = vpop.permute.xlu0 %719
      %723 = vrot.lane.b32.xlu0 %v601, 64
      %v724 = vpop.permute.xlu0 %723
      %727 = vrot.lane.b32.xlu0 %v713, 96
      %v728 = vpop.permute.xlu0 %727
      %v730 = vsel %vm264, %v368, %v720
      %vm731 = vcmask 523264
      %v732 = vsel %vm731, %v730, %v724
      %vm733 = vcmask 785408
      %v734 = vsel %vm733, %v732, %v728
      %v735 = vpack.c.bf16 %v734, %v734
      %736 = vst [vmem:[%s258] sm:$0xf] %v735
      %p737 = scmp.lt.s32.totalorder %s15, 1
      %s738 = scalar_select %p737, %s15, 1
      %s739 = smul.addr %s738, 4
      %s740 = scalar_lea.vmem %s4, %s739
      // Predicated region
      $region37: #{transformer_forward.26} parent=35 // pred_check
        %p741 = pneg %p137
      $region38: #{transformer_forward.26} parent=35 // pred_check_branch
        %743 = sbr.rel (%p741) target = $region40
      $region39: #{transformer_forward.26} parent=35 // pred_region
        _
      $region40: #{transformer_forward.26} parent=35 // pred_fallthru
        _
    $region36: #{transformer_forward.26} parent=5 // pred_fallthru
      _
    %p744 = scmp.le.s32.totalorder 2, %s10
    // Predicated region
    $region41: #{transformer_forward.26} parent=5 // pred_check
      %p745 = pneg %p744
    $region42: #{transformer_forward.26} parent=5 // pred_check_branch
      %747 = sbr.rel (%p745) target = $region44
    $region43: #{transformer_forward.26} parent=5 // pred_region
      %s748 = ssub.s32 %s10, 2
      // Predicated region
      $region45: #{transformer_forward.26} parent=43 // pred_check
        %p749 = pneg %p143
      $region46: #{transformer_forward.26} parent=43 // pred_check_branch
        %751 = sbr.rel (%p749) target = $region48
      $region47: #{transformer_forward.26} parent=43 // pred_region
        %p752 = scmp.lt.s32.totalorder %s16, 1
        %s753 = scalar_select %p752, %s16, 1
        %s754 = smul.addr %s753, 4
        %s755 = scalar_lea.vmem %s4, %s754
      $region48: #{transformer_forward.26} parent=43 // pred_fallthru
        _
    $region44: #{transformer_forward.26} parent=5 // pred_fallthru
      _
  $region6: #{transformer_forward.26} parent=0 // loop_footer
    %s14 = sadd.s32 1, %s10
  $region7: #{transformer_forward.26} parent=0 // loop_footer_branch
    %9 = sbr.rel target = $region3
  $region8: #{transformer_forward.26} parent=0 // loop_exit
    _

// kernel: transformer_forward.37
$region0: #{transformer_forward.37}
  #allocation0 [shape = 'u32[]', space=smem, size = 0x4, offset = 0x4, fixed_abs, tag = 'smem constant byte address 0x4 - core index']
  #allocation1 [shape = 'u32[144,128]{1,0:T(1,128)}', space=vmem, size = 0x12000, scoped, tag = 'internal scratch']
  %s0 = inlined_call_operand.vmem [shape: bf16[16,128], index: 0, kind: input, shape index: {}]
  %s1 = inlined_call_operand.vmem [shape: bf16[128,256], index: 1, kind: input, shape index: {}]
  %s2 = inlined_call_operand.vmem [shape: f32[1,256], index: 2, kind: input, shape index: {}]
  %s3 = inlined_call_operand.vmem [shape: bf16[16,256], index: 3, kind: output, shape index: {}]
  %s4 = sld [smem:[#allocation0]]
  $region22: #{transformer_forward.37} parent=0
    _
  %s6 = ssub.s32 1, %s4
  %s7 = scalar_select 0, %s6, %s4
  // Predicated region
  $region2: #{transformer_forward.37} parent=0 // pred_check
    _
  $region3: #{transformer_forward.37} parent=0 // pred_check_branch
    %9 = sbr.rel (0) target = $region5
  $region4: #{transformer_forward.37} parent=0 // pred_region
    _
  $region5: #{transformer_forward.37} parent=0 // pred_fallthru
    _
  // Predicated region
  $region6: #{transformer_forward.37} parent=0 // pred_check
    _
  $region7: #{transformer_forward.37} parent=0 // pred_check_branch
    %11 = sbr.rel (0) target = $region9
  $region8: #{transformer_forward.37} parent=0 // pred_region
    _
  $region9: #{transformer_forward.37} parent=0 // pred_fallthru
    _
  // Predicated region
  $region10: #{transformer_forward.37} parent=0 // pred_check
    _
  $region11: #{transformer_forward.37} parent=0 // pred_check_branch
    %13 = sbr.rel (0) target = $region13
  $region12: #{transformer_forward.37} parent=0 // pred_region
    _
  $region13: #{transformer_forward.37} parent=0 // pred_fallthru
    _
  %v15 = vld [vmem:[%s0] sm:$0xf]
  %v16 = vld [vmem:[%s0 + $0x4] sm:$0xf]
  %v17 = vld [vmem:[%s1] sm:$0xff]
  %v18 = vld [vmem:[%s1 + $0x8] sm:$0xff]
  %v19 = vld [vmem:[%s1 + $0x10] sm:$0xff]
  %v20 = vld [vmem:[%s1 + $0x18] sm:$0xff]
  %v21 = vld [vmem:[%s1 + $0x20] sm:$0xff]
  %v22 = vld [vmem:[%s1 + $0x28] sm:$0xff]
  %v23 = vld [vmem:[%s1 + $0x30] sm:$0xff]
  %v24 = vld [vmem:[%s1 + $0x38] sm:$0xff]
  %v25 = vld [vmem:[%s1 + $0x40] sm:$0xff]
  %v26 = vld [vmem:[%s1 + $0x48] sm:$0xff]
  %v27 = vld [vmem:[%s1 + $0x50] sm:$0xff]
  %v28 = vld [vmem:[%s1 + $0x58] sm:$0xff]
  %v29 = vld [vmem:[%s1 + $0x60] sm:$0xff]
  %v30 = vld [vmem:[%s1 + $0x68] sm:$0xff]
  %v31 = vld [vmem:[%s1 + $0x70] sm:$0xff]
  %v32 = vld [vmem:[%s1 + $0x78] sm:$0xff]
  %v33 = vld [vmem:[%s2] sm:$0x3]
  %v35 = vlaneseq
  %v36 = vshrl.u32 %v35, 7
  %v37 = vsub.s32 0, %v36
  %v38 = vrot.slane %v33, %v37
  %v39 = vlaneseq
  %v40 = vshrl.u32 %v39, 7
  %v41 = vsub.s32 1, %v40
  %v42 = vrot.slane %v33, %v41
  %v47 = vunpack.c.l.b16 %v15
  %v48 = vunpack.c.l.b16 %v16
  %v49 = vpack.c.b16 %v48, %v47
  %v67 = vunpack.c.l.b16 %v17
  %v68 = vunpack.c.h.b16 %v17
  %v69 = vunpack.c.l.b16 %v18
  %v70 = vunpack.c.h.b16 %v18
  %v71 = vunpack.c.l.b16 %v19
  %v72 = vunpack.c.h.b16 %v19
  %v73 = vunpack.c.l.b16 %v20
  %v74 = vunpack.c.h.b16 %v20
  %v75 = vunpack.c.l.b16 %v21
  %v76 = vunpack.c.h.b16 %v21
  %v77 = vunpack.c.l.b16 %v22
  %v78 = vunpack.c.h.b16 %v22
  %v79 = vunpack.c.l.b16 %v23
  %v80 = vunpack.c.h.b16 %v23
  %v81 = vunpack.c.l.b16 %v24
  %v82 = vunpack.c.h.b16 %v24
  %v83 = vunpack.c.l.b16 %v25
  %v84 = vunpack.c.h.b16 %v25
  %v85 = vunpack.c.l.b16 %v26
  %v86 = vunpack.c.h.b16 %v26
  %v87 = vunpack.c.l.b16 %v27
  %v88 = vunpack.c.h.b16 %v27
  %v89 = vunpack.c.l.b16 %v28
  %v90 = vunpack.c.h.b16 %v28
  %v91 = vunpack.c.l.b16 %v29
  %v92 = vunpack.c.h.b16 %v29
  %v93 = vunpack.c.l.b16 %v30
  %v94 = vunpack.c.h.b16 %v30
  %v95 = vunpack.c.l.b16 %v31
  %v96 = vunpack.c.h.b16 %v31
  %v97 = vunpack.c.l.b16 %v32
  %v98 = vunpack.c.h.b16 %v32
  %v99 = vpack.c.b16 %v69, %v67
  %v100 = vpack.c.b16 %v70, %v68
  %v101 = vpack.c.b16 %v73, %v71
  %v102 = vpack.c.b16 %v74, %v72
  %v103 = vpack.c.b16 %v77, %v75
  %v104 = vpack.c.b16 %v78, %v76
  %v105 = vpack.c.b16 %v81, %v79
  %v106 = vpack.c.b16 %v82, %v80
  %v107 = vpack.c.b16 %v85, %v83
  %v108 = vpack.c.b16 %v86, %v84
  %v109 = vpack.c.b16 %v89, %v87
  %v110 = vpack.c.b16 %v90, %v88
  %v111 = vpack.c.b16 %v93, %v91
  %v112 = vpack.c.b16 %v94, %v92
  %v113 = vpack.c.b16 %v97, %v95
  %v114 = vpack.c.b16 %v98, %v96
  %131 = vmatprep.subr.bf16.mxu0 %v100
  %132 = vmatpush1.bf16.msra.mxu0 %v99
  %133 = vmatprep.subr.bf16.mxu0 %v102
  %134 = vmatpush1.bf16.msra.mxu0 %v101
  %135 = vmatprep.subr.bf16.mxu0 %v104
  %136 = vmatpush1.bf16.msra.mxu0 %v103
  %137 = vmatprep.subr.bf16.mxu0 %v106
  %138 = vmatpush1.bf16.msra.mxu0 %v105
  %139 = vmatprep.subr.bf16.mxu0 %v108
  %140 = vmatpush1.bf16.msra.mxu0 %v107
  %141 = vmatprep.subr.bf16.mxu0 %v110
  %142 = vmatpush1.bf16.msra.mxu0 %v109
  %143 = vmatprep.subr.bf16.mxu0 %v112
  %144 = vmatpush1.bf16.msra.mxu0 %v111
  %145 = vmatprep.subr.bf16.mxu0 %v114
  %146 = vmatpush1.bf16.msra.mxu0 %v113
  %147 = vmatprep.subr.bf16.mxu0 0
  %148 = vmatpush1.bf16.msra.mxu0 0
  %149 = vmatprep.subr.bf16.mxu0 0
  %150 = vmatpush1.bf16.msra.mxu0 0
  %151 = vmatprep.subr.bf16.mxu0 0
  %152 = vmatpush1.bf16.msra.mxu0 0
  %153 = vmatprep.subr.bf16.mxu0 0
  %154 = vmatpush1.bf16.msra.mxu0 0
  %155 = vmatprep.subr.bf16.mxu0 0
  %156 = vmatpush1.bf16.msra.mxu0 0
  %157 = vmatprep.subr.bf16.mxu0 0
  %158 = vmatpush1.bf16.msra.mxu0 0
  %159 = vmatprep.subr.bf16.mxu0 0
  %160 = vmatpush1.bf16.msra.mxu0 0
  %161 = vmatprep.subr.bf16.mxu0 0
  %162 = vmatpush1.bf16.msra.mxu0 0
  %163 = vmatprep.mubr.bf16.mxu0 0
  %164 = vmatmul.mubr.bf16.gmra.mrb[0].mxu0 %v49
  %v165 = vpop.f32.mrb[0].mxu0
  %v166 = vadd.f32 %v38, %v165
  %v167 = vpop.f32.mrb[0].mxu0
  %v168 = vadd.f32 %v42, %v167
  %v169 = vpop.f32.mrb[0].mxu0
  %v170 = vadd.f32 %v38, %v169
  %v171 = vpop.f32.mrb[0].mxu0
  %v172 = vadd.f32 %v42, %v171
  %173 = vdwg.mxu0
  %v174 = vpack.c.bf16 %v170, %v166
  %v175 = vpack.c.bf16 %v172, %v168
  %v178 = vunpack.c.l.b16 %v174
  %v179 = vunpack.c.l.b16 %v175
  %v180 = vunpack.c.h.b16 %v174
  %v181 = vunpack.c.h.b16 %v175
  %v182 = vpack.c.b16 %v179, %v178
  %v183 = vpack.c.b16 %v181, %v180
  %186 = vst [vmem:[%s3] sm:$0xff] %v182
  %187 = vst [vmem:[%s3 + $0x8] sm:$0xff] %v183
  // Predicated region
  $region14: #{transformer_forward.37} parent=0 // pred_check
    _
  $region15: #{transformer_forward.37} parent=0 // pred_check_branch
    %189 = sbr.rel (0) target = $region17
  $region16: #{transformer_forward.37} parent=0 // pred_region
    _
  $region17: #{transformer_forward.37} parent=0 // pred_fallthru
    _
  // Predicated region
  $region18: #{transformer_forward.37} parent=0 // pred_check
    _
  $region19: #{transformer_forward.37} parent=0 // pred_check_branch
    %191 = sbr.rel (0) target = $region21
  $region20: #{transformer_forward.37} parent=0 // pred_region
    _
  $region21: #{transformer_forward.37} parent=0 // pred_fallthru
    _

// kernel: transformer_forward.36
$region0: #{transformer_forward.36}
  #allocation0 [shape = 'u32[]', space=smem, size = 0x4, offset = 0x4, fixed_abs, tag = 'smem constant byte address 0x4 - core index']
  #allocation1 [shape = 'u32[144,128]{1,0:T(1,128)}', space=vmem, size = 0x12000, scoped, tag = 'internal scratch']
  %s0 = inlined_call_operand.vmem [shape: bf16[16,128], index: 0, kind: input, shape index: {}]
  %s1 = inlined_call_operand.vmem [shape: bf16[128,128], index: 1, kind: input, shape index: {}]
  %s2 = inlined_call_operand.vmem [shape: f32[1,128], index: 2, kind: input, shape index: {}]
  %s3 = inlined_call_operand.vmem [shape: bf16[16,128], index: 3, kind: output, shape index: {}]
  %s4 = sld [smem:[#allocation0]]
  $region22: #{transformer_forward.36} parent=0
    _
  %s6 = ssub.s32 1, %s4
  %s7 = scalar_select 0, %s6, %s4
  // Predicated region
  $region2: #{transformer_forward.36} parent=0 // pred_check
    _
  $region3: #{transformer_forward.36} parent=0 // pred_check_branch
    %9 = sbr.rel (0) target = $region5
  $region4: #{transformer_forward.36} parent=0 // pred_region
    _
  $region5: #{transformer_forward.36} parent=0 // pred_fallthru
    _
  // Predicated region
  $region6: #{transformer_forward.36} parent=0 // pred_check
    _
  $region7: #{transformer_forward.36} parent=0 // pred_check_branch
    %11 = sbr.rel (0) target = $region9
  $region8: #{transformer_forward.36} parent=0 // pred_region
    _
  $region9: #{transformer_forward.36} parent=0 // pred_fallthru
    _
  // Predicated region
  $region10: #{transformer_forward.36} parent=0 // pred_check
    _
  $region11: #{transformer_forward.36} parent=0 // pred_check_branch
    %13 = sbr.rel (0) target = $region13
  $region12: #{transformer_forward.36} parent=0 // pred_region
    _
  $region13: #{transformer_forward.36} parent=0 // pred_fallthru
    _
  %v15 = vld [vmem:[%s0] sm:$0xf]
  %v16 = vld [vmem:[%s0 + $0x4] sm:$0xf]
  %v17 = vld [vmem:[%s1] sm:$0xf]
  %v18 = vld [vmem:[%s1 + $0x4] sm:$0xf]
  %v19 = vld [vmem:[%s1 + $0x8] sm:$0xf]
  %v20 = vld [vmem:[%s1 + $0xc] sm:$0xf]
  %v21 = vld [vmem:[%s1 + $0x10] sm:$0xf]
  %v22 = vld [vmem:[%s1 + $0x14] sm:$0xf]
  %v23 = vld [vmem:[%s1 + $0x18] sm:$0xf]
  %v24 = vld [vmem:[%s1 + $0x1c] sm:$0xf]
  %v25 = vld [vmem:[%s1 + $0x20] sm:$0xf]
  %v26 = vld [vmem:[%s1 + $0x24] sm:$0xf]
  %v27 = vld [vmem:[%s1 + $0x28] sm:$0xf]
  %v28 = vld [vmem:[%s1 + $0x2c] sm:$0xf]
  %v29 = vld [vmem:[%s1 + $0x30] sm:$0xf]
  %v30 = vld [vmem:[%s1 + $0x34] sm:$0xf]
  %v31 = vld [vmem:[%s1 + $0x38] sm:$0xf]
  %v32 = vld [vmem:[%s1 + $0x3c] sm:$0xf]
  %v33 = vld [vmem:[%s2] sm:$0x1]
  %v35 = vlaneseq
  %v36 = vshrl.u32 %v35, 7
  %v37 = vsub.s32 0, %v36
  %v38 = vrot.slane %v33, %v37
  %v42 = vunpack.c.l.b16 %v15
  %v43 = vunpack.c.l.b16 %v16
  %v44 = vpack.c.b16 %v43, %v42
  %v62 = vunpack.c.l.b16 %v17
  %v63 = vunpack.c.l.b16 %v18
  %v64 = vunpack.c.l.b16 %v19
  %v65 = vunpack.c.l.b16 %v20
  %v66 = vunpack.c.l.b16 %v21
  %v67 = vunpack.c.l.b16 %v22
  %v68 = vunpack.c.l.b16 %v23
  %v69 = vunpack.c.l.b16 %v24
  %v70 = vunpack.c.l.b16 %v25
  %v71 = vunpack.c.l.b16 %v26
  %v72 = vunpack.c.l.b16 %v27
  %v73 = vunpack.c.l.b16 %v28
  %v74 = vunpack.c.l.b16 %v29
  %v75 = vunpack.c.l.b16 %v30
  %v76 = vunpack.c.l.b16 %v31
  %v77 = vunpack.c.l.b16 %v32
  %v78 = vpack.c.b16 %v63, %v62
  %v79 = vpack.c.b16 %v65, %v64
  %v80 = vpack.c.b16 %v67, %v66
  %v81 = vpack.c.b16 %v69, %v68
  %v82 = vpack.c.b16 %v71, %v70
  %v83 = vpack.c.b16 %v73, %v72
  %v84 = vpack.c.b16 %v75, %v74
  %v85 = vpack.c.b16 %v77, %v76
  %94 = vmatprep.subr.bf16.mxu0 0
  %95 = vmatpush1.bf16.msra.mxu0 %v78
  %96 = vmatprep.subr.bf16.mxu0 0
  %97 = vmatpush1.bf16.msra.mxu0 %v79
  %98 = vmatprep.subr.bf16.mxu0 0
  %99 = vmatpush1.bf16.msra.mxu0 %v80
  %100 = vmatprep.subr.bf16.mxu0 0
  %101 = vmatpush1.bf16.msra.mxu0 %v81
  %102 = vmatprep.subr.bf16.mxu0 0
  %103 = vmatpush1.bf16.msra.mxu0 %v82
  %104 = vmatprep.subr.bf16.mxu0 0
  %105 = vmatpush1.bf16.msra.mxu0 %v83
  %106 = vmatprep.subr.bf16.mxu0 0
  %107 = vmatpush1.bf16.msra.mxu0 %v84
  %108 = vmatprep.subr.bf16.mxu0 0
  %109 = vmatpush1.bf16.msra.mxu0 %v85
  %110 = vmatprep.subr.bf16.mxu0 0
  %111 = vmatpush1.bf16.msra.mxu0 0
  %112 = vmatprep.subr.bf16.mxu0 0
  %113 = vmatpush1.bf16.msra.mxu0 0
  %114 = vmatprep.subr.bf16.mxu0 0
  %115 = vmatpush1.bf16.msra.mxu0 0
  %116 = vmatprep.subr.bf16.mxu0 0
  %117 = vmatpush1.bf16.msra.mxu0 0
  %118 = vmatprep.subr.bf16.mxu0 0
  %119 = vmatpush1.bf16.msra.mxu0 0
  %120 = vmatprep.subr.bf16.mxu0 0
  %121 = vmatpush1.bf16.msra.mxu0 0
  %122 = vmatprep.subr.bf16.mxu0 0
  %123 = vmatpush1.bf16.msra.mxu0 0
  %124 = vmatprep.subr.bf16.mxu0 0
  %125 = vmatpush1.bf16.msra.mxu0 0
  %126 = vmatprep.mubr.bf16.mxu0 0
  %127 = vmatmul.mubr.bf16.gmra.mrb[0].mxu0 %v44
  %v128 = vpop.f32.mrb[0].mxu0
  %v129 = vadd.f32 %v38, %v128
  %v130 = vpop.f32.mrb[0].mxu0
  %v131 = vpop.f32.mrb[0].mxu0
  %v132 = vadd.f32 %v38, %v131
  %v133 = vpop.f32.mrb[0].mxu0
  %134 = vdwg.mxu0
  %v135 = vpack.c.bf16 %v132, %v129
  %v137 = vunpack.c.l.b16 %v135
  %v138 = vunpack.c.h.b16 %v135
  %v139 = vpack.c.b16 %v137, %v137
  %v140 = vpack.c.b16 %v138, %v138
  %143 = vst [vmem:[%s3] sm:$0xf] %v139
  %144 = vst [vmem:[%s3 + $0x4] sm:$0xf] %v140
  // Predicated region
  $region14: #{transformer_forward.36} parent=0 // pred_check
    _
  $region15: #{transformer_forward.36} parent=0 // pred_check_branch
    %146 = sbr.rel (0) target = $region17
  $region16: #{transformer_forward.36} parent=0 // pred_region
    _
  $region17: #{transformer_forward.36} parent=0 // pred_fallthru
    _
  // Predicated region
  $region18: #{transformer_forward.36} parent=0 // pred_check
    _
  $region19: #{transformer_forward.36} parent=0 // pred_check_branch
    %148 = sbr.rel (0) target = $region21
  $region20: #{transformer_forward.36} parent=0 // pred_region
    _
  $region21: #{transformer_forward.36} parent=0 // pred_fallthru
    _

// kernel: transformer_forward.38
$region0: #{transformer_forward.38}
  #allocation0 [shape = 'u32[]', space=smem, size = 0x4, offset = 0x4, fixed_abs, tag = 'smem constant byte address 0x4 - core index']
  #allocation1 [shape = 'u32[144,128]{1,0:T(1,128)}', space=vmem, size = 0x12000, scoped, tag = 'internal scratch']
  %s0 = inlined_call_operand.vmem [shape: bf16[2,7,128], index: 0, kind: input, shape index: {}]
  %s1 = inlined_call_operand.vmem [shape: bf16[2,8,256], index: 1, kind: input, shape index: {}, may-alias: {1,2}]
  %s2 = inlined_call_operand.vmem [shape: bf16[2,8,256], index: 2, kind: input, shape index: {}, may-alias: {1,2}]
  %s3 = inlined_call_operand.vmem [shape: f32[2,7,8], index: 3, kind: input, shape index: {}]
  %s4 = inlined_call_operand.vmem [shape: bf16[2,7,128], index: 4, kind: output, shape index: {}]
  %s5 = sld [smem:[#allocation0]]
  $region49: #{transformer_forward.38} parent=0
    _
  %s7 = ssub.s32 1, %s5
  %s8 = scalar_select 0, %s7, %s5
  loop: start=0, step=1, limit=4
  $region2: #{transformer_forward.38} parent=0 // loop_pre_header
    _
  $region3: #{transformer_forward.38} parent=0 // loop_header
    %s10 = sphi 0, %s14
    %p11 = scmp.ge.s32.totalorder %s10, 4
    %s20 = sphi 0, %s22
    %s23 = sphi 0, %s20
    %s24 = sphi 0, %s23
    %s40 = sphi 0, %s24
    %s46 = sphi 0, %s48
    %s49 = sphi 0, %s46
    %s50 = sphi 0, %s49
    %s66 = sphi 0, %s50
    %s72 = sphi 0, %s74
    %s75 = sphi 0, %s72
    %s76 = sphi 0, %s75
    %s92 = sphi 0, %s76
    %s98 = sphi 0, %s100
    %s101 = sphi 0, %s98
    %s102 = sphi 0, %s101
    %s118 = sphi 0, %s102
    %s124 = sphi 0, %s126
    %s127 = sphi 0, %s124
    %s128 = sphi 0, %s127
    %s144 = sphi 0, %s128
  $region4: #{transformer_forward.38} parent=0 // loop_header_branch
    %13 = sbr.rel (%p11) target = $region8
  $region5: #{transformer_forward.38} parent=0 // loop_body
    %s15 = ssub.s32 %s10, 1
    %s16 = ssub.s32 %s10, 2
    %s17 = sadd.s32 %s10, 1
    %s18 = ssub.s32 %s10, %s17
    %p19 = scmp.eq.s32.totalorder %s18, 0
    %s21 = sadd.s32 %s20, 1
    %s22 = scalar_select %p19, %s20, %s21
    %p25 = pneg %p19
    %p26 = scmp.eq.s32.totalorder %s10, 1
    %p27 = por %p25, %p26
    %p28 = scmp.ne.s32.totalorder %s20, %s23
    %p29 = scmp.eq.s32.totalorder %s10, 0
    %p30 = por %p28, %p29
    %p31 = scmp.ne.s32.totalorder %s20, %s23
    %p32 = scmp.eq.s32.totalorder %s15, 1
    %p33 = por %p31, %p32
    %p34 = scmp.ne.s32.totalorder %s23, %s24
    %p35 = scmp.eq.s32.totalorder %s15, 0
    %p36 = por %p34, %p35
    %p37 = scmp.ne.s32.totalorder %s23, %s24
    %p38 = scmp.eq.s32.totalorder %s16, 1
    %p39 = por %p37, %p38
    %p41 = scmp.ne.s32.totalorder %s24, %s40
    %p42 = scmp.eq.s32.totalorder %s16, 0
    %p43 = por %p41, %p42
    %s44 = ssub.s32 %s10, %s17
    %p45 = scmp.eq.s32.totalorder %s44, 0
    %s47 = sadd.s32 %s46, 1
    %s48 = scalar_select %p45, %s46, %s47
    %p51 = pneg %p45
    %p52 = scmp.eq.s32.totalorder %s10, 1
    %p53 = por %p51, %p52
    %p54 = scmp.ne.s32.totalorder %s46, %s49
    %p55 = scmp.eq.s32.totalorder %s10, 0
    %p56 = por %p54, %p55
    %p57 = scmp.ne.s32.totalorder %s46, %s49
    %p58 = scmp.eq.s32.totalorder %s15, 1
    %p59 = por %p57, %p58
    %p60 = scmp.ne.s32.totalorder %s49, %s50
    %p61 = scmp.eq.s32.totalorder %s15, 0
    %p62 = por %p60, %p61
    %p63 = scmp.ne.s32.totalorder %s49, %s50
    %p64 = scmp.eq.s32.totalorder %s16, 1
    %p65 = por %p63, %p64
    %p67 = scmp.ne.s32.totalorder %s50, %s66
    %p68 = scmp.eq.s32.totalorder %s16, 0
    %p69 = por %p67, %p68
    %s70 = ssub.s32 %s10, %s17
    %p71 = scmp.eq.s32.totalorder %s70, 0
    %s73 = sadd.s32 %s72, 1
    %s74 = scalar_select %p71, %s72, %s73
    %p77 = pneg %p71
    %p78 = scmp.eq.s32.totalorder %s10, 1
    %p79 = por %p77, %p78
    %p80 = scmp.ne.s32.totalorder %s72, %s75
    %p81 = scmp.eq.s32.totalorder %s10, 0
    %p82 = por %p80, %p81
    %p83 = scmp.ne.s32.totalorder %s72, %s75
    %p84 = scmp.eq.s32.totalorder %s15, 1
    %p85 = por %p83, %p84
    %p86 = scmp.ne.s32.totalorder %s75, %s76
    %p87 = scmp.eq.s32.totalorder %s15, 0
    %p88 = por %p86, %p87
    %p89 = scmp.ne.s32.totalorder %s75, %s76
    %p90 = scmp.eq.s32.totalorder %s16, 1
    %p91 = por %p89, %p90
    %p93 = scmp.ne.s32.totalorder %s76, %s92
    %p94 = scmp.eq.s32.totalorder %s16, 0
    %p95 = por %p93, %p94
    %s96 = ssub.s32 %s10, %s17
    %p97 = scmp.eq.s32.totalorder %s96, 0
    %s99 = sadd.s32 %s98, 1
    %s100 = scalar_select %p97, %s98, %s99
    %p103 = pneg %p97
    %p104 = scmp.eq.s32.totalorder %s10, 1
    %p105 = por %p103, %p104
    %p106 = scmp.ne.s32.totalorder %s98, %s101
    %p107 = scmp.eq.s32.totalorder %s10, 0
    %p108 = por %p106, %p107
    %p109 = scmp.ne.s32.totalorder %s98, %s101
    %p110 = scmp.eq.s32.totalorder %s15, 1
    %p111 = por %p109, %p110
    %p112 = scmp.ne.s32.totalorder %s101, %s102
    %p113 = scmp.eq.s32.totalorder %s15, 0
    %p114 = por %p112, %p113
    %p115 = scmp.ne.s32.totalorder %s101, %s102
    %p116 = scmp.eq.s32.totalorder %s16, 1
    %p117 = por %p115, %p116
    %p119 = scmp.ne.s32.totalorder %s102, %s118
    %p120 = scmp.eq.s32.totalorder %s16, 0
    %p121 = por %p119, %p120
    %s122 = ssub.s32 %s10, %s17
    %p123 = scmp.eq.s32.totalorder %s122, 0
    %s125 = sadd.s32 %s124, 1
    %s126 = scalar_select %p123, %s124, %s125
    %p129 = pneg %p123
    %p130 = scmp.eq.s32.totalorder %s10, 1
    %p131 = por %p129, %p130
    %p132 = scmp.ne.s32.totalorder %s124, %s127
    %p133 = scmp.eq.s32.totalorder %s10, 0
    %p134 = por %p132, %p133
    %p135 = scmp.ne.s32.totalorder %s124, %s127
    %p136 = scmp.eq.s32.totalorder %s15, 1
    %p137 = por %p135, %p136
    %p138 = scmp.ne.s32.totalorder %s127, %s128
    %p139 = scmp.eq.s32.totalorder %s15, 0
    %p140 = por %p138, %p139
    %p141 = scmp.ne.s32.totalorder %s127, %s128
    %p142 = scmp.eq.s32.totalorder %s16, 1
    %p143 = por %p141, %p142
    %p145 = scmp.ne.s32.totalorder %s128, %s144
    %p146 = scmp.eq.s32.totalorder %s16, 0
    %p147 = por %p145, %p146
    %p148 = scmp.le.s32.totalorder 1, %s10
    %p149 = scmp.lt.s32.totalorder %s10, 3
    %p150 = pnand %p148, %p149
    %p151 = pneg %p150
    // Predicated region
    $region9: #{transformer_forward.38} parent=5 // pred_check
      _
    $region10: #{transformer_forward.38} parent=5 // pred_check_branch
      %153 = sbr.rel (%p150) target = $region12
    $region11: #{transformer_forward.38} parent=5 // pred_region
      %s154 = ssub.s32 %s10, 1
    $region12: #{transformer_forward.38} parent=5 // pred_fallthru
      _
    %p155 = scmp.lt.s32.totalorder %s10, 2
    // Predicated region
    $region13: #{transformer_forward.38} parent=5 // pred_check
      %p156 = pneg %p155
    $region14: #{transformer_forward.38} parent=5 // pred_check_branch
      %158 = sbr.rel (%p156) target = $region16
    $region15: #{transformer_forward.38} parent=5 // pred_region
      // Predicated region
      $region17: #{transformer_forward.38} parent=15 // pred_check
        %p159 = pneg %p30
      $region18: #{transformer_forward.38} parent=15 // pred_check_branch
        %161 = sbr.rel (%p159) target = $region20
      $region19: #{transformer_forward.38} parent=15 // pred_region
        %p162 = scmp.lt.s32.totalorder %s10, 1
        %s163 = scalar_select %p162, %s10, 1
        %s164 = smul.addr %s163, 4
        %s165 = scalar_lea.vmem %s0, %s164
      $region20: #{transformer_forward.38} parent=15 // pred_fallthru
        _
      // Predicated region
      $region21: #{transformer_forward.38} parent=15 // pred_check
        %p166 = pneg %p56
      $region22: #{transformer_forward.38} parent=15 // pred_check_branch
        %168 = sbr.rel (%p166) target = $region24
      $region23: #{transformer_forward.38} parent=15 // pred_region
        %p169 = scmp.lt.s32.totalorder %s10, 1
        %s170 = scalar_select %p169, %s10, 1
        %s171 = smul.addr %s170, 2
        %s172 = smul.addr %s171, 4
        %s173 = scalar_lea.vmem %s1, %s172
      $region24: #{transformer_forward.38} parent=15 // pred_fallthru
        _
      // Predicated region
      $region25: #{transformer_forward.38} parent=15 // pred_check
        %p174 = pneg %p82
      $region26: #{transformer_forward.38} parent=15 // pred_check_branch
        %176 = sbr.rel (%p174) target = $region28
      $region27: #{transformer_forward.38} parent=15 // pred_region
        %p177 = scmp.lt.s32.totalorder %s10, 1
        %s178 = scalar_select %p177, %s10, 1
        %s179 = smul.addr %s178, 2
        %s180 = sadd.s32 1, %s179
        %s181 = smul.addr %s180, 4
        %s182 = scalar_lea.vmem %s2, %s181
      $region28: #{transformer_forward.38} parent=15 // pred_fallthru
        _
      // Predicated region
      $region29: #{transformer_forward.38} parent=15 // pred_check
        %p183 = pneg %p108
      $region30: #{transformer_forward.38} parent=15 // pred_check_branch
        %185 = sbr.rel (%p183) target = $region32
      $region31: #{transformer_forward.38} parent=15 // pred_region
        %p186 = scmp.lt.s32.totalorder %s10, 1
        %s187 = scalar_select %p186, %s10, 1
        %s188 = smul.addr %s187, 8
        %s189 = scalar_lea.vmem %s3, %s188
      $region32: #{transformer_forward.38} parent=15 // pred_fallthru
        _
    $region16: #{transformer_forward.38} parent=5 // pred_fallthru
      _
    %p190 = scmp.le.s32.totalorder 1, %s10
    %p191 = scmp.lt.s32.totalorder %s10, 3
    %p192 = pnand %p190, %p191
    %p193 = pneg %p192
    // Predicated region
    $region33: #{transformer_forward.38} parent=5 // pred_check
      _
    $region34: #{transformer_forward.38} parent=5 // pred_check_branch
      %195 = sbr.rel (%p192) target = $region36
    $region35: #{transformer_forward.38} parent=5 // pred_region
      %s196 = ssub.s32 %s10, 1
      %p197 = scmp.lt.s32.totalorder %s15, 1
      %s198 = scalar_select %p197, %s15, 1
      %s199 = smul.addr %s198, 4
      %s200 = scalar_lea.vmem %s0, %s199
      %p201 = pneg %p36
      %p202 = pneg %p33
      %p203 = scmp.lt.s32.totalorder %s15, 1
      %s204 = scalar_select %p203, %s15, 1
      %s205 = smul.addr %s204, 2
      %s206 = smul.addr %s205, 4
      %s207 = scalar_lea.vmem %s1, %s206
      %p208 = pneg %p62
      %p209 = pneg %p59
      %p210 = scmp.lt.s32.totalorder %s15, 1
      %s211 = scalar_select %p210, %s15, 1
      %s212 = smul.addr %s211, 2
      %s213 = sadd.s32 1, %s212
      %s214 = smul.addr %s213, 4
      %s215 = scalar_lea.vmem %s2, %s214
      %p216 = pneg %p88
      %p217 = pneg %p85
      %p218 = scmp.lt.s32.totalorder %s15, 1
      %s219 = scalar_select %p218, %s15, 1
      %s220 = smul.addr %s219, 8
      %s221 = scalar_lea.vmem %s3, %s220
      %p222 = pneg %p114
      %p223 = pneg %p111
      %p224 = pneg %p140
      %p225 = pneg %p137
      %p226 = scmp.lt.s32.totalorder %s15, 1
      %s227 = scalar_select %p226, %s15, 1
      %s228 = smul.addr %s227, 4
      %s229 = scalar_lea.vmem %s4, %s228
      %p230 = scmp.lt.s32.totalorder %s15, 1
      %s231 = scalar_select %p230, %s15, 1
      %s232 = smul.addr %s231, 4
      %s233 = scalar_lea.vmem %s0, %s232
      %p234 = scmp.lt.s32.totalorder %s15, 1
      %s235 = scalar_select %p234, %s15, 1
      %s236 = smul.addr %s235, 2
      %s237 = smul.addr %s236, 4
      %s238 = scalar_lea.vmem %s1, %s237
      %p239 = scmp.lt.s32.totalorder %s15, 1
      %s240 = scalar_select %p239, %s15, 1
      %s241 = smul.addr %s240, 2
      %s242 = sadd.s32 1, %s241
      %s243 = smul.addr %s242, 4
      %s244 = scalar_lea.vmem %s2, %s243
      %p245 = scmp.lt.s32.totalorder %s15, 1
      %s246 = scalar_select %p245, %s15, 1
      %s247 = smul.addr %s246, 8
      %s248 = scalar_lea.vmem %s3, %s247
      %p249 = scmp.lt.s32.totalorder %s15, 1
      %s250 = scalar_select %p249, %s15, 1
      %s251 = smul.addr %s250, 4
      %s252 = scalar_lea.vmem %s4, %s251
      %v254 = vld [vmem:[%s233] sm:$0xf]
      %v255 = vld [vmem:[%s238] sm:$0xf]
      %v256 = vld [vmem:[%s244] sm:$0xf]
      %v257 = vld [vmem:[%s248] sm:$0x7f]
      %vm258 = vcmask 261120
      %v260 = vsel %vm258, %v254, 0
      %v263 = vsel %vm258, %v255, 0
      %265 = vmatprep.subr.bf16.mxu0 0
      %266 = vmatpush1.bf16.xpose.msra.mxu0 %v263
      %267 = vmatprep.subr.bf16.mxu0 0
      %268 = vmatpush1.bf16.xpose.msra.mxu0 0
      %269 = vmatprep.subr.bf16.mxu0 0
      %270 = vmatpush1.bf16.xpose.msra.mxu0 0
      %271 = vmatprep.subr.bf16.mxu0 0
      %272 = vmatpush1.bf16.xpose.msra.mxu0 0
      %273 = vmatprep.subr.bf16.mxu0 0
      %274 = vmatpush1.bf16.xpose.msra.mxu0 0
      %275 = vmatprep.subr.bf16.mxu0 0
      %276 = vmatpush1.bf16.xpose.msra.mxu0 0
      %277 = vmatprep.subr.bf16.mxu0 0
      %278 = vmatpush1.bf16.xpose.msra.mxu0 0
      %279 = vmatprep.subr.bf16.mxu0 0
      %280 = vmatpush1.bf16.xpose.msra.mxu0 0
      %281 = vmatprep.subr.bf16.mxu0 0
      %282 = vmatpush1.bf16.xpose.msra.mxu0 0
      %283 = vmatprep.subr.bf16.mxu0 0
      %284 = vmatpush1.bf16.xpose.msra.mxu0 0
      %285 = vmatprep.subr.bf16.mxu0 0
      %286 = vmatpush1.bf16.xpose.msra.mxu0 0
      %287 = vmatprep.subr.bf16.mxu0 0
      %288 = vmatpush1.bf16.xpose.msra.mxu0 0
      %289 = vmatprep.subr.bf16.mxu0 0
      %290 = vmatpush1.bf16.xpose.msra.mxu0 0
      %291 = vmatprep.subr.bf16.mxu0 0
      %292 = vmatpush1.bf16.xpose.msra.mxu0 0
      %293 = vmatprep.subr.bf16.mxu0 0
      %294 = vmatpush1.bf16.xpose.msra.mxu0 0
      %295 = vmatprep.subr.bf16.mxu0 0
      %296 = vmatpush1.bf16.xpose.msra.mxu0 0
      %297 = vmatprep.mubr.bf16.mxu0 0
      %298 = vmatmul.mubr.bf16.gmra.mrb[0].mxu0 %v260
      %v299 = vpop.f32.mrb[0].mxu0
      %v300 = vadd.f32 0.0, %v299
      %v301 = vpop.f32.mrb[0].mxu0
      %v302 = vpop.f32.mrb[0].mxu0
      %v303 = vpop.f32.mrb[0].mxu0
      %304 = vdwg.mxu0
      %v305 = vmul.f32 %v300, 0.17677669
      %v306 = vadd.f32 %v305, %v257
      %vm307 = vcmask 63488
      %v308 = vsel %vm307, %v306, -inf
      %309 = vmax.xlane.f32.xlu0 %v308
      %v310 = vpop.xlane.xlu0 %309
      %v311 = vsub.f32 %v306, %v310
      %v312 = vmul.f32 %v311, 1.442695
      %v313 = vpow.pop %v312
      %v314 = vsel %vm307, %v313, 0.0
      %315 = vadd.xlane.f32.xlu0 %v314
      %v316 = vpop.xlane.xlu0 %315
      %v317 = vrcp.pop %v316
      %v318 = vmul.f32 %v313, %v317
      %v319 = vpack.c.bf16 %v318, %v318
      %vm320 = vcmask 64512
      %v322 = vsel %vm320, %v319, 0
      %vm324 = vcmask 1043456
      %v326 = vsel %vm324, %v256, 0
      %328 = vmatprep.subr.bf16.mxu0 0
      %329 = vmatpush1.bf16.msra.mxu0 %v326
      %330 = vmatprep.subr.bf16.mxu0 0
      %331 = vmatpush1.bf16.msra.mxu0 0
      %332 = vmatprep.subr.bf16.mxu0 0
      %333 = vmatpush1.bf16.msra.mxu0 0
      %334 = vmatprep.subr.bf16.mxu0 0
      %335 = vmatpush1.bf16.msra.mxu0 0
      %336 = vmatprep.subr.bf16.mxu0 0
      %337 = vmatpush1.bf16.msra.mxu0 0
      %338 = vmatprep.subr.bf16.mxu0 0
      %339 = vmatpush1.bf16.msra.mxu0 0
      %340 = vmatprep.subr.bf16.mxu0 0
      %341 = vmatpush1.bf16.msra.mxu0 0
      %342 = vmatprep.subr.bf16.mxu0 0
      %343 = vmatpush1.bf16.msra.mxu0 0
      %344 = vmatprep.subr.bf16.mxu0 0
      %345 = vmatpush1.bf16.msra.mxu0 0
      %346 = vmatprep.subr.bf16.mxu0 0
      %347 = vmatpush1.bf16.msra.mxu0 0
      %348 = vmatprep.subr.bf16.mxu0 0
      %349 = vmatpush1.bf16.msra.mxu0 0
      %350 = vmatprep.subr.bf16.mxu0 0
      %351 = vmatpush1.bf16.msra.mxu0 0
      %352 = vmatprep.subr.bf16.mxu0 0
      %353 = vmatpush1.bf16.msra.mxu0 0
      %354 = vmatprep.subr.bf16.mxu0 0
      %355 = vmatpush1.bf16.msra.mxu0 0
      %356 = vmatprep.subr.bf16.mxu0 0
      %357 = vmatpush1.bf16.msra.mxu0 0
      %358 = vmatprep.subr.bf16.mxu0 0
      %359 = vmatpush1.bf16.msra.mxu0 0
      %360 = vmatprep.mubr.bf16.mxu0 0
      %361 = vmatmul.mubr.bf16.gmra.mrb[0].mxu0 %v322
      %v362 = vpop.f32.mrb[0].mxu0
      %v363 = vadd.f32 0.0, %v362
      %v364 = vpop.f32.mrb[0].mxu0
      %v365 = vpop.f32.mrb[0].mxu0
      %v366 = vpop.f32.mrb[0].mxu0
      %367 = vdwg.mxu0
      %v369 = vunpack.c.l.b16 %v254
      %v370 = vpack.c.b16 %v369, %v369
      %371 = vrot.lane.b32.xlu0 %v370, 96
      %v372 = vpop.permute.xlu0 %371
      %v374 = vunpack.c.l.b16 %v255
      %v375 = vpack.c.b16 %v374, %v374
      %376 = vrot.lane.b32.xlu0 %v375, 96
      %v377 = vpop.permute.xlu0 %376
      %v379 = vsel %vm258, %v372, 0
      %v382 = vsel %vm258, %v377, 0
      %384 = vmatprep.subr.bf16.mxu0 0
      %385 = vmatpush1.bf16.xpose.msra.mxu0 %v382
      %386 = vmatprep.subr.bf16.mxu0 0
      %387 = vmatpush1.bf16.xpose.msra.mxu0 0
      %388 = vmatprep.subr.bf16.mxu0 0
      %389 = vmatpush1.bf16.xpose.msra.mxu0 0
      %390 = vmatprep.subr.bf16.mxu0 0
      %391 = vmatpush1.bf16.xpose.msra.mxu0 0
      %392 = vmatprep.subr.bf16.mxu0 0
      %393 = vmatpush1.bf16.xpose.msra.mxu0 0
      %394 = vmatprep.subr.bf16.mxu0 0
      %395 = vmatpush1.bf16.xpose.msra.mxu0 0
      %396 = vmatprep.subr.bf16.mxu0 0
      %397 = vmatpush1.bf16.xpose.msra.mxu0 0
      %398 = vmatprep.subr.bf16.mxu0 0
      %399 = vmatpush1.bf16.xpose.msra.mxu0 0
      %400 = vmatprep.subr.bf16.mxu0 0
      %401 = vmatpush1.bf16.xpose.msra.mxu0 0
      %402 = vmatprep.subr.bf16.mxu0 0
      %403 = vmatpush1.bf16.xpose.msra.mxu0 0
      %404 = vmatprep.subr.bf16.mxu0 0
      %405 = vmatpush1.bf16.xpose.msra.mxu0 0
      %406 = vmatprep.subr.bf16.mxu0 0
      %407 = vmatpush1.bf16.xpose.msra.mxu0 0
      %408 = vmatprep.subr.bf16.mxu0 0
      %409 = vmatpush1.bf16.xpose.msra.mxu0 0
      %410 = vmatprep.subr.bf16.mxu0 0
      %411 = vmatpush1.bf16.xpose.msra.mxu0 0
      %412 = vmatprep.subr.bf16.mxu0 0
      %413 = vmatpush1.bf16.xpose.msra.mxu0 0
      %414 = vmatprep.subr.bf16.mxu0 0
      %415 = vmatpush1.bf16.xpose.msra.mxu0 0
      %416 = vmatprep.mubr.bf16.mxu0 0
      %417 = vmatmul.mubr.bf16.gmra.mrb[0].mxu0 %v379
      %v418 = vpop.f32.mrb[0].mxu0
      %v419 = vadd.f32 0.0, %v418
      %v420 = vpop.f32.mrb[0].mxu0
      %v421 = vpop.f32.mrb[0].mxu0
      %v422 = vpop.f32.mrb[0].mxu0
      %423 = vdwg.mxu0
      %v424 = vmul.f32 %v419, 0.17677669
      %v425 = vadd.f32 %v424, %v257
      %v426 = vsel %vm307, %v425, -inf
      %427 = vmax.xlane.f32.xlu0 %v426
      %v428 = vpop.xlane.xlu0 %427
      %v429 = vsub.f32 %v425, %v428
      %v430 = vmul.f32 %v429, 1.442695
      %v431 = vpow.pop %v430
      %v432 = vsel %vm307, %v431, 0.0
      %433 = vadd.xlane.f32.xlu0 %v432
      %v434 = vpop.xlane.xlu0 %433
      %v435 = vrcp.pop %v434
      %v436 = vmul.f32 %v431, %v435
      %v437 = vpack.c.bf16 %v436, %v436
      %v439 = vunpack.c.l.b16 %v256
      %v440 = vpack.c.b16 %v439, %v439
      %441 = vrot.lane.b32.xlu0 %v440, 96
      %v442 = vpop.permute.xlu0 %441
      %v444 = vsel %vm320, %v437, 0
      %v447 = vsel %vm324, %v442, 0
      %449 = vmatprep.subr.bf16.mxu0 0
      %450 = vmatpush1.bf16.msra.mxu0 %v447
      %451 = vmatprep.subr.bf16.mxu0 0
      %452 = vmatpush1.bf16.msra.mxu0 0
      %453 = vmatprep.subr.bf16.mxu0 0
      %454 = vmatpush1.bf16.msra.mxu0 0
      %455 = vmatprep.subr.bf16.mxu0 0
      %456 = vmatpush1.bf16.msra.mxu0 0
      %457 = vmatprep.subr.bf16.mxu0 0
      %458 = vmatpush1.bf16.msra.mxu0 0
      %459 = vmatprep.subr.bf16.mxu0 0
      %460 = vmatpush1.bf16.msra.mxu0 0
      %461 = vmatprep.subr.bf16.mxu0 0
      %462 = vmatpush1.bf16.msra.mxu0 0
      %463 = vmatprep.subr.bf16.mxu0 0
      %464 = vmatpush1.bf16.msra.mxu0 0
      %465 = vmatprep.subr.bf16.mxu0 0
      %466 = vmatpush1.bf16.msra.mxu0 0
      %467 = vmatprep.subr.bf16.mxu0 0
      %468 = vmatpush1.bf16.msra.mxu0 0
      %469 = vmatprep.subr.bf16.mxu0 0
      %470 = vmatpush1.bf16.msra.mxu0 0
      %471 = vmatprep.subr.bf16.mxu0 0
      %472 = vmatpush1.bf16.msra.mxu0 0
      %473 = vmatprep.subr.bf16.mxu0 0
      %474 = vmatpush1.bf16.msra.mxu0 0
      %475 = vmatprep.subr.bf16.mxu0 0
      %476 = vmatpush1.bf16.msra.mxu0 0
      %477 = vmatprep.subr.bf16.mxu0 0
      %478 = vmatpush1.bf16.msra.mxu0 0
      %479 = vmatprep.subr.bf16.mxu0 0
      %480 = vmatpush1.bf16.msra.mxu0 0
      %481 = vmatprep.mubr.bf16.mxu0 0
      %482 = vmatmul.mubr.bf16.gmra.mrb[0].mxu0 %v444
      %v483 = vpop.f32.mrb[0].mxu0
      %v484 = vadd.f32 0.0, %v483
      %v485 = vpop.f32.mrb[0].mxu0
      %v486 = vpop.f32.mrb[0].mxu0
      %v487 = vpop.f32.mrb[0].mxu0
      %488 = vdwg.mxu0
      %489 = vrot.lane.b32.xlu0 %v370, 64
      %v490 = vpop.permute.xlu0 %489
      %491 = vrot.lane.b32.xlu0 %v375, 64
      %v492 = vpop.permute.xlu0 %491
      %v494 = vsel %vm258, %v490, 0
      %v497 = vsel %vm258, %v492, 0
      %499 = vmatprep.subr.bf16.mxu0 0
      %500 = vmatpush1.bf16.xpose.msra.mxu0 %v497
      %501 = vmatprep.subr.bf16.mxu0 0
      %502 = vmatpush1.bf16.xpose.msra.mxu0 0
      %503 = vmatprep.subr.bf16.mxu0 0
      %504 = vmatpush1.bf16.xpose.msra.mxu0 0
      %505 = vmatprep.subr.bf16.mxu0 0
      %506 = vmatpush1.bf16.xpose.msra.mxu0 0
      %507 = vmatprep.subr.bf16.mxu0 0
      %508 = vmatpush1.bf16.xpose.msra.mxu0 0
      %509 = vmatprep.subr.bf16.mxu0 0
      %510 = vmatpush1.bf16.xpose.msra.mxu0 0
      %511 = vmatprep.subr.bf16.mxu0 0
      %512 = vmatpush1.bf16.xpose.msra.mxu0 0
      %513 = vmatprep.subr.bf16.mxu0 0
      %514 = vmatpush1.bf16.xpose.msra.mxu0 0
      %515 = vmatprep.subr.bf16.mxu0 0
      %516 = vmatpush1.bf16.xpose.msra.mxu0 0
      %517 = vmatprep.subr.bf16.mxu0 0
      %518 = vmatpush1.bf16.xpose.msra.mxu0 0
      %519 = vmatprep.subr.bf16.mxu0 0
      %520 = vmatpush1.bf16.xpose.msra.mxu0 0
      %521 = vmatprep.subr.bf16.mxu0 0
      %522 = vmatpush1.bf16.xpose.msra.mxu0 0
      %523 = vmatprep.subr.bf16.mxu0 0
      %524 = vmatpush1.bf16.xpose.msra.mxu0 0
      %525 = vmatprep.subr.bf16.mxu0 0
      %526 = vmatpush1.bf16.xpose.msra.mxu0 0
      %527 = vmatprep.subr.bf16.mxu0 0
      %528 = vmatpush1.bf16.xpose.msra.mxu0 0
      %529 = vmatprep.subr.bf16.mxu0 0
      %530 = vmatpush1.bf16.xpose.msra.mxu0 0
      %531 = vmatprep.mubr.bf16.mxu0 0
      %532 = vmatmul.mubr.bf16.gmra.mrb[0].mxu0 %v494
      %v533 = vpop.f32.mrb[0].mxu0
      %v534 = vadd.f32 0.0, %v533
      %v535 = vpop.f32.mrb[0].mxu0
      %v536 = vpop.f32.mrb[0].mxu0
      %v537 = vpop.f32.mrb[0].mxu0
      %538 = vdwg.mxu0
      %v539 = vmul.f32 %v534, 0.17677669
      %v540 = vadd.f32 %v539, %v257
      %v541 = vsel %vm307, %v540, -inf
      %542 = vmax.xlane.f32.xlu0 %v541
      %v543 = vpop.xlane.xlu0 %542
      %v544 = vsub.f32 %v540, %v543
      %v545 = vmul.f32 %v544, 1.442695
      %v546 = vpow.pop %v545
      %v547 = vsel %vm307, %v546, 0.0
      %548 = vadd.xlane.f32.xlu0 %v547
      %v549 = vpop.xlane.xlu0 %548
      %v550 = vrcp.pop %v549
      %v551 = vmul.f32 %v546, %v550
      %v552 = vpack.c.bf16 %v551, %v551
      %553 = vrot.lane.b32.xlu0 %v440, 64
      %v554 = vpop.permute.xlu0 %553
      %v556 = vsel %vm320, %v552, 0
      %v559 = vsel %vm324, %v554, 0
      %561 = vmatprep.subr.bf16.mxu0 0
      %562 = vmatpush1.bf16.msra.mxu0 %v559
      %563 = vmatprep.subr.bf16.mxu0 0
      %564 = vmatpush1.bf16.msra.mxu0 0
      %565 = vmatprep.subr.bf16.mxu0 0
      %566 = vmatpush1.bf16.msra.mxu0 0
      %567 = vmatprep.subr.bf16.mxu0 0
      %568 = vmatpush1.bf16.msra.mxu0 0
      %569 = vmatprep.subr.bf16.mxu0 0
      %570 = vmatpush1.bf16.msra.mxu0 0
      %571 = vmatprep.subr.bf16.mxu0 0
      %572 = vmatpush1.bf16.msra.mxu0 0
      %573 = vmatprep.subr.bf16.mxu0 0
      %574 = vmatpush1.bf16.msra.mxu0 0
      %575 = vmatprep.subr.bf16.mxu0 0
      %576 = vmatpush1.bf16.msra.mxu0 0
      %577 = vmatprep.subr.bf16.mxu0 0
      %578 = vmatpush1.bf16.msra.mxu0 0
      %579 = vmatprep.subr.bf16.mxu0 0
      %580 = vmatpush1.bf16.msra.mxu0 0
      %581 = vmatprep.subr.bf16.mxu0 0
      %582 = vmatpush1.bf16.msra.mxu0 0
      %583 = vmatprep.subr.bf16.mxu0 0
      %584 = vmatpush1.bf16.msra.mxu0 0
      %585 = vmatprep.subr.bf16.mxu0 0
      %586 = vmatpush1.bf16.msra.mxu0 0
      %587 = vmatprep.subr.bf16.mxu0 0
      %588 = vmatpush1.bf16.msra.mxu0 0
      %589 = vmatprep.subr.bf16.mxu0 0
      %590 = vmatpush1.bf16.msra.mxu0 0
      %591 = vmatprep.subr.bf16.mxu0 0
      %592 = vmatpush1.bf16.msra.mxu0 0
      %593 = vmatprep.mubr.bf16.mxu0 0
      %594 = vmatmul.mubr.bf16.gmra.mrb[0].mxu0 %v556
      %v595 = vpop.f32.mrb[0].mxu0
      %v596 = vadd.f32 0.0, %v595
      %v597 = vpop.f32.mrb[0].mxu0
      %v598 = vpop.f32.mrb[0].mxu0
      %v599 = vpop.f32.mrb[0].mxu0
      %600 = vdwg.mxu0
      %601 = vrot.lane.b32.xlu0 %v370, 32
      %v602 = vpop.permute.xlu0 %601
      %603 = vrot.lane.b32.xlu0 %v375, 32
      %v604 = vpop.permute.xlu0 %603
      %v606 = vsel %vm258, %v602, 0
      %v609 = vsel %vm258, %v604, 0
      %611 = vmatprep.subr.bf16.mxu0 0
      %612 = vmatpush1.bf16.xpose.msra.mxu0 %v609
      %613 = vmatprep.subr.bf16.mxu0 0
      %614 = vmatpush1.bf16.xpose.msra.mxu0 0
      %615 = vmatprep.subr.bf16.mxu0 0
      %616 = vmatpush1.bf16.xpose.msra.mxu0 0
      %617 = vmatprep.subr.bf16.mxu0 0
      %618 = vmatpush1.bf16.xpose.msra.mxu0 0
      %619 = vmatprep.subr.bf16.mxu0 0
      %620 = vmatpush1.bf16.xpose.msra.mxu0 0
      %621 = vmatprep.subr.bf16.mxu0 0
      %622 = vmatpush1.bf16.xpose.msra.mxu0 0
      %623 = vmatprep.subr.bf16.mxu0 0
      %624 = vmatpush1.bf16.xpose.msra.mxu0 0
      %625 = vmatprep.subr.bf16.mxu0 0
      %626 = vmatpush1.bf16.xpose.msra.mxu0 0
      %627 = vmatprep.subr.bf16.mxu0 0
      %628 = vmatpush1.bf16.xpose.msra.mxu0 0
      %629 = vmatprep.subr.bf16.mxu0 0
      %630 = vmatpush1.bf16.xpose.msra.mxu0 0
      %631 = vmatprep.subr.bf16.mxu0 0
      %632 = vmatpush1.bf16.xpose.msra.mxu0 0
      %633 = vmatprep.subr.bf16.mxu0 0
      %634 = vmatpush1.bf16.xpose.msra.mxu0 0
      %635 = vmatprep.subr.bf16.mxu0 0
      %636 = vmatpush1.bf16.xpose.msra.mxu0 0
      %637 = vmatprep.subr.bf16.mxu0 0
      %638 = vmatpush1.bf16.xpose.msra.mxu0 0
      %639 = vmatprep.subr.bf16.mxu0 0
      %640 = vmatpush1.bf16.xpose.msra.mxu0 0
      %641 = vmatprep.subr.bf16.mxu0 0
      %642 = vmatpush1.bf16.xpose.msra.mxu0 0
      %643 = vmatprep.mubr.bf16.mxu0 0
      %644 = vmatmul.mubr.bf16.gmra.mrb[0].mxu0 %v606
      %v645 = vpop.f32.mrb[0].mxu0
      %v646 = vadd.f32 0.0, %v645
      %v647 = vpop.f32.mrb[0].mxu0
      %v648 = vpop.f32.mrb[0].mxu0
      %v649 = vpop.f32.mrb[0].mxu0
      %650 = vdwg.mxu0
      %v651 = vmul.f32 %v646, 0.17677669
      %v652 = vadd.f32 %v651, %v257
      %v653 = vsel %vm307, %v652, -inf
      %654 = vmax.xlane.f32.xlu0 %v653
      %v655 = vpop.xlane.xlu0 %654
      %v656 = vsub.f32 %v652, %v655
      %v657 = vmul.f32 %v656, 1.442695
      %v658 = vpow.pop %v657
      %v659 = vsel %vm307, %v658, 0.0
      %660 = vadd.xlane.f32.xlu0 %v659
      %v661 = vpop.xlane.xlu0 %660
      %v662 = vrcp.pop %v661
      %v663 = vmul.f32 %v658, %v662
      %v664 = vpack.c.bf16 %v663, %v663
      %665 = vrot.lane.b32.xlu0 %v440, 32
      %v666 = vpop.permute.xlu0 %665
      %v668 = vsel %vm320, %v664, 0
      %v671 = vsel %vm324, %v666, 0
      %673 = vmatprep.subr.bf16.mxu0 0
      %674 = vmatpush1.bf16.msra.mxu0 %v671
      %675 = vmatprep.subr.bf16.mxu0 0
      %676 = vmatpush1.bf16.msra.mxu0 0
      %677 = vmatprep.subr.bf16.mxu0 0
      %678 = vmatpush1.bf16.msra.mxu0 0
      %679 = vmatprep.subr.bf16.mxu0 0
      %680 = vmatpush1.bf16.msra.mxu0 0
      %681 = vmatprep.subr.bf16.mxu0 0
      %682 = vmatpush1.bf16.msra.mxu0 0
      %683 = vmatprep.subr.bf16.mxu0 0
      %684 = vmatpush1.bf16.msra.mxu0 0
      %685 = vmatprep.subr.bf16.mxu0 0
      %686 = vmatpush1.bf16.msra.mxu0 0
      %687 = vmatprep.subr.bf16.mxu0 0
      %688 = vmatpush1.bf16.msra.mxu0 0
      %689 = vmatprep.subr.bf16.mxu0 0
      %690 = vmatpush1.bf16.msra.mxu0 0
      %691 = vmatprep.subr.bf16.mxu0 0
      %692 = vmatpush1.bf16.msra.mxu0 0
      %693 = vmatprep.subr.bf16.mxu0 0
      %694 = vmatpush1.bf16.msra.mxu0 0
      %695 = vmatprep.subr.bf16.mxu0 0
      %696 = vmatpush1.bf16.msra.mxu0 0
      %697 = vmatprep.subr.bf16.mxu0 0
      %698 = vmatpush1.bf16.msra.mxu0 0
      %699 = vmatprep.subr.bf16.mxu0 0
      %700 = vmatpush1.bf16.msra.mxu0 0
      %701 = vmatprep.subr.bf16.mxu0 0
      %702 = vmatpush1.bf16.msra.mxu0 0
      %703 = vmatprep.subr.bf16.mxu0 0
      %704 = vmatpush1.bf16.msra.mxu0 0
      %705 = vmatprep.mubr.bf16.mxu0 0
      %706 = vmatmul.mubr.bf16.gmra.mrb[0].mxu0 %v668
      %v707 = vpop.f32.mrb[0].mxu0
      %v708 = vadd.f32 0.0, %v707
      %v709 = vpop.f32.mrb[0].mxu0
      %v710 = vpop.f32.mrb[0].mxu0
      %v711 = vpop.f32.mrb[0].mxu0
      %712 = vdwg.mxu0
      %714 = vrot.lane.b32.xlu0 %v484, 32
      %v715 = vpop.permute.xlu0 %714
      %718 = vrot.lane.b32.xlu0 %v596, 64
      %v719 = vpop.permute.xlu0 %718
      %722 = vrot.lane.b32.xlu0 %v708, 96
      %v723 = vpop.permute.xlu0 %722
      %v725 = vsel %vm258, %v363, %v715
      %vm726 = vcmask 523264
      %v727 = vsel %vm726, %v725, %v719
      %vm728 = vcmask 785408
      %v729 = vsel %vm728, %v727, %v723
      %v730 = vpack.c.bf16 %v729, %v729
      %vm731 = vcmask 1043456
      %vm732 = vsmask.f32 3328
      %vm733 = vmand %vm731, %vm732
      %v734 = vld [vmem:[%s252] sm:$0xf]
      %v735 = vsel %vm733, %v730, %v734
      %736 = vst [vmem:[%s252] sm:$0xf] %v735
      %p737 = scmp.lt.s32.totalorder %s15, 1
      %s738 = scalar_select %p737, %s15, 1
      %s739 = smul.addr %s738, 4
      %s740 = scalar_lea.vmem %s4, %s739
      // Predicated region
      $region37: #{transformer_forward.38} parent=35 // pred_check
        %p741 = pneg %p137
      $region38: #{transformer_forward.38} parent=35 // pred_check_branch
        %743 = sbr.rel (%p741) target = $region40
      $region39: #{transformer_forward.38} parent=35 // pred_region
        _
      $region40: #{transformer_forward.38} parent=35 // pred_fallthru
        _
    $region36: #{transformer_forward.38} parent=5 // pred_fallthru
      _
    %p744 = scmp.le.s32.totalorder 2, %s10
    // Predicated region
    $region41: #{transformer_forward.38} parent=5 // pred_check
      %p745 = pneg %p744
    $region42: #{transformer_forward.38} parent=5 // pred_check_branch
      %747 = sbr.rel (%p745) target = $region44
    $region43: #{transformer_forward.38} parent=5 // pred_region
      %s748 = ssub.s32 %s10, 2
      // Predicated region
      $region45: #{transformer_forward.38} parent=43 // pred_check
        %p749 = pneg %p143
      $region46: #{transformer_forward.38} parent=43 // pred_check_branch
        %751 = sbr.rel (%p749) target = $region48
      $region47: #{transformer_forward.38} parent=43 // pred_region
        %p752 = scmp.lt.s32.totalorder %s16, 1
        %s753 = scalar_select %p752, %s16, 1
        %s754 = smul.addr %s753, 4
        %s755 = scalar_lea.vmem %s4, %s754
      $region48: #{transformer_forward.38} parent=43 // pred_fallthru
        _
    $region44: #{transformer_forward.38} parent=5 // pred_fallthru
      _
  $region6: #{transformer_forward.38} parent=0 // loop_footer
    %s14 = sadd.s32 1, %s10
  $region7: #{transformer_forward.38} parent=0 // loop_footer_branch
    %9 = sbr.rel target = $region3
  $region8: #{transformer_forward.38} parent=0 // loop_exit
    _

// kernel: transformer_forward.34
$region0: #{transformer_forward.34}
  #allocation0 [shape = 'u32[]', space=smem, size = 0x4, offset = 0x4, fixed_abs, tag = 'smem constant byte address 0x4 - core index']
  #allocation1 [shape = 'u32[144,128]{1,0:T(1,128)}', space=vmem, size = 0x12000, scoped, tag = 'internal scratch']
  %s0 = inlined_call_operand.vmem [shape: bf16[2,7,384], index: 0, kind: input, shape index: {}, may-alias: {0,1,2}]
  %s1 = inlined_call_operand.vmem [shape: bf16[2,7,384], index: 1, kind: input, shape index: {}, may-alias: {0,1,2}]
  %s2 = inlined_call_operand.vmem [shape: bf16[2,7,384], index: 2, kind: input, shape index: {}, may-alias: {0,1,2}]
  %s3 = inlined_call_operand.vmem [shape: f32[2,7,7], index: 3, kind: input, shape index: {}]
  %s4 = inlined_call_operand.vmem [shape: bf16[2,7,128], index: 4, kind: output, shape index: {}]
  %s5 = sld [smem:[#allocation0]]
  $region49: #{transformer_forward.34} parent=0
    _
  %s7 = ssub.s32 1, %s5
  %s8 = scalar_select 0, %s7, %s5
  loop: start=0, step=1, limit=4
  $region2: #{transformer_forward.34} parent=0 // loop_pre_header
    _
  $region3: #{transformer_forward.34} parent=0 // loop_header
    %s10 = sphi 0, %s14
    %p11 = scmp.ge.s32.totalorder %s10, 4
    %s20 = sphi 0, %s22
    %s23 = sphi 0, %s20
    %s24 = sphi 0, %s23
    %s40 = sphi 0, %s24
    %s46 = sphi 0, %s48
    %s49 = sphi 0, %s46
    %s50 = sphi 0, %s49
    %s66 = sphi 0, %s50
    %s72 = sphi 0, %s74
    %s75 = sphi 0, %s72
    %s76 = sphi 0, %s75
    %s92 = sphi 0, %s76
    %s98 = sphi 0, %s100
    %s101 = sphi 0, %s98
    %s102 = sphi 0, %s101
    %s118 = sphi 0, %s102
    %s124 = sphi 0, %s126
    %s127 = sphi 0, %s124
    %s128 = sphi 0, %s127
    %s144 = sphi 0, %s128
  $region4: #{transformer_forward.34} parent=0 // loop_header_branch
    %13 = sbr.rel (%p11) target = $region8
  $region5: #{transformer_forward.34} parent=0 // loop_body
    %s15 = ssub.s32 %s10, 1
    %s16 = ssub.s32 %s10, 2
    %s17 = sadd.s32 %s10, 1
    %s18 = ssub.s32 %s10, %s17
    %p19 = scmp.eq.s32.totalorder %s18, 0
    %s21 = sadd.s32 %s20, 1
    %s22 = scalar_select %p19, %s20, %s21
    %p25 = pneg %p19
    %p26 = scmp.eq.s32.totalorder %s10, 1
    %p27 = por %p25, %p26
    %p28 = scmp.ne.s32.totalorder %s20, %s23
    %p29 = scmp.eq.s32.totalorder %s10, 0
    %p30 = por %p28, %p29
    %p31 = scmp.ne.s32.totalorder %s20, %s23
    %p32 = scmp.eq.s32.totalorder %s15, 1
    %p33 = por %p31, %p32
    %p34 = scmp.ne.s32.totalorder %s23, %s24
    %p35 = scmp.eq.s32.totalorder %s15, 0
    %p36 = por %p34, %p35
    %p37 = scmp.ne.s32.totalorder %s23, %s24
    %p38 = scmp.eq.s32.totalorder %s16, 1
    %p39 = por %p37, %p38
    %p41 = scmp.ne.s32.totalorder %s24, %s40
    %p42 = scmp.eq.s32.totalorder %s16, 0
    %p43 = por %p41, %p42
    %s44 = ssub.s32 %s10, %s17
    %p45 = scmp.eq.s32.totalorder %s44, 0
    %s47 = sadd.s32 %s46, 1
    %s48 = scalar_select %p45, %s46, %s47
    %p51 = pneg %p45
    %p52 = scmp.eq.s32.totalorder %s10, 1
    %p53 = por %p51, %p52
    %p54 = scmp.ne.s32.totalorder %s46, %s49
    %p55 = scmp.eq.s32.totalorder %s10, 0
    %p56 = por %p54, %p55
    %p57 = scmp.ne.s32.totalorder %s46, %s49
    %p58 = scmp.eq.s32.totalorder %s15, 1
    %p59 = por %p57, %p58
    %p60 = scmp.ne.s32.totalorder %s49, %s50
    %p61 = scmp.eq.s32.totalorder %s15, 0
    %p62 = por %p60, %p61
    %p63 = scmp.ne.s32.totalorder %s49, %s50
    %p64 = scmp.eq.s32.totalorder %s16, 1
    %p65 = por %p63, %p64
    %p67 = scmp.ne.s32.totalorder %s50, %s66
    %p68 = scmp.eq.s32.totalorder %s16, 0
    %p69 = por %p67, %p68
    %s70 = ssub.s32 %s10, %s17
    %p71 = scmp.eq.s32.totalorder %s70, 0
    %s73 = sadd.s32 %s72, 1
    %s74 = scalar_select %p71, %s72, %s73
    %p77 = pneg %p71
    %p78 = scmp.eq.s32.totalorder %s10, 1
    %p79 = por %p77, %p78
    %p80 = scmp.ne.s32.totalorder %s72, %s75
    %p81 = scmp.eq.s32.totalorder %s10, 0
    %p82 = por %p80, %p81
    %p83 = scmp.ne.s32.totalorder %s72, %s75
    %p84 = scmp.eq.s32.totalorder %s15, 1
    %p85 = por %p83, %p84
    %p86 = scmp.ne.s32.totalorder %s75, %s76
    %p87 = scmp.eq.s32.totalorder %s15, 0
    %p88 = por %p86, %p87
    %p89 = scmp.ne.s32.totalorder %s75, %s76
    %p90 = scmp.eq.s32.totalorder %s16, 1
    %p91 = por %p89, %p90
    %p93 = scmp.ne.s32.totalorder %s76, %s92
    %p94 = scmp.eq.s32.totalorder %s16, 0
    %p95 = por %p93, %p94
    %s96 = ssub.s32 %s10, %s17
    %p97 = scmp.eq.s32.totalorder %s96, 0
    %s99 = sadd.s32 %s98, 1
    %s100 = scalar_select %p97, %s98, %s99
    %p103 = pneg %p97
    %p104 = scmp.eq.s32.totalorder %s10, 1
    %p105 = por %p103, %p104
    %p106 = scmp.ne.s32.totalorder %s98, %s101
    %p107 = scmp.eq.s32.totalorder %s10, 0
    %p108 = por %p106, %p107
    %p109 = scmp.ne.s32.totalorder %s98, %s101
    %p110 = scmp.eq.s32.totalorder %s15, 1
    %p111 = por %p109, %p110
    %p112 = scmp.ne.s32.totalorder %s101, %s102
    %p113 = scmp.eq.s32.totalorder %s15, 0
    %p114 = por %p112, %p113
    %p115 = scmp.ne.s32.totalorder %s101, %s102
    %p116 = scmp.eq.s32.totalorder %s16, 1
    %p117 = por %p115, %p116
    %p119 = scmp.ne.s32.totalorder %s102, %s118
    %p120 = scmp.eq.s32.totalorder %s16, 0
    %p121 = por %p119, %p120
    %s122 = ssub.s32 %s10, %s17
    %p123 = scmp.eq.s32.totalorder %s122, 0
    %s125 = sadd.s32 %s124, 1
    %s126 = scalar_select %p123, %s124, %s125
    %p129 = pneg %p123
    %p130 = scmp.eq.s32.totalorder %s10, 1
    %p131 = por %p129, %p130
    %p132 = scmp.ne.s32.totalorder %s124, %s127
    %p133 = scmp.eq.s32.totalorder %s10, 0
    %p134 = por %p132, %p133
    %p135 = scmp.ne.s32.totalorder %s124, %s127
    %p136 = scmp.eq.s32.totalorder %s15, 1
    %p137 = por %p135, %p136
    %p138 = scmp.ne.s32.totalorder %s127, %s128
    %p139 = scmp.eq.s32.totalorder %s15, 0
    %p140 = por %p138, %p139
    %p141 = scmp.ne.s32.totalorder %s127, %s128
    %p142 = scmp.eq.s32.totalorder %s16, 1
    %p143 = por %p141, %p142
    %p145 = scmp.ne.s32.totalorder %s128, %s144
    %p146 = scmp.eq.s32.totalorder %s16, 0
    %p147 = por %p145, %p146
    %p148 = scmp.le.s32.totalorder 1, %s10
    %p149 = scmp.lt.s32.totalorder %s10, 3
    %p150 = pnand %p148, %p149
    %p151 = pneg %p150
    // Predicated region
    $region9: #{transformer_forward.34} parent=5 // pred_check
      _
    $region10: #{transformer_forward.34} parent=5 // pred_check_branch
      %153 = sbr.rel (%p150) target = $region12
    $region11: #{transformer_forward.34} parent=5 // pred_region
      %s154 = ssub.s32 %s10, 1
    $region12: #{transformer_forward.34} parent=5 // pred_fallthru
      _
    %p155 = scmp.lt.s32.totalorder %s10, 2
    // Predicated region
    $region13: #{transformer_forward.34} parent=5 // pred_check
      %p156 = pneg %p155
    $region14: #{transformer_forward.34} parent=5 // pred_check_branch
      %158 = sbr.rel (%p156) target = $region16
    $region15: #{transformer_forward.34} parent=5 // pred_region
      // Predicated region
      $region17: #{transformer_forward.34} parent=15 // pred_check
        %p159 = pneg %p30
      $region18: #{transformer_forward.34} parent=15 // pred_check_branch
        %161 = sbr.rel (%p159) target = $region20
      $region19: #{transformer_forward.34} parent=15 // pred_region
        %p162 = scmp.lt.s32.totalorder %s10, 1
        %s163 = scalar_select %p162, %s10, 1
        %s164 = smul.addr %s163, 3
        %s165 = smul.addr %s164, 4
        %s166 = scalar_lea.vmem %s0, %s165
      $region20: #{transformer_forward.34} parent=15 // pred_fallthru
        _
      // Predicated region
      $region21: #{transformer_forward.34} parent=15 // pred_check
        %p167 = pneg %p56
      $region22: #{transformer_forward.34} parent=15 // pred_check_branch
        %169 = sbr.rel (%p167) target = $region24
      $region23: #{transformer_forward.34} parent=15 // pred_region
        %p170 = scmp.lt.s32.totalorder %s10, 1
        %s171 = scalar_select %p170, %s10, 1
        %s172 = smul.addr %s171, 3
        %s173 = sadd.s32 1, %s172
        %s174 = smul.addr %s173, 4
        %s175 = scalar_lea.vmem %s1, %s174
      $region24: #{transformer_forward.34} parent=15 // pred_fallthru
        _
      // Predicated region
      $region25: #{transformer_forward.34} parent=15 // pred_check
        %p176 = pneg %p82
      $region26: #{transformer_forward.34} parent=15 // pred_check_branch
        %178 = sbr.rel (%p176) target = $region28
      $region27: #{transformer_forward.34} parent=15 // pred_region
        %p179 = scmp.lt.s32.totalorder %s10, 1
        %s180 = scalar_select %p179, %s10, 1
        %s181 = smul.addr %s180, 3
        %s182 = sadd.s32 2, %s181
        %s183 = smul.addr %s182, 4
        %s184 = scalar_lea.vmem %s2, %s183
      $region28: #{transformer_forward.34} parent=15 // pred_fallthru
        _
      // Predicated region
      $region29: #{transformer_forward.34} parent=15 // pred_check
        %p185 = pneg %p108
      $region30: #{transformer_forward.34} parent=15 // pred_check_branch
        %187 = sbr.rel (%p185) target = $region32
      $region31: #{transformer_forward.34} parent=15 // pred_region
        %p188 = scmp.lt.s32.totalorder %s10, 1
        %s189 = scalar_select %p188, %s10, 1
        %s190 = smul.addr %s189, 8
        %s191 = scalar_lea.vmem %s3, %s190
      $region32: #{transformer_forward.34} parent=15 // pred_fallthru
        _
    $region16: #{transformer_forward.34} parent=5 // pred_fallthru
      _
    %p192 = scmp.le.s32.totalorder 1, %s10
    %p193 = scmp.lt.s32.totalorder %s10, 3
    %p194 = pnand %p192, %p193
    %p195 = pneg %p194
    // Predicated region
    $region33: #{transformer_forward.34} parent=5 // pred_check
      _
    $region34: #{transformer_forward.34} parent=5 // pred_check_branch
      %197 = sbr.rel (%p194) target = $region36
    $region35: #{transformer_forward.34} parent=5 // pred_region
      %s198 = ssub.s32 %s10, 1
      %p199 = scmp.lt.s32.totalorder %s15, 1
      %s200 = scalar_select %p199, %s15, 1
      %s201 = smul.addr %s200, 3
      %s202 = smul.addr %s201, 4
      %s203 = scalar_lea.vmem %s0, %s202
      %p204 = pneg %p36
      %p205 = pneg %p33
      %p206 = scmp.lt.s32.totalorder %s15, 1
      %s207 = scalar_select %p206, %s15, 1
      %s208 = smul.addr %s207, 3
      %s209 = sadd.s32 1, %s208
      %s210 = smul.addr %s209, 4
      %s211 = scalar_lea.vmem %s1, %s210
      %p212 = pneg %p62
      %p213 = pneg %p59
      %p214 = scmp.lt.s32.totalorder %s15, 1
      %s215 = scalar_select %p214, %s15, 1
      %s216 = smul.addr %s215, 3
      %s217 = sadd.s32 2, %s216
      %s218 = smul.addr %s217, 4
      %s219 = scalar_lea.vmem %s2, %s218
      %p220 = pneg %p88
      %p221 = pneg %p85
      %p222 = scmp.lt.s32.totalorder %s15, 1
      %s223 = scalar_select %p222, %s15, 1
      %s224 = smul.addr %s223, 8
      %s225 = scalar_lea.vmem %s3, %s224
      %p226 = pneg %p114
      %p227 = pneg %p111
      %p228 = pneg %p140
      %p229 = pneg %p137
      %p230 = scmp.lt.s32.totalorder %s15, 1
      %s231 = scalar_select %p230, %s15, 1
      %s232 = smul.addr %s231, 4
      %s233 = scalar_lea.vmem %s4, %s232
      %p234 = scmp.lt.s32.totalorder %s15, 1
      %s235 = scalar_select %p234, %s15, 1
      %s236 = smul.addr %s235, 3
      %s237 = smul.addr %s236, 4
      %s238 = scalar_lea.vmem %s0, %s237
      %p239 = scmp.lt.s32.totalorder %s15, 1
      %s240 = scalar_select %p239, %s15, 1
      %s241 = smul.addr %s240, 3
      %s242 = sadd.s32 1, %s241
      %s243 = smul.addr %s242, 4
      %s244 = scalar_lea.vmem %s1, %s243
      %p245 = scmp.lt.s32.totalorder %s15, 1
      %s246 = scalar_select %p245, %s15, 1
      %s247 = smul.addr %s246, 3
      %s248 = sadd.s32 2, %s247
      %s249 = smul.addr %s248, 4
      %s250 = scalar_lea.vmem %s2, %s249
      %p251 = scmp.lt.s32.totalorder %s15, 1
      %s252 = scalar_select %p251, %s15, 1
      %s253 = smul.addr %s252, 8
      %s254 = scalar_lea.vmem %s3, %s253
      %p255 = scmp.lt.s32.totalorder %s15, 1
      %s256 = scalar_select %p255, %s15, 1
      %s257 = smul.addr %s256, 4
      %s258 = scalar_lea.vmem %s4, %s257
      %v260 = vld [vmem:[%s238] sm:$0xf]
      %v261 = vld [vmem:[%s244] sm:$0xf]
      %v262 = vld [vmem:[%s250] sm:$0xf]
      %v263 = vld [vmem:[%s254] sm:$0x7f]
      %vm264 = vcmask 261120
      %v266 = vsel %vm264, %v260, 0
      %v269 = vsel %vm264, %v261, 0
      %271 = vmatprep.subr.bf16.mxu0 0
      %272 = vmatpush1.bf16.xpose.msra.mxu0 %v269
      %273 = vmatprep.subr.bf16.mxu0 0
      %274 = vmatpush1.bf16.xpose.msra.mxu0 0
      %275 = vmatprep.subr.bf16.mxu0 0
      %276 = vmatpush1.bf16.xpose.msra.mxu0 0
      %277 = vmatprep.subr.bf16.mxu0 0
      %278 = vmatpush1.bf16.xpose.msra.mxu0 0
      %279 = vmatprep.subr.bf16.mxu0 0
      %280 = vmatpush1.bf16.xpose.msra.mxu0 0
      %281 = vmatprep.subr.bf16.mxu0 0
      %282 = vmatpush1.bf16.xpose.msra.mxu0 0
      %283 = vmatprep.subr.bf16.mxu0 0
      %284 = vmatpush1.bf16.xpose.msra.mxu0 0
      %285 = vmatprep.subr.bf16.mxu0 0
      %286 = vmatpush1.bf16.xpose.msra.mxu0 0
      %287 = vmatprep.subr.bf16.mxu0 0
      %288 = vmatpush1.bf16.xpose.msra.mxu0 0
      %289 = vmatprep.subr.bf16.mxu0 0
      %290 = vmatpush1.bf16.xpose.msra.mxu0 0
      %291 = vmatprep.subr.bf16.mxu0 0
      %292 = vmatpush1.bf16.xpose.msra.mxu0 0
      %293 = vmatprep.subr.bf16.mxu0 0
      %294 = vmatpush1.bf16.xpose.msra.mxu0 0
      %295 = vmatprep.subr.bf16.mxu0 0
      %296 = vmatpush1.bf16.xpose.msra.mxu0 0
      %297 = vmatprep.subr.bf16.mxu0 0
      %298 = vmatpush1.bf16.xpose.msra.mxu0 0
      %299 = vmatprep.subr.bf16.mxu0 0
      %300 = vmatpush1.bf16.xpose.msra.mxu0 0
      %301 = vmatprep.subr.bf16.mxu0 0
      %302 = vmatpush1.bf16.xpose.msra.mxu0 0
      %303 = vmatprep.mubr.bf16.mxu0 0
      %304 = vmatmul.mubr.bf16.gmra.mrb[0].mxu0 %v266
      %v305 = vpop.f32.mrb[0].mxu0
      %v306 = vadd.f32 0.0, %v305
      %v307 = vpop.f32.mrb[0].mxu0
      %v308 = vpop.f32.mrb[0].mxu0
      %v309 = vpop.f32.mrb[0].mxu0
      %310 = vdwg.mxu0
      %v311 = vmul.f32 %v306, 0.17677669
      %v312 = vadd.f32 %v311, %v263
      %vm313 = vcmask 55296
      %v314 = vsel %vm313, %v312, -inf
      %315 = vmax.xlane.f32.xlu0 %v314
      %v316 = vpop.xlane.xlu0 %315
      %v317 = vsub.f32 %v312, %v316
      %v318 = vmul.f32 %v317, 1.442695
      %v319 = vpow.pop %v318
      %v320 = vsel %vm313, %v319, 0.0
      %321 = vadd.xlane.f32.xlu0 %v320
      %v322 = vpop.xlane.xlu0 %321
      %v323 = vrcp.pop %v322
      %v324 = vmul.f32 %v319, %v323
      %v325 = vpack.c.bf16 %v324, %v324
      %vm326 = vcmask 56320
      %v328 = vsel %vm326, %v325, 0
      %vm330 = vcmask 1042432
      %vm331 = vcmask 1043456
      %v332 = vsel %vm330, 4294967295, 65535
      %v333 = vsel %vm331, %v332, 0
      %v335 = vand.u32 %v262, %v333
      %337 = vmatprep.subr.bf16.mxu0 0
      %338 = vmatpush1.bf16.msra.mxu0 %v335
      %339 = vmatprep.subr.bf16.mxu0 0
      %340 = vmatpush1.bf16.msra.mxu0 0
      %341 = vmatprep.subr.bf16.mxu0 0
      %342 = vmatpush1.bf16.msra.mxu0 0
      %343 = vmatprep.subr.bf16.mxu0 0
      %344 = vmatpush1.bf16.msra.mxu0 0
      %345 = vmatprep.subr.bf16.mxu0 0
      %346 = vmatpush1.bf16.msra.mxu0 0
      %347 = vmatprep.subr.bf16.mxu0 0
      %348 = vmatpush1.bf16.msra.mxu0 0
      %349 = vmatprep.subr.bf16.mxu0 0
      %350 = vmatpush1.bf16.msra.mxu0 0
      %351 = vmatprep.subr.bf16.mxu0 0
      %352 = vmatpush1.bf16.msra.mxu0 0
      %353 = vmatprep.subr.bf16.mxu0 0
      %354 = vmatpush1.bf16.msra.mxu0 0
      %355 = vmatprep.subr.bf16.mxu0 0
      %356 = vmatpush1.bf16.msra.mxu0 0
      %357 = vmatprep.subr.bf16.mxu0 0
      %358 = vmatpush1.bf16.msra.mxu0 0
      %359 = vmatprep.subr.bf16.mxu0 0
      %360 = vmatpush1.bf16.msra.mxu0 0
      %361 = vmatprep.subr.bf16.mxu0 0
      %362 = vmatpush1.bf16.msra.mxu0 0
      %363 = vmatprep.subr.bf16.mxu0 0
      %364 = vmatpush1.bf16.msra.mxu0 0
      %365 = vmatprep.subr.bf16.mxu0 0
      %366 = vmatpush1.bf16.msra.mxu0 0
      %367 = vmatprep.subr.bf16.mxu0 0
      %368 = vmatpush1.bf16.msra.mxu0 0
      %369 = vmatprep.mubr.bf16.mxu0 0
      %370 = vmatmul.mubr.bf16.gmra.mrb[0].mxu0 %v328
      %v371 = vpop.f32.mrb[0].mxu0
      %v372 = vadd.f32 0.0, %v371
      %v373 = vpop.f32.mrb[0].mxu0
      %v374 = vpop.f32.mrb[0].mxu0
      %v375 = vpop.f32.mrb[0].mxu0
      %376 = vdwg.mxu0
      %v378 = vunpack.c.l.b16 %v260
      %v379 = vpack.c.b16 %v378, %v378
      %380 = vrot.lane.b32.xlu0 %v379, 96
      %v381 = vpop.permute.xlu0 %380
      %v383 = vunpack.c.l.b16 %v261
      %v384 = vpack.c.b16 %v383, %v383
      %385 = vrot.lane.b32.xlu0 %v384, 96
      %v386 = vpop.permute.xlu0 %385
      %v388 = vsel %vm264, %v381, 0
      %v391 = vsel %vm264, %v386, 0
      %393 = vmatprep.subr.bf16.mxu0 0
      %394 = vmatpush1.bf16.xpose.msra.mxu0 %v391
      %395 = vmatprep.subr.bf16.mxu0 0
      %396 = vmatpush1.bf16.xpose.msra.mxu0 0
      %397 = vmatprep.subr.bf16.mxu0 0
      %398 = vmatpush1.bf16.xpose.msra.mxu0 0
      %399 = vmatprep.subr.bf16.mxu0 0
      %400 = vmatpush1.bf16.xpose.msra.mxu0 0
      %401 = vmatprep.subr.bf16.mxu0 0
      %402 = vmatpush1.bf16.xpose.msra.mxu0 0
      %403 = vmatprep.subr.bf16.mxu0 0
      %404 = vmatpush1.bf16.xpose.msra.mxu0 0
      %405 = vmatprep.subr.bf16.mxu0 0
      %406 = vmatpush1.bf16.xpose.msra.mxu0 0
      %407 = vmatprep.subr.bf16.mxu0 0
      %408 = vmatpush1.bf16.xpose.msra.mxu0 0
      %409 = vmatprep.subr.bf16.mxu0 0
      %410 = vmatpush1.bf16.xpose.msra.mxu0 0
      %411 = vmatprep.subr.bf16.mxu0 0
      %412 = vmatpush1.bf16.xpose.msra.mxu0 0
      %413 = vmatprep.subr.bf16.mxu0 0
      %414 = vmatpush1.bf16.xpose.msra.mxu0 0
      %415 = vmatprep.subr.bf16.mxu0 0
      %416 = vmatpush1.bf16.xpose.msra.mxu0 0
      %417 = vmatprep.subr.bf16.mxu0 0
      %418 = vmatpush1.bf16.xpose.msra.mxu0 0
      %419 = vmatprep.subr.bf16.mxu0 0
      %420 = vmatpush1.bf16.xpose.msra.mxu0 0
      %421 = vmatprep.subr.bf16.mxu0 0
      %422 = vmatpush1.bf16.xpose.msra.mxu0 0
      %423 = vmatprep.subr.bf16.mxu0 0
      %424 = vmatpush1.bf16.xpose.msra.mxu0 0
      %425 = vmatprep.mubr.bf16.mxu0 0
      %426 = vmatmul.mubr.bf16.gmra.mrb[0].mxu0 %v388
      %v427 = vpop.f32.mrb[0].mxu0
      %v428 = vadd.f32 0.0, %v427
      %v429 = vpop.f32.mrb[0].mxu0
      %v430 = vpop.f32.mrb[0].mxu0
      %v431 = vpop.f32.mrb[0].mxu0
      %432 = vdwg.mxu0
      %v433 = vmul.f32 %v428, 0.17677669
      %v434 = vadd.f32 %v433, %v263
      %v435 = vsel %vm313, %v434, -inf
      %436 = vmax.xlane.f32.xlu0 %v435
      %v437 = vpop.xlane.xlu0 %436
      %v438 = vsub.f32 %v434, %v437
      %v439 = vmul.f32 %v438, 1.442695
      %v440 = vpow.pop %v439
      %v441 = vsel %vm313, %v440, 0.0
      %442 = vadd.xlane.f32.xlu0 %v441
      %v443 = vpop.xlane.xlu0 %442
      %v444 = vrcp.pop %v443
      %v445 = vmul.f32 %v440, %v444
      %v446 = vpack.c.bf16 %v445, %v445
      %v448 = vunpack.c.l.b16 %v262
      %v449 = vpack.c.b16 %v448, %v448
      %450 = vrot.lane.b32.xlu0 %v449, 96
      %v451 = vpop.permute.xlu0 %450
      %v453 = vsel %vm326, %v446, 0
      %v456 = vand.u32 %v451, %v333
      %458 = vmatprep.subr.bf16.mxu0 0
      %459 = vmatpush1.bf16.msra.mxu0 %v456
      %460 = vmatprep.subr.bf16.mxu0 0
      %461 = vmatpush1.bf16.msra.mxu0 0
      %462 = vmatprep.subr.bf16.mxu0 0
      %463 = vmatpush1.bf16.msra.mxu0 0
      %464 = vmatprep.subr.bf16.mxu0 0
      %465 = vmatpush1.bf16.msra.mxu0 0
      %466 = vmatprep.subr.bf16.mxu0 0
      %467 = vmatpush1.bf16.msra.mxu0 0
      %468 = vmatprep.subr.bf16.mxu0 0
      %469 = vmatpush1.bf16.msra.mxu0 0
      %470 = vmatprep.subr.bf16.mxu0 0
      %471 = vmatpush1.bf16.msra.mxu0 0
      %472 = vmatprep.subr.bf16.mxu0 0
      %473 = vmatpush1.bf16.msra.mxu0 0
      %474 = vmatprep.subr.bf16.mxu0 0
      %475 = vmatpush1.bf16.msra.mxu0 0
      %476 = vmatprep.subr.bf16.mxu0 0
      %477 = vmatpush1.bf16.msra.mxu0 0
      %478 = vmatprep.subr.bf16.mxu0 0
      %479 = vmatpush1.bf16.msra.mxu0 0
      %480 = vmatprep.subr.bf16.mxu0 0
      %481 = vmatpush1.bf16.msra.mxu0 0
      %482 = vmatprep.subr.bf16.mxu0 0
      %483 = vmatpush1.bf16.msra.mxu0 0
      %484 = vmatprep.subr.bf16.mxu0 0
      %485 = vmatpush1.bf16.msra.mxu0 0
      %486 = vmatprep.subr.bf16.mxu0 0
      %487 = vmatpush1.bf16.msra.mxu0 0
      %488 = vmatprep.subr.bf16.mxu0 0
      %489 = vmatpush1.bf16.msra.mxu0 0
      %490 = vmatprep.mubr.bf16.mxu0 0
      %491 = vmatmul.mubr.bf16.gmra.mrb[0].mxu0 %v453
      %v492 = vpop.f32.mrb[0].mxu0
      %v493 = vadd.f32 0.0, %v492
      %v494 = vpop.f32.mrb[0].mxu0
      %v495 = vpop.f32.mrb[0].mxu0
      %v496 = vpop.f32.mrb[0].mxu0
      %497 = vdwg.mxu0
      %498 = vrot.lane.b32.xlu0 %v379, 64
      %v499 = vpop.permute.xlu0 %498
      %500 = vrot.lane.b32.xlu0 %v384, 64
      %v501 = vpop.permute.xlu0 %500
      %v503 = vsel %vm264, %v499, 0
      %v506 = vsel %vm264, %v501, 0
      %508 = vmatprep.subr.bf16.mxu0 0
      %509 = vmatpush1.bf16.xpose.msra.mxu0 %v506
      %510 = vmatprep.subr.bf16.mxu0 0
      %511 = vmatpush1.bf16.xpose.msra.mxu0 0
      %512 = vmatprep.subr.bf16.mxu0 0
      %513 = vmatpush1.bf16.xpose.msra.mxu0 0
      %514 = vmatprep.subr.bf16.mxu0 0
      %515 = vmatpush1.bf16.xpose.msra.mxu0 0
      %516 = vmatprep.subr.bf16.mxu0 0
      %517 = vmatpush1.bf16.xpose.msra.mxu0 0
      %518 = vmatprep.subr.bf16.mxu0 0
      %519 = vmatpush1.bf16.xpose.msra.mxu0 0
      %520 = vmatprep.subr.bf16.mxu0 0
      %521 = vmatpush1.bf16.xpose.msra.mxu0 0
      %522 = vmatprep.subr.bf16.mxu0 0
      %523 = vmatpush1.bf16.xpose.msra.mxu0 0
      %524 = vmatprep.subr.bf16.mxu0 0
      %525 = vmatpush1.bf16.xpose.msra.mxu0 0
      %526 = vmatprep.subr.bf16.mxu0 0
      %527 = vmatpush1.bf16.xpose.msra.mxu0 0
      %528 = vmatprep.subr.bf16.mxu0 0
      %529 = vmatpush1.bf16.xpose.msra.mxu0 0
      %530 = vmatprep.subr.bf16.mxu0 0
      %531 = vmatpush1.bf16.xpose.msra.mxu0 0
      %532 = vmatprep.subr.bf16.mxu0 0
      %533 = vmatpush1.bf16.xpose.msra.mxu0 0
      %534 = vmatprep.subr.bf16.mxu0 0
      %535 = vmatpush1.bf16.xpose.msra.mxu0 0
      %536 = vmatprep.subr.bf16.mxu0 0
      %537 = vmatpush1.bf16.xpose.msra.mxu0 0
      %538 = vmatprep.subr.bf16.mxu0 0
      %539 = vmatpush1.bf16.xpose.msra.mxu0 0
      %540 = vmatprep.mubr.bf16.mxu0 0
      %541 = vmatmul.mubr.bf16.gmra.mrb[0].mxu0 %v503
      %v542 = vpop.f32.mrb[0].mxu0
      %v543 = vadd.f32 0.0, %v542
      %v544 = vpop.f32.mrb[0].mxu0
      %v545 = vpop.f32.mrb[0].mxu0
      %v546 = vpop.f32.mrb[0].mxu0
      %547 = vdwg.mxu0
      %v548 = vmul.f32 %v543, 0.17677669
      %v549 = vadd.f32 %v548, %v263
      %v550 = vsel %vm313, %v549, -inf
      %551 = vmax.xlane.f32.xlu0 %v550
      %v552 = vpop.xlane.xlu0 %551
      %v553 = vsub.f32 %v549, %v552
      %v554 = vmul.f32 %v553, 1.442695
      %v555 = vpow.pop %v554
      %v556 = vsel %vm313, %v555, 0.0
      %557 = vadd.xlane.f32.xlu0 %v556
      %v558 = vpop.xlane.xlu0 %557
      %v559 = vrcp.pop %v558
      %v560 = vmul.f32 %v555, %v559
      %v561 = vpack.c.bf16 %v560, %v560
      %562 = vrot.lane.b32.xlu0 %v449, 64
      %v563 = vpop.permute.xlu0 %562
      %v565 = vsel %vm326, %v561, 0
      %v568 = vand.u32 %v563, %v333
      %570 = vmatprep.subr.bf16.mxu0 0
      %571 = vmatpush1.bf16.msra.mxu0 %v568
      %572 = vmatprep.subr.bf16.mxu0 0
      %573 = vmatpush1.bf16.msra.mxu0 0
      %574 = vmatprep.subr.bf16.mxu0 0
      %575 = vmatpush1.bf16.msra.mxu0 0
      %576 = vmatprep.subr.bf16.mxu0 0
      %577 = vmatpush1.bf16.msra.mxu0 0
      %578 = vmatprep.subr.bf16.mxu0 0
      %579 = vmatpush1.bf16.msra.mxu0 0
      %580 = vmatprep.subr.bf16.mxu0 0
      %581 = vmatpush1.bf16.msra.mxu0 0
      %582 = vmatprep.subr.bf16.mxu0 0
      %583 = vmatpush1.bf16.msra.mxu0 0
      %584 = vmatprep.subr.bf16.mxu0 0
      %585 = vmatpush1.bf16.msra.mxu0 0
      %586 = vmatprep.subr.bf16.mxu0 0
      %587 = vmatpush1.bf16.msra.mxu0 0
      %588 = vmatprep.subr.bf16.mxu0 0
      %589 = vmatpush1.bf16.msra.mxu0 0
      %590 = vmatprep.subr.bf16.mxu0 0
      %591 = vmatpush1.bf16.msra.mxu0 0
      %592 = vmatprep.subr.bf16.mxu0 0
      %593 = vmatpush1.bf16.msra.mxu0 0
      %594 = vmatprep.subr.bf16.mxu0 0
      %595 = vmatpush1.bf16.msra.mxu0 0
      %596 = vmatprep.subr.bf16.mxu0 0
      %597 = vmatpush1.bf16.msra.mxu0 0
      %598 = vmatprep.subr.bf16.mxu0 0
      %599 = vmatpush1.bf16.msra.mxu0 0
      %600 = vmatprep.subr.bf16.mxu0 0
      %601 = vmatpush1.bf16.msra.mxu0 0
      %602 = vmatprep.mubr.bf16.mxu0 0
      %603 = vmatmul.mubr.bf16.gmra.mrb[0].mxu0 %v565
      %v604 = vpop.f32.mrb[0].mxu0
      %v605 = vadd.f32 0.0, %v604
      %v606 = vpop.f32.mrb[0].mxu0
      %v607 = vpop.f32.mrb[0].mxu0
      %v608 = vpop.f32.mrb[0].mxu0
      %609 = vdwg.mxu0
      %610 = vrot.lane.b32.xlu0 %v379, 32
      %v611 = vpop.permute.xlu0 %610
      %612 = vrot.lane.b32.xlu0 %v384, 32
      %v613 = vpop.permute.xlu0 %612
      %v615 = vsel %vm264, %v611, 0
      %v618 = vsel %vm264, %v613, 0
      %620 = vmatprep.subr.bf16.mxu0 0
      %621 = vmatpush1.bf16.xpose.msra.mxu0 %v618
      %622 = vmatprep.subr.bf16.mxu0 0
      %623 = vmatpush1.bf16.xpose.msra.mxu0 0
      %624 = vmatprep.subr.bf16.mxu0 0
      %625 = vmatpush1.bf16.xpose.msra.mxu0 0
      %626 = vmatprep.subr.bf16.mxu0 0
      %627 = vmatpush1.bf16.xpose.msra.mxu0 0
      %628 = vmatprep.subr.bf16.mxu0 0
      %629 = vmatpush1.bf16.xpose.msra.mxu0 0
      %630 = vmatprep.subr.bf16.mxu0 0
      %631 = vmatpush1.bf16.xpose.msra.mxu0 0
      %632 = vmatprep.subr.bf16.mxu0 0
      %633 = vmatpush1.bf16.xpose.msra.mxu0 0
      %634 = vmatprep.subr.bf16.mxu0 0
      %635 = vmatpush1.bf16.xpose.msra.mxu0 0
      %636 = vmatprep.subr.bf16.mxu0 0
      %637 = vmatpush1.bf16.xpose.msra.mxu0 0
      %638 = vmatprep.subr.bf16.mxu0 0
      %639 = vmatpush1.bf16.xpose.msra.mxu0 0
      %640 = vmatprep.subr.bf16.mxu0 0
      %641 = vmatpush1.bf16.xpose.msra.mxu0 0
      %642 = vmatprep.subr.bf16.mxu0 0
      %643 = vmatpush1.bf16.xpose.msra.mxu0 0
      %644 = vmatprep.subr.bf16.mxu0 0
      %645 = vmatpush1.bf16.xpose.msra.mxu0 0
      %646 = vmatprep.subr.bf16.mxu0 0
      %647 = vmatpush1.bf16.xpose.msra.mxu0 0
      %648 = vmatprep.subr.bf16.mxu0 0
      %649 = vmatpush1.bf16.xpose.msra.mxu0 0
      %650 = vmatprep.subr.bf16.mxu0 0
      %651 = vmatpush1.bf16.xpose.msra.mxu0 0
      %652 = vmatprep.mubr.bf16.mxu0 0
      %653 = vmatmul.mubr.bf16.gmra.mrb[0].mxu0 %v615
      %v654 = vpop.f32.mrb[0].mxu0
      %v655 = vadd.f32 0.0, %v654
      %v656 = vpop.f32.mrb[0].mxu0
      %v657 = vpop.f32.mrb[0].mxu0
      %v658 = vpop.f32.mrb[0].mxu0
      %659 = vdwg.mxu0
      %v660 = vmul.f32 %v655, 0.17677669
      %v661 = vadd.f32 %v660, %v263
      %v662 = vsel %vm313, %v661, -inf
      %663 = vmax.xlane.f32.xlu0 %v662
      %v664 = vpop.xlane.xlu0 %663
      %v665 = vsub.f32 %v661, %v664
      %v666 = vmul.f32 %v665, 1.442695
      %v667 = vpow.pop %v666
      %v668 = vsel %vm313, %v667, 0.0
      %669 = vadd.xlane.f32.xlu0 %v668
      %v670 = vpop.xlane.xlu0 %669
      %v671 = vrcp.pop %v670
      %v672 = vmul.f32 %v667, %v671
      %v673 = vpack.c.bf16 %v672, %v672
      %674 = vrot.lane.b32.xlu0 %v449, 32
      %v675 = vpop.permute.xlu0 %674
      %v677 = vsel %vm326, %v673, 0
      %v680 = vand.u32 %v675, %v333
      %682 = vmatprep.subr.bf16.mxu0 0
      %683 = vmatpush1.bf16.msra.mxu0 %v680
      %684 = vmatprep.subr.bf16.mxu0 0
      %685 = vmatpush1.bf16.msra.mxu0 0
      %686 = vmatprep.subr.bf16.mxu0 0
      %687 = vmatpush1.bf16.msra.mxu0 0
      %688 = vmatprep.subr.bf16.mxu0 0
      %689 = vmatpush1.bf16.msra.mxu0 0
      %690 = vmatprep.subr.bf16.mxu0 0
      %691 = vmatpush1.bf16.msra.mxu0 0
      %692 = vmatprep.subr.bf16.mxu0 0
      %693 = vmatpush1.bf16.msra.mxu0 0
      %694 = vmatprep.subr.bf16.mxu0 0
      %695 = vmatpush1.bf16.msra.mxu0 0
      %696 = vmatprep.subr.bf16.mxu0 0
      %697 = vmatpush1.bf16.msra.mxu0 0
      %698 = vmatprep.subr.bf16.mxu0 0
      %699 = vmatpush1.bf16.msra.mxu0 0
      %700 = vmatprep.subr.bf16.mxu0 0
      %701 = vmatpush1.bf16.msra.mxu0 0
      %702 = vmatprep.subr.bf16.mxu0 0
      %703 = vmatpush1.bf16.msra.mxu0 0
      %704 = vmatprep.subr.bf16.mxu0 0
      %705 = vmatpush1.bf16.msra.mxu0 0
      %706 = vmatprep.subr.bf16.mxu0 0
      %707 = vmatpush1.bf16.msra.mxu0 0
      %708 = vmatprep.subr.bf16.mxu0 0
      %709 = vmatpush1.bf16.msra.mxu0 0
      %710 = vmatprep.subr.bf16.mxu0 0
      %711 = vmatpush1.bf16.msra.mxu0 0
      %712 = vmatprep.subr.bf16.mxu0 0
      %713 = vmatpush1.bf16.msra.mxu0 0
      %714 = vmatprep.mubr.bf16.mxu0 0
      %715 = vmatmul.mubr.bf16.gmra.mrb[0].mxu0 %v677
      %v716 = vpop.f32.mrb[0].mxu0
      %v717 = vadd.f32 0.0, %v716
      %v718 = vpop.f32.mrb[0].mxu0
      %v719 = vpop.f32.mrb[0].mxu0
      %v720 = vpop.f32.mrb[0].mxu0
      %721 = vdwg.mxu0
      %723 = vrot.lane.b32.xlu0 %v493, 32
      %v724 = vpop.permute.xlu0 %723
      %727 = vrot.lane.b32.xlu0 %v605, 64
      %v728 = vpop.permute.xlu0 %727
      %731 = vrot.lane.b32.xlu0 %v717, 96
      %v732 = vpop.permute.xlu0 %731
      %v734 = vsel %vm264, %v372, %v724
      %vm735 = vcmask 523264
      %v736 = vsel %vm735, %v734, %v728
      %vm737 = vcmask 785408
      %v738 = vsel %vm737, %v736, %v732
      %v739 = vpack.c.bf16 %v738, %v738
      %vm740 = vcmask 1043456
      %vm741 = vsmask.f32 3328
      %vm742 = vmand %vm740, %vm741
      %v743 = vld [vmem:[%s258] sm:$0xf]
      %v744 = vsel %vm742, %v739, %v743
      %745 = vst [vmem:[%s258] sm:$0xf] %v744
      %p746 = scmp.lt.s32.totalorder %s15, 1
      %s747 = scalar_select %p746, %s15, 1
      %s748 = smul.addr %s747, 4
      %s749 = scalar_lea.vmem %s4, %s748
      // Predicated region
      $region37: #{transformer_forward.34} parent=35 // pred_check
        %p750 = pneg %p137
      $region38: #{transformer_forward.34} parent=35 // pred_check_branch
        %752 = sbr.rel (%p750) target = $region40
      $region39: #{transformer_forward.34} parent=35 // pred_region
        _
      $region40: #{transformer_forward.34} parent=35 // pred_fallthru
        _
    $region36: #{transformer_forward.34} parent=5 // pred_fallthru
      _
    %p753 = scmp.le.s32.totalorder 2, %s10
    // Predicated region
    $region41: #{transformer_forward.34} parent=5 // pred_check
      %p754 = pneg %p753
    $region42: #{transformer_forward.34} parent=5 // pred_check_branch
      %756 = sbr.rel (%p754) target = $region44
    $region43: #{transformer_forward.34} parent=5 // pred_region
      %s757 = ssub.s32 %s10, 2
      // Predicated region
      $region45: #{transformer_forward.34} parent=43 // pred_check
        %p758 = pneg %p143
      $region46: #{transformer_forward.34} parent=43 // pred_check_branch
        %760 = sbr.rel (%p758) target = $region48
      $region47: #{transformer_forward.34} parent=43 // pred_region
        %p761 = scmp.lt.s32.totalorder %s16, 1
        %s762 = scalar_select %p761, %s16, 1
        %s763 = smul.addr %s762, 4
        %s764 = scalar_lea.vmem %s4, %s763
      $region48: #{transformer_forward.34} parent=43 // pred_fallthru
        _
    $region44: #{transformer_forward.34} parent=5 // pred_fallthru
      _
  $region6: #{transformer_forward.34} parent=0 // loop_footer
    %s14 = sadd.s32 1, %s10
  $region7: #{transformer_forward.34} parent=0 // loop_footer_branch
    %9 = sbr.rel target = $region3
  $region8: #{transformer_forward.34} parent=0 // loop_exit
    _

// kernel: transformer_forward.49
$region0: #{transformer_forward.49}
  #allocation0 [shape = 'u32[]', space=smem, size = 0x4, offset = 0x4, fixed_abs, tag = 'smem constant byte address 0x4 - core index']
  #allocation1 [shape = 'u32[144,128]{1,0:T(1,128)}', space=vmem, size = 0x12000, scoped, tag = 'internal scratch']
  %s0 = inlined_call_operand.vmem [shape: bf16[16,128], index: 0, kind: input, shape index: {}]
  %s1 = inlined_call_operand.vmem [shape: bf16[128,20], index: 1, kind: input, shape index: {}]
  %s2 = inlined_call_operand.vmem [shape: f32[1,20], index: 2, kind: input, shape index: {}]
  %s3 = inlined_call_operand.hbm [shape: f32[16,20], index: 3, kind: output, shape index: {}]
  %s4 = sld [smem:[#allocation0]]
  $region22: #{transformer_forward.49} parent=0
    _
  %s6 = ssub.s32 1, %s4
  %s7 = scalar_select 0, %s6, %s4
  $region1: #{transformer_forward.49} parent=0
    #allocation2 [shape = 'u8[8192]{0}', space=vmem, size = 0x2000, scoped, tag = 'output window, operand 0, single buffered']
    #allocation3 [shape = 's32[1]{0}', space=sflag, size = 0x4, scoped, tag = 'scoped memory for transformer_forward.49']
    %8 = vsyncpa [#allocation3], 0
    // Predicated region
    $region2: #{transformer_forward.49} parent=1 // pred_check
      _
    $region3: #{transformer_forward.49} parent=1 // pred_check_branch
      %10 = sbr.rel (0) target = $region5
    $region4: #{transformer_forward.49} parent=1 // pred_region
      _
    $region5: #{transformer_forward.49} parent=1 // pred_fallthru
      _
    // Predicated region
    $region6: #{transformer_forward.49} parent=1 // pred_check
      _
    $region7: #{transformer_forward.49} parent=1 // pred_check_branch
      %12 = sbr.rel (0) target = $region9
    $region8: #{transformer_forward.49} parent=1 // pred_region
      _
    $region9: #{transformer_forward.49} parent=1 // pred_fallthru
      _
    // Predicated region
    $region10: #{transformer_forward.49} parent=1 // pred_check
      _
    $region11: #{transformer_forward.49} parent=1 // pred_check_branch
      %14 = sbr.rel (0) target = $region13
    $region12: #{transformer_forward.49} parent=1 // pred_region
      _
    $region13: #{transformer_forward.49} parent=1 // pred_fallthru
      _
    %v16 = vld [vmem:[%s0] sm:$0xf]
    %v17 = vld [vmem:[%s0 + $0x4] sm:$0xf]
    %v18 = vld [vmem:[%s1] sm:$0xf]
    %v19 = vld [vmem:[%s1 + $0x4] sm:$0xf]
    %v20 = vld [vmem:[%s1 + $0x8] sm:$0xf]
    %v21 = vld [vmem:[%s1 + $0xc] sm:$0xf]
    %v22 = vld [vmem:[%s1 + $0x10] sm:$0xf]
    %v23 = vld [vmem:[%s1 + $0x14] sm:$0xf]
    %v24 = vld [vmem:[%s1 + $0x18] sm:$0xf]
    %v25 = vld [vmem:[%s1 + $0x1c] sm:$0xf]
    %v26 = vld [vmem:[%s1 + $0x20] sm:$0xf]
    %v27 = vld [vmem:[%s1 + $0x24] sm:$0xf]
    %v28 = vld [vmem:[%s1 + $0x28] sm:$0xf]
    %v29 = vld [vmem:[%s1 + $0x2c] sm:$0xf]
    %v30 = vld [vmem:[%s1 + $0x30] sm:$0xf]
    %v31 = vld [vmem:[%s1 + $0x34] sm:$0xf]
    %v32 = vld [vmem:[%s1 + $0x38] sm:$0xf]
    %v33 = vld [vmem:[%s1 + $0x3c] sm:$0xf]
    %v34 = vld [vmem:[%s2] sm:$0x1]
    %v36 = vlaneseq
    %v37 = vshrl.u32 %v36, 7
    %v38 = vsub.s32 0, %v37
    %v39 = vrot.slane %v34, %v38
    %v43 = vunpack.c.l.b16 %v16
    %v44 = vunpack.c.l.b16 %v17
    %v45 = vpack.c.b16 %v44, %v43
    %v63 = vunpack.c.l.b16 %v18
    %v64 = vunpack.c.l.b16 %v19
    %v65 = vunpack.c.l.b16 %v20
    %v66 = vunpack.c.l.b16 %v21
    %v67 = vunpack.c.l.b16 %v22
    %v68 = vunpack.c.l.b16 %v23
    %v69 = vunpack.c.l.b16 %v24
    %v70 = vunpack.c.l.b16 %v25
    %v71 = vunpack.c.l.b16 %v26
    %v72 = vunpack.c.l.b16 %v27
    %v73 = vunpack.c.l.b16 %v28
    %v74 = vunpack.c.l.b16 %v29
    %v75 = vunpack.c.l.b16 %v30
    %v76 = vunpack.c.l.b16 %v31
    %v77 = vunpack.c.l.b16 %v32
    %v78 = vunpack.c.l.b16 %v33
    %v79 = vpack.c.b16 %v64, %v63
    %v80 = vpack.c.b16 %v66, %v65
    %v81 = vpack.c.b16 %v68, %v67
    %v82 = vpack.c.b16 %v70, %v69
    %v83 = vpack.c.b16 %v72, %v71
    %v84 = vpack.c.b16 %v74, %v73
    %v85 = vpack.c.b16 %v76, %v75
    %v86 = vpack.c.b16 %v78, %v77
    %95 = vmatprep.subr.bf16.mxu0 0
    %96 = vmatpush1.bf16.msra.mxu0 %v79
    %97 = vmatprep.subr.bf16.mxu0 0
    %98 = vmatpush1.bf16.msra.mxu0 %v80
    %99 = vmatprep.subr.bf16.mxu0 0
    %100 = vmatpush1.bf16.msra.mxu0 %v81
    %101 = vmatprep.subr.bf16.mxu0 0
    %102 = vmatpush1.bf16.msra.mxu0 %v82
    %103 = vmatprep.subr.bf16.mxu0 0
    %104 = vmatpush1.bf16.msra.mxu0 %v83
    %105 = vmatprep.subr.bf16.mxu0 0
    %106 = vmatpush1.bf16.msra.mxu0 %v84
    %107 = vmatprep.subr.bf16.mxu0 0
    %108 = vmatpush1.bf16.msra.mxu0 %v85
    %109 = vmatprep.subr.bf16.mxu0 0
    %110 = vmatpush1.bf16.msra.mxu0 %v86
    %111 = vmatprep.subr.bf16.mxu0 0
    %112 = vmatpush1.bf16.msra.mxu0 0
    %113 = vmatprep.subr.bf16.mxu0 0
    %114 = vmatpush1.bf16.msra.mxu0 0
    %115 = vmatprep.subr.bf16.mxu0 0
    %116 = vmatpush1.bf16.msra.mxu0 0
    %117 = vmatprep.subr.bf16.mxu0 0
    %118 = vmatpush1.bf16.msra.mxu0 0
    %119 = vmatprep.subr.bf16.mxu0 0
    %120 = vmatpush1.bf16.msra.mxu0 0
    %121 = vmatprep.subr.bf16.mxu0 0
    %122 = vmatpush1.bf16.msra.mxu0 0
    %123 = vmatprep.subr.bf16.mxu0 0
    %124 = vmatpush1.bf16.msra.mxu0 0
    %125 = vmatprep.subr.bf16.mxu0 0
    %126 = vmatpush1.bf16.msra.mxu0 0
    %127 = vmatprep.mubr.bf16.mxu0 0
    %128 = vmatmul.mubr.bf16.gmra.mrb[0].mxu0 %v45
    %v129 = vpop.f32.mrb[0].mxu0
    %v130 = vadd.f32 %v39, %v129
    %v131 = vpop.f32.mrb[0].mxu0
    %v132 = vpop.f32.mrb[0].mxu0
    %v133 = vadd.f32 %v39, %v132
    %v134 = vpop.f32.mrb[0].mxu0
    %135 = vdwg.mxu0
    %vm136 = vcmask 162816
    %137 = vst.msk [vmem:[#allocation2] sm:$0xff] %vm136, %v130
    %138 = vst.msk [vmem:[#allocation2 + $0x8] sm:$0xff] %vm136, %v133
    // Predicated region
    $region14: #{transformer_forward.49} parent=1 // pred_check
      _
    $region15: #{transformer_forward.49} parent=1 // pred_check_branch
      %140 = sbr.rel (0) target = $region17
    $region16: #{transformer_forward.49} parent=1 // pred_region
      %s142 = ssub.s32 256, 256
      %143 = vsyncadd [#allocation3], %s142
      %s144 = sshll.u32 [#allocation2], 4
      %s145 = int_to_ptr.vmem [resolvable:$true] %s144
      %150 = dma.vmem_to_hbm [thread:$0]  %s145, 256, %s3, [#allocation3], 128, 128, 8
    $region17: #{transformer_forward.49} parent=1 // pred_fallthru
      _
    // Predicated region
    $region18: #{transformer_forward.49} parent=1 // pred_check
      _
    $region19: #{transformer_forward.49} parent=1 // pred_check_branch
      %152 = sbr.rel (0) target = $region21
    $region20: #{transformer_forward.49} parent=1 // pred_region
      %153 = dma.done [#allocation3], 256
    $region21: #{transformer_forward.49} parent=1 // pred_fallthru
      _
    %154 = vsyncpa [#allocation3], 1

</llo_original>
